<compile_context>
chip_gen: v5e
topology: v5e:2x2
jax: 0.10.0
libtpu: 0.0.40
codegen_flags: <defaults>
</compile_context>

<pallas_src>
import functools
import numpy as np
import jax
import jax.numpy as jnp
from jax.experimental import pallas as pl
from jax.experimental.pallas import tpu as pltpu

DELTA = 1e-6
LOG100 = float(np.log(100.0))
INV = float(np.log(np.exp(1.0 - DELTA) - 1.0))
LOG1MD = float(np.log(1.0 - DELTA))


# ---------------- small math helpers (match the torch lambdas) ---------------
def _log(x):
    # torch: log(x) = torch.log(x*100.) - np.log(100.)
    return jnp.log(x * 100.0) - LOG100


def _logsigmoid(x):          # reference only
    return -(jax.nn.softplus(-x) + DELTA)


def _softmax_last(x):        # reference only
    m = jnp.max(x, axis=-1, keepdims=True)
    e = jnp.exp(x - m)
    return e / jnp.sum(e, axis=-1, keepdims=True)


def _log_softmax_last(x):    # reference only
    m = jnp.max(x, axis=-1, keepdims=True)
    s = x - m
    return s - jnp.log(jnp.sum(jnp.exp(s), axis=-1, keepdims=True))


def _log_softmax_ax1(x):
    # log-softmax along axis=1 of an (A, K, tm) array (K on sublanes, tm on lanes)
    m = jnp.max(x, axis=1, keepdims=True)
    s = x - m
    return s - jnp.log(jnp.sum(jnp.exp(s), axis=1, keepdims=True))


# ---------------- fused Pallas kernel ----------------------------------------
def _dsf_block_body(x, p, ld, u3, w3, *, H, I, O):
    """One DenseSigmoidFlow block, lane-dense layout.
    x:(I,tm)  p:(3H+I,tm)  ld:(I,tm) previous logdet (D0==1)  u3:(H,I,1)  w3:(O,H,1)
    returns (x_new:(O,tm), ld_new:(O,tm))."""
    a = jax.nn.softplus(p[0:H, :] + INV)                          # (H, tm)
    b = p[H:2 * H, :]                                             # (H, tm)
    pre_w = w3 + p[2 * H:3 * H, :][None, :, :]                    # (O, H, tm)
    pre_u = u3 + p[3 * H:3 * H + I, :][None, :, :]                # (H, I, tm)

    lsm_w = _log_softmax_ax1(pre_w)                               # (O, H, tm)
    lsm_u = _log_softmax_ax1(pre_u)                               # (H, I, tm)
    w = jnp.exp(lsm_w)                                            # softmax(pre_w)
    u = jnp.exp(lsm_u)                                            # softmax(pre_u)

    pre_sigm = a * jnp.sum(u * x[None, :, :], axis=1) + b         # (H, tm)
    sp_neg = jax.nn.softplus(-pre_sigm)                           # (H, tm)
    sigm = jnp.exp(-sp_neg)                                       # sigmoid(pre_sigm)

    x_pre = jnp.sum(w * sigm[None, :, :], axis=1)                 # (O, tm)
    xpc = x_pre * (1.0 - DELTA) + DELTA * 0.5
    logx = _log(xpc)
    log1mx = _log(1.0 - xpc)
    x_new = logx - log1mx                                         # (O, tm)

    # logsigmoid(s) + logsigmoid(-s)  (torch adds +delta inside each softplus)
    logj_h = -(pre_sigm + 2.0 * sp_neg) - 2.0 * DELTA + _log(a)   # (H, tm)
    logj = lsm_w + logj_h[None, :, :]                             # (O, H, tm)

    # logsumexp over h of (logj[o,h,m] + lsm_u[h,i,m]) as a shifted product-sum
    s_max = jnp.max(logj, axis=1, keepdims=True)                  # (O, 1, tm)
    ej = jnp.exp(logj - s_max)                                    # (O, H, tm)
    prod = ej[:, :, None, :] * u[None, :, :, :]                   # (O, H, I, tm)
    logj2 = jnp.log(jnp.sum(prod, axis=1)) + s_max                # (O, I, tm)
    logdet_ = logj2 + LOG1MD - (logx + log1mx)[:, None, :]        # (O, I, tm)

    # chain with previous logdet: logsumexp over i (D0 == 1, squeezed)
    comb = logdet_ + ld[None, :, :]                               # (O, I, tm)
    m2 = jnp.max(comb, axis=1, keepdims=True)                     # (O, 1, tm)
    ld_new = jnp.log(jnp.sum(jnp.exp(comb - m2), axis=1)) + m2[:, 0, :]   # (O, tm)
    return x_new, ld_new


def ddsf_fused_kernel(*refs, block_dims):
    n_blocks = len(block_dims)
    n_in = 1 + 3 * n_blocks
    x_ref = refs[0]
    xo_ref, ldo_ref = refs[n_in], refs[n_in + 1]

    x = x_ref[...]                                                # (I0, tm)
    tm = x.shape[-1]
    ld = jnp.zeros((block_dims[0][0], tm), jnp.float32)           # logdet=None -> zeros

    for bi, (I, H, O) in enumerate(block_dims):                   # static unroll
        p = refs[1 + 3 * bi][...]                                 # (3H+I, tm)
        u3 = refs[2 + 3 * bi][...]                                # (H, I, 1)
        w3 = refs[3 + 3 * bi][...]                                # (O, H, 1)
        x, ld = _dsf_block_body(x, p, ld, u3, w3, H=H, I=I, O=O)

    xo_ref[...] = x                                               # (O_last, tm)
    ldo_ref[...] = ld                                             # (O_last, tm)


# ---------------- tiling helpers ---------------------------------------------
def _round_up(a, b):
    return ((a + b - 1) // b) * b


def _pick_tile_m(M, block_dims, budget_bytes=8 * 1024 * 1024):
    """Largest lane tile (multiple of 128) whose worst-block working set fits a
    conservative VMEM budget (also safe for v7x's smaller VMEM)."""
    worst = 1
    for (I, H, O) in block_dims:
        elems = (O * H * I                  # 4-D product-sum temp
                 + 4 * O * H + 3 * H * I    # pre_w/lsm_w/w/logj, pre_u/lsm_u/u
                 + 3 * O * I                # logj2 / logdet_ / comb
                 + 8 * H + 6 * O + 3 * I    # 2-D temps
                 + 2 * (3 * H + I))         # double-buffered params
        worst = max(worst, elems)
    per_lane_bytes = 4 * worst
    tile = 128
    for cand in (2048, 1024, 512, 256, 128):
        if cand * per_lane_bytes <= budget_bytes:
            tile = cand
            break
    return min(tile, _round_up(max(M, 1), 128))   # no wider than padded M


# ---------------- DDSF module (parameter setup + wrapper glue) ---------------
class DDSFPallas:
    def __init__(self, n_layers, in_dim, hidden_dim, out_dim, key):
        dims = [(in_dim, hidden_dim, hidden_dim)]
        for _ in range(n_layers - 2):
            dims.append((hidden_dim, hidden_dim, hidden_dim))
        dims.append((hidden_dim, hidden_dim, out_dim))
        self.block_dims = dims
        self.num_params = sum(3 * h + i for (i, h, o) in dims)
        self.params = []
        for (i, h, o) in dims:
            key, k1, k2 = jax.random.split(key, 3)
            u_ = jax.random.uniform(k1, (h, i), jnp.float32, -0.001, 0.001)
            w_ = jax.random.uniform(k2, (o, h), jnp.float32, -0.001, 0.001)
            self.params.append((u_, w_))

    def __call__(self, x, dsparams):
        B, N = x.shape[0], x.shape[1]
        M = B * N
        x3 = x[:, :, None] if x.ndim == 2 else x
        I0 = x3.shape[-1]
        xm_t = x3.reshape(M, I0).T.astype(jnp.float32)            # (I0, M) lane-dense
        pm = dsparams.reshape(M, dsparams.shape[-1]).astype(jnp.float32)

        tile_m = _pick_tile_m(M, self.block_dims)
        M_pad = _round_up(M, tile_m)
        pad = M_pad - M
        xm_t = jnp.pad(xm_t, ((0, 0), (0, pad)))

        inputs = [xm_t]
        in_specs = [pl.BlockSpec((I0, tile_m), lambda i: (0, i))]
        start = 0
        for (i_dim, h_dim, o_dim), (u_, w_) in zip(self.block_dims, self.params):
            npar = 3 * h_dim + i_dim
            p_b = jnp.pad(pm[:, start:start + npar].T, ((0, 0), (0, pad)))   # (npar, M_pad)
            start += npar
            inputs += [p_b, u_[:, :, None], w_[:, :, None]]
            in_specs += [
                pl.BlockSpec((npar, tile_m), lambda i: (0, i)),
                pl.BlockSpec((h_dim, i_dim, 1), lambda i: (0, 0, 0)),
                pl.BlockSpec((o_dim, h_dim, 1), lambda i: (0, 0, 0)),
            ]

        o_last = self.block_dims[-1][2]
        kernel = functools.partial(ddsf_fused_kernel,
                                   block_dims=tuple(self.block_dims))
        xo_t, ldo_t = pl.pallas_call(
            kernel,
            out_shape=(jax.ShapeDtypeStruct((o_last, M_pad), jnp.float32),
                       jax.ShapeDtypeStruct((o_last, M_pad), jnp.float32)),
            grid=(M_pad // tile_m,),
            in_specs=in_specs,
            out_specs=(pl.BlockSpec((o_last, tile_m), lambda i: (0, i)),
                       pl.BlockSpec((o_last, tile_m), lambda i: (0, i))),
            compiler_params=pltpu.CompilerParams(
                dimension_semantics=("parallel",),
                vmem_limit_bytes=32 * 1024 * 1024),
        )(*inputs)

        x_out = xo_t[:, :M].T.reshape(B, N, o_last)
        logdet_out = ldo_t[0, :M].reshape(B, N).sum(axis=1)       # torch: [:,:,0,0].sum(1)
        if o_last == 1:                                           # torch squeeze(-1)
            x_out = x_out[:, :, 0]
        return x_out, logdet_out

    # pure-JAX reference mirroring the torch code (for verification only)
    def reference(self, x, dsparams):
        def _lse(A, axis):
            m = jnp.max(A, axis=axis, keepdims=True)
            return jnp.log(jnp.sum(jnp.exp(A - m), axis=axis, keepdims=True)) + m

        if x.ndim == 2:
            x = x[..., None]
        x = x.astype(jnp.float32)
        dsparams = dsparams.astype(jnp.float32)
        logdet = None
        start = 0
        for (i_dim, h_dim, o_dim), (u_, w_) in zip(self.block_dims, self.params):
            npar = 3 * h_dim + i_dim
            dsp = dsparams[:, :, start:start + npar]
            start += npar
            pre_u = u_[None, None] + dsp[:, :, -i_dim:][:, :, None, :]
            pre_w = w_[None, None] + dsp[:, :, 2 * h_dim:3 * h_dim][:, :, None, :]
            a = jax.nn.softplus(dsp[:, :, :h_dim] + INV)
            b = dsp[:, :, h_dim:2 * h_dim]
            w = _softmax_last(pre_w)
            u = _softmax_last(pre_u)
            pre_sigm = jnp.sum(u * a[:, :, :, None] * x[:, :, None, :], axis=3) + b
            sigm = jax.nn.sigmoid(pre_sigm)
            x_pre = jnp.sum(w * sigm[:, :, None, :], axis=3)
            xpc = x_pre * (1.0 - DELTA) + DELTA * 0.5
            x_ = _log(xpc) - _log(1.0 - xpc)
            logj = (_log_softmax_last(pre_w) + _logsigmoid(pre_sigm[:, :, None, :])
                    + _logsigmoid(-pre_sigm[:, :, None, :]) + _log(a[:, :, None, :]))
            logj = logj[:, :, :, :, None] + _log_softmax_last(pre_u)[:, :, None, :, :]
            logj = jnp.sum(_lse(logj, 3), axis=3)
            logdet_ = logj + LOG1MD - (_log(xpc) + _log(1.0 - xpc))[:, :, :, None]
            if logdet is None:
                logdet = jnp.zeros((logdet_.shape[0], logdet_.shape[1], 1, 1), jnp.float32)
            logdet = jnp.sum(_lse(logdet_[:, :, :, :, None] + logdet[:, :, None, :, :], 3), axis=3)
            x = x_
        logdet_out = logdet[:, :, 0, 0].sum(axis=1)
        x_out = x[:, :, 0] if x.shape[-1] == 1 else x
        return x_out, logdet_out


if __name__ == "__main__":
    B, N = 2, 8
    n_layers, in_dim, hidden_dim, out_dim = 3, 1, 8, 1

    model = DDSFPallas(n_layers, in_dim, hidden_dim, out_dim, key=jax.random.PRNGKey(42))

    key = jax.random.PRNGKey(0)
    kx, kp = jax.random.split(key)
    x = jax.random.normal(kx, (B, N), dtype=jnp.float32)
    dsparams = 0.1 * jax.random.normal(kp, (B, N, model.num_params), dtype=jnp.float32)

    x_out, logdet = model(x, dsparams)
    jax.block_until_ready((x_out, logdet))

    x_ref, ld_ref = model.reference(x, dsparams)
    np.testing.assert_allclose(np.asarray(x_out), np.asarray(x_ref), rtol=1e-4, atol=1e-4)
    np.testing.assert_allclose(np.asarray(logdet), np.asarray(ld_ref), rtol=1e-4, atol=1e-4)

    print("KERNEL_OK")
</pallas_src>

<mosaic_0001>
module attributes {stable_mosaic.version = 11 : i64} {
  func.func @ddsf_fused_kernel(%arg0: i32, %arg1: memref<1x128xf32, #tpu.memory_space<vmem>>, %arg2: memref<25x128xf32, #tpu.memory_space<vmem>>, %arg3: memref<8x1x1xf32, #tpu.memory_space<vmem>>, %arg4: memref<8x8x1xf32, #tpu.memory_space<vmem>>, %arg5: memref<32x128xf32, #tpu.memory_space<vmem>>, %arg6: memref<8x8x1xf32, #tpu.memory_space<vmem>>, %arg7: memref<8x8x1xf32, #tpu.memory_space<vmem>>, %arg8: memref<32x128xf32, #tpu.memory_space<vmem>>, %arg9: memref<8x8x1xf32, #tpu.memory_space<vmem>>, %arg10: memref<1x8x1xf32, #tpu.memory_space<vmem>>, %arg11: memref<1x128xf32, #tpu.memory_space<vmem>>, %arg12: memref<1x128xf32, #tpu.memory_space<vmem>>) attributes {dimension_semantics = [#tpu.dimension_semantics<parallel>], iteration_bounds = array<i64: 1>, scalar_prefetch = 0 : i64, scratch_operands = 0 : i64, tpu.core_type = #tpu.core_type<tc>, window_params = [{transform_indices = @transform_0, window_bounds = array<i64: 1, 128>}, {transform_indices = @transform_1, window_bounds = array<i64: 25, 128>}, {pipeline_mode = #tpu.pipeline_mode<synchronous>, transform_indices = @transform_2, window_bounds = array<i64: 8, 1, 1>}, {pipeline_mode = #tpu.pipeline_mode<synchronous>, transform_indices = @transform_3, window_bounds = array<i64: 8, 8, 1>}, {transform_indices = @transform_4, window_bounds = array<i64: 32, 128>}, {pipeline_mode = #tpu.pipeline_mode<synchronous>, transform_indices = @transform_5, window_bounds = array<i64: 8, 8, 1>}, {pipeline_mode = #tpu.pipeline_mode<synchronous>, transform_indices = @transform_6, window_bounds = array<i64: 8, 8, 1>}, {transform_indices = @transform_7, window_bounds = array<i64: 32, 128>}, {pipeline_mode = #tpu.pipeline_mode<synchronous>, transform_indices = @transform_8, window_bounds = array<i64: 8, 8, 1>}, {pipeline_mode = #tpu.pipeline_mode<synchronous>, transform_indices = @transform_9, window_bounds = array<i64: 1, 8, 1>}, {transform_indices = @transform_10, window_bounds = array<i64: 1, 128>}, {transform_indices = @transform_11, window_bounds = array<i64: 1, 128>}]} {
    %c0 = arith.constant 0 : index
    %c0_0 = arith.constant 0 : index
    %0 = vector.load %arg1[%c0, %c0_0] : memref<1x128xf32, #tpu.memory_space<vmem>>, vector<1x128xf32>
    %cst = arith.constant 0.000000e+00 : f32
    %1 = vector.broadcast %cst : f32 to vector<1x128xf32>
    %c0_1 = arith.constant 0 : index
    %c0_2 = arith.constant 0 : index
    %2 = vector.load %arg2[%c0_1, %c0_2] : memref<25x128xf32, #tpu.memory_space<vmem>>, vector<25x128xf32>
    %c0_3 = arith.constant 0 : index
    %c0_4 = arith.constant 0 : index
    %c0_5 = arith.constant 0 : index
    %3 = vector.load %arg3[%c0_3, %c0_4, %c0_5] : memref<8x1x1xf32, #tpu.memory_space<vmem>>, vector<8x1x1xf32>
    %c0_6 = arith.constant 0 : index
    %c0_7 = arith.constant 0 : index
    %c0_8 = arith.constant 0 : index
    %4 = vector.load %arg4[%c0_6, %c0_7, %c0_8] : memref<8x8x1xf32, #tpu.memory_space<vmem>>, vector<8x8x1xf32>
    %5 = vector.extract_strided_slice %2 {offsets = [0, 0], sizes = [8, 128], strides = [1, 1]} : vector<25x128xf32> to vector<8x128xf32>
    %cst_9 = arith.constant 0.541323245 : f32
    %6 = vector.broadcast %cst_9 : f32 to vector<8x128xf32>
    %7 = arith.addf %5, %6 : vector<8x128xf32>
    %cst_10 = arith.constant 0.000000e+00 : f32
    %8 = vector.broadcast %cst_10 : f32 to vector<8x128xf32>
    %9 = arith.maximumf %7, %8 : vector<8x128xf32>
    %10 = vector.broadcast %cst_10 : f32 to vector<8x128xf32>
    %11 = arith.subf %7, %10 : vector<8x128xf32>
    %12 = arith.cmpf one, %11, %11 : vector<8x128xf32>
    %13 = vector.broadcast %cst_10 : f32 to vector<8x128xf32>
    %14 = arith.addf %7, %13 : vector<8x128xf32>
    %15 = math.absf %11 : vector<8x128xf32>
    %cst_11 = arith.constant 0.000000e+00 : f32
    %16 = vector.broadcast %cst_11 : f32 to vector<8x128xf32>
    %17 = arith.subf %16, %15 : vector<8x128xf32>
    %18 = math.exp %17 : vector<8x128xf32>
    %19 = math.log1p %18 : vector<8x128xf32>
    %20 = arith.addf %9, %19 : vector<8x128xf32>
    %21 = arith.select %12, %14, %20 : vector<8x128xi1>, vector<8x128xf32>
    %22 = vector.extract_strided_slice %2 {offsets = [8, 0], sizes = [8, 128], strides = [1, 1]} : vector<25x128xf32> to vector<8x128xf32>
    %23 = vector.extract_strided_slice %2 {offsets = [16, 0], sizes = [8, 128], strides = [1, 1]} : vector<25x128xf32> to vector<8x128xf32>
    %24 = vector.shape_cast %23 : vector<8x128xf32> to vector<1x8x128xf32>
    %25 = vector.broadcast %4 : vector<8x8x1xf32> to vector<8x8x128xf32>
    %26 = vector.broadcast %24 : vector<1x8x128xf32> to vector<8x8x128xf32>
    %27 = arith.addf %25, %26 : vector<8x8x128xf32>
    %28 = vector.extract_strided_slice %2 {offsets = [24, 0], sizes = [1, 128], strides = [1, 1]} : vector<25x128xf32> to vector<1x128xf32>
    %29 = vector.shape_cast %28 : vector<1x128xf32> to vector<1x1x128xf32>
    %30 = vector.broadcast %3 : vector<8x1x1xf32> to vector<8x1x128xf32>
    %31 = vector.broadcast %29 : vector<1x1x128xf32> to vector<8x1x128xf32>
    %32 = arith.addf %30, %31 : vector<8x1x128xf32>
    %cst_12 = arith.constant dense<0xFF800000> : vector<8x128xf32>
    %33 = vector.multi_reduction <maximumf>, %27, %cst_12 [1] : vector<8x8x128xf32> to vector<8x128xf32>
    %34 = vector.shape_cast %33 : vector<8x128xf32> to vector<8x1x128xf32>
    %35 = vector.broadcast %34 : vector<8x1x128xf32> to vector<8x8x128xf32>
    %36 = arith.subf %27, %35 : vector<8x8x128xf32>
    %37 = math.exp %36 : vector<8x8x128xf32>
    %cst_13 = arith.constant dense<0.000000e+00> : vector<8x128xf32>
    %38 = vector.multi_reduction <add>, %37, %cst_13 [1] : vector<8x8x128xf32> to vector<8x128xf32>
    %39 = vector.shape_cast %38 : vector<8x128xf32> to vector<8x1x128xf32>
    %40 = math.log %39 : vector<8x1x128xf32>
    %41 = vector.broadcast %40 : vector<8x1x128xf32> to vector<8x8x128xf32>
    %42 = arith.subf %36, %41 : vector<8x8x128xf32>
    %cst_14 = arith.constant dense<0xFF800000> : vector<8x128xf32>
    %43 = vector.multi_reduction <maximumf>, %32, %cst_14 [1] : vector<8x1x128xf32> to vector<8x128xf32>
    %44 = vector.shape_cast %43 : vector<8x128xf32> to vector<8x1x128xf32>
    %45 = arith.subf %32, %44 : vector<8x1x128xf32>
    %46 = math.exp %45 : vector<8x1x128xf32>
    %cst_15 = arith.constant dense<0.000000e+00> : vector<8x128xf32>
    %47 = vector.multi_reduction <add>, %46, %cst_15 [1] : vector<8x1x128xf32> to vector<8x128xf32>
    %48 = vector.shape_cast %47 : vector<8x128xf32> to vector<8x1x128xf32>
    %49 = math.log %48 : vector<8x1x128xf32>
    %50 = arith.subf %45, %49 : vector<8x1x128xf32>
    %51 = math.exp %42 : vector<8x8x128xf32>
    %52 = math.exp %50 : vector<8x1x128xf32>
    %53 = vector.shape_cast %0 : vector<1x128xf32> to vector<1x1x128xf32>
    %54 = vector.broadcast %53 : vector<1x1x128xf32> to vector<8x1x128xf32>
    %55 = arith.mulf %52, %54 : vector<8x1x128xf32>
    %cst_16 = arith.constant dense<0.000000e+00> : vector<8x128xf32>
    %56 = vector.multi_reduction <add>, %55, %cst_16 [1] : vector<8x1x128xf32> to vector<8x128xf32>
    %57 = arith.mulf %21, %56 : vector<8x128xf32>
    %58 = arith.addf %57, %22 : vector<8x128xf32>
    %cst_17 = arith.constant 0.000000e+00 : f32
    %59 = vector.broadcast %cst_17 : f32 to vector<8x128xf32>
    %60 = arith.subf %59, %58 : vector<8x128xf32>
    %cst_18 = arith.constant 0.000000e+00 : f32
    %61 = vector.broadcast %cst_18 : f32 to vector<8x128xf32>
    %62 = arith.maximumf %60, %61 : vector<8x128xf32>
    %63 = vector.broadcast %cst_18 : f32 to vector<8x128xf32>
    %64 = arith.subf %60, %63 : vector<8x128xf32>
    %65 = arith.cmpf one, %64, %64 : vector<8x128xf32>
    %66 = vector.broadcast %cst_18 : f32 to vector<8x128xf32>
    %67 = arith.addf %60, %66 : vector<8x128xf32>
    %68 = math.absf %64 : vector<8x128xf32>
    %cst_19 = arith.constant 0.000000e+00 : f32
    %69 = vector.broadcast %cst_19 : f32 to vector<8x128xf32>
    %70 = arith.subf %69, %68 : vector<8x128xf32>
    %71 = math.exp %70 : vector<8x128xf32>
    %72 = math.log1p %71 : vector<8x128xf32>
    %73 = arith.addf %62, %72 : vector<8x128xf32>
    %74 = arith.select %65, %67, %73 : vector<8x128xi1>, vector<8x128xf32>
    %cst_20 = arith.constant 0.000000e+00 : f32
    %75 = vector.broadcast %cst_20 : f32 to vector<8x128xf32>
    %76 = arith.subf %75, %74 : vector<8x128xf32>
    %77 = math.exp %76 : vector<8x128xf32>
    %78 = vector.shape_cast %77 : vector<8x128xf32> to vector<1x8x128xf32>
    %79 = vector.broadcast %78 : vector<1x8x128xf32> to vector<8x8x128xf32>
    %80 = arith.mulf %51, %79 : vector<8x8x128xf32>
    %cst_21 = arith.constant dense<0.000000e+00> : vector<8x128xf32>
    %81 = vector.multi_reduction <add>, %80, %cst_21 [1] : vector<8x8x128xf32> to vector<8x128xf32>
    %cst_22 = arith.constant 0.999998986 : f32
    %82 = vector.broadcast %cst_22 : f32 to vector<8x128xf32>
    %83 = arith.mulf %81, %82 : vector<8x128xf32>
    %cst_23 = arith.constant 5.000000e-07 : f32
    %84 = vector.broadcast %cst_23 : f32 to vector<8x128xf32>
    %85 = arith.addf %83, %84 : vector<8x128xf32>
    %cst_24 = arith.constant 1.000000e+02 : f32
    %86 = vector.broadcast %cst_24 : f32 to vector<8x128xf32>
    %87 = arith.mulf %85, %86 : vector<8x128xf32>
    %88 = math.log %87 : vector<8x128xf32>
    %cst_25 = arith.constant 4.60517025 : f32
    %89 = vector.broadcast %cst_25 : f32 to vector<8x128xf32>
    %90 = arith.subf %88, %89 : vector<8x128xf32>
    %cst_26 = arith.constant 1.000000e+00 : f32
    %91 = vector.broadcast %cst_26 : f32 to vector<8x128xf32>
    %92 = arith.subf %91, %85 : vector<8x128xf32>
    %cst_27 = arith.constant 1.000000e+02 : f32
    %93 = vector.broadcast %cst_27 : f32 to vector<8x128xf32>
    %94 = arith.mulf %92, %93 : vector<8x128xf32>
    %95 = math.log %94 : vector<8x128xf32>
    %cst_28 = arith.constant 4.60517025 : f32
    %96 = vector.broadcast %cst_28 : f32 to vector<8x128xf32>
    %97 = arith.subf %95, %96 : vector<8x128xf32>
    %98 = arith.subf %90, %97 : vector<8x128xf32>
    %cst_29 = arith.constant 2.000000e+00 : f32
    %99 = vector.broadcast %cst_29 : f32 to vector<8x128xf32>
    %100 = arith.mulf %99, %74 : vector<8x128xf32>
    %101 = arith.addf %58, %100 : vector<8x128xf32>
    %cst_30 = arith.constant 0.000000e+00 : f32
    %102 = vector.broadcast %cst_30 : f32 to vector<8x128xf32>
    %103 = arith.subf %102, %101 : vector<8x128xf32>
    %cst_31 = arith.constant 2.000000e-06 : f32
    %104 = vector.broadcast %cst_31 : f32 to vector<8x128xf32>
    %105 = arith.subf %103, %104 : vector<8x128xf32>
    %cst_32 = arith.constant 1.000000e+02 : f32
    %106 = vector.broadcast %cst_32 : f32 to vector<8x128xf32>
    %107 = arith.mulf %21, %106 : vector<8x128xf32>
    %108 = math.log %107 : vector<8x128xf32>
    %cst_33 = arith.constant 4.60517025 : f32
    %109 = vector.broadcast %cst_33 : f32 to vector<8x128xf32>
    %110 = arith.subf %108, %109 : vector<8x128xf32>
    %111 = arith.addf %105, %110 : vector<8x128xf32>
    %112 = vector.shape_cast %111 : vector<8x128xf32> to vector<1x8x128xf32>
    %113 = vector.broadcast %112 : vector<1x8x128xf32> to vector<8x8x128xf32>
    %114 = arith.addf %42, %113 : vector<8x8x128xf32>
    %cst_34 = arith.constant dense<0xFF800000> : vector<8x128xf32>
    %115 = vector.multi_reduction <maximumf>, %114, %cst_34 [1] : vector<8x8x128xf32> to vector<8x128xf32>
    %116 = vector.shape_cast %115 : vector<8x128xf32> to vector<8x1x128xf32>
    %117 = vector.broadcast %116 : vector<8x1x128xf32> to vector<8x8x128xf32>
    %118 = arith.subf %114, %117 : vector<8x8x128xf32>
    %119 = math.exp %118 : vector<8x8x128xf32>
    %120 = vector.shape_cast %119 : vector<8x8x128xf32> to vector<8x8x1x128xf32>
    %121 = vector.shape_cast %52 : vector<8x1x128xf32> to vector<1x8x1x128xf32>
    %122 = vector.broadcast %121 : vector<1x8x1x128xf32> to vector<8x8x1x128xf32>
    %123 = arith.mulf %120, %122 : vector<8x8x1x128xf32>
    %cst_35 = arith.constant dense<0.000000e+00> : vector<8x1x128xf32>
    %124 = vector.multi_reduction <add>, %123, %cst_35 [1] : vector<8x8x1x128xf32> to vector<8x1x128xf32>
    %125 = math.log %124 : vector<8x1x128xf32>
    %126 = arith.addf %125, %116 : vector<8x1x128xf32>
    %cst_36 = arith.constant -1.00000045E-6 : f32
    %127 = vector.broadcast %cst_36 : f32 to vector<8x1x128xf32>
    %128 = arith.addf %126, %127 : vector<8x1x128xf32>
    %129 = arith.addf %90, %97 : vector<8x128xf32>
    %130 = vector.shape_cast %129 : vector<8x128xf32> to vector<8x1x128xf32>
    %131 = arith.subf %128, %130 : vector<8x1x128xf32>
    %132 = vector.shape_cast %1 : vector<1x128xf32> to vector<1x1x128xf32>
    %133 = vector.broadcast %132 : vector<1x1x128xf32> to vector<8x1x128xf32>
    %134 = arith.addf %131, %133 : vector<8x1x128xf32>
    %cst_37 = arith.constant dense<0xFF800000> : vector<8x128xf32>
    %135 = vector.multi_reduction <maximumf>, %134, %cst_37 [1] : vector<8x1x128xf32> to vector<8x128xf32>
    %136 = vector.shape_cast %135 : vector<8x128xf32> to vector<8x1x128xf32>
    %137 = arith.subf %134, %136 : vector<8x1x128xf32>
    %138 = math.exp %137 : vector<8x1x128xf32>
    %cst_38 = arith.constant dense<0.000000e+00> : vector<8x128xf32>
    %139 = vector.multi_reduction <add>, %138, %cst_38 [1] : vector<8x1x128xf32> to vector<8x128xf32>
    %140 = math.log %139 : vector<8x128xf32>
    %141 = vector.shape_cast %136 : vector<8x1x128xf32> to vector<8x128xf32>
    %142 = arith.addf %140, %141 : vector<8x128xf32>
    %c0_39 = arith.constant 0 : index
    %c0_40 = arith.constant 0 : index
    %143 = vector.load %arg5[%c0_39, %c0_40] : memref<32x128xf32, #tpu.memory_space<vmem>>, vector<32x128xf32>
    %c0_41 = arith.constant 0 : index
    %c0_42 = arith.constant 0 : index
    %c0_43 = arith.constant 0 : index
    %144 = vector.load %arg6[%c0_41, %c0_42, %c0_43] : memref<8x8x1xf32, #tpu.memory_space<vmem>>, vector<8x8x1xf32>
    %c0_44 = arith.constant 0 : index
    %c0_45 = arith.constant 0 : index
    %c0_46 = arith.constant 0 : index
    %145 = vector.load %arg7[%c0_44, %c0_45, %c0_46] : memref<8x8x1xf32, #tpu.memory_space<vmem>>, vector<8x8x1xf32>
    %146 = vector.extract_strided_slice %143 {offsets = [0, 0], sizes = [8, 128], strides = [1, 1]} : vector<32x128xf32> to vector<8x128xf32>
    %cst_47 = arith.constant 0.541323245 : f32
    %147 = vector.broadcast %cst_47 : f32 to vector<8x128xf32>
    %148 = arith.addf %146, %147 : vector<8x128xf32>
    %cst_48 = arith.constant 0.000000e+00 : f32
    %149 = vector.broadcast %cst_48 : f32 to vector<8x128xf32>
    %150 = arith.maximumf %148, %149 : vector<8x128xf32>
    %151 = vector.broadcast %cst_48 : f32 to vector<8x128xf32>
    %152 = arith.subf %148, %151 : vector<8x128xf32>
    %153 = arith.cmpf one, %152, %152 : vector<8x128xf32>
    %154 = vector.broadcast %cst_48 : f32 to vector<8x128xf32>
    %155 = arith.addf %148, %154 : vector<8x128xf32>
    %156 = math.absf %152 : vector<8x128xf32>
    %cst_49 = arith.constant 0.000000e+00 : f32
    %157 = vector.broadcast %cst_49 : f32 to vector<8x128xf32>
    %158 = arith.subf %157, %156 : vector<8x128xf32>
    %159 = math.exp %158 : vector<8x128xf32>
    %160 = math.log1p %159 : vector<8x128xf32>
    %161 = arith.addf %150, %160 : vector<8x128xf32>
    %162 = arith.select %153, %155, %161 : vector<8x128xi1>, vector<8x128xf32>
    %163 = vector.extract_strided_slice %143 {offsets = [8, 0], sizes = [8, 128], strides = [1, 1]} : vector<32x128xf32> to vector<8x128xf32>
    %164 = vector.extract_strided_slice %143 {offsets = [16, 0], sizes = [8, 128], strides = [1, 1]} : vector<32x128xf32> to vector<8x128xf32>
    %165 = vector.shape_cast %164 : vector<8x128xf32> to vector<1x8x128xf32>
    %166 = vector.broadcast %145 : vector<8x8x1xf32> to vector<8x8x128xf32>
    %167 = vector.broadcast %165 : vector<1x8x128xf32> to vector<8x8x128xf32>
    %168 = arith.addf %166, %167 : vector<8x8x128xf32>
    %169 = vector.extract_strided_slice %143 {offsets = [24, 0], sizes = [8, 128], strides = [1, 1]} : vector<32x128xf32> to vector<8x128xf32>
    %170 = vector.shape_cast %169 : vector<8x128xf32> to vector<1x8x128xf32>
    %171 = vector.broadcast %144 : vector<8x8x1xf32> to vector<8x8x128xf32>
    %172 = vector.broadcast %170 : vector<1x8x128xf32> to vector<8x8x128xf32>
    %173 = arith.addf %171, %172 : vector<8x8x128xf32>
    %cst_50 = arith.constant dense<0xFF800000> : vector<8x128xf32>
    %174 = vector.multi_reduction <maximumf>, %168, %cst_50 [1] : vector<8x8x128xf32> to vector<8x128xf32>
    %175 = vector.shape_cast %174 : vector<8x128xf32> to vector<8x1x128xf32>
    %176 = vector.broadcast %175 : vector<8x1x128xf32> to vector<8x8x128xf32>
    %177 = arith.subf %168, %176 : vector<8x8x128xf32>
    %178 = math.exp %177 : vector<8x8x128xf32>
    %cst_51 = arith.constant dense<0.000000e+00> : vector<8x128xf32>
    %179 = vector.multi_reduction <add>, %178, %cst_51 [1] : vector<8x8x128xf32> to vector<8x128xf32>
    %180 = vector.shape_cast %179 : vector<8x128xf32> to vector<8x1x128xf32>
    %181 = math.log %180 : vector<8x1x128xf32>
    %182 = vector.broadcast %181 : vector<8x1x128xf32> to vector<8x8x128xf32>
    %183 = arith.subf %177, %182 : vector<8x8x128xf32>
    %cst_52 = arith.constant dense<0xFF800000> : vector<8x128xf32>
    %184 = vector.multi_reduction <maximumf>, %173, %cst_52 [1] : vector<8x8x128xf32> to vector<8x128xf32>
    %185 = vector.shape_cast %184 : vector<8x128xf32> to vector<8x1x128xf32>
    %186 = vector.broadcast %185 : vector<8x1x128xf32> to vector<8x8x128xf32>
    %187 = arith.subf %173, %186 : vector<8x8x128xf32>
    %188 = math.exp %187 : vector<8x8x128xf32>
    %cst_53 = arith.constant dense<0.000000e+00> : vector<8x128xf32>
    %189 = vector.multi_reduction <add>, %188, %cst_53 [1] : vector<8x8x128xf32> to vector<8x128xf32>
    %190 = vector.shape_cast %189 : vector<8x128xf32> to vector<8x1x128xf32>
    %191 = math.log %190 : vector<8x1x128xf32>
    %192 = vector.broadcast %191 : vector<8x1x128xf32> to vector<8x8x128xf32>
    %193 = arith.subf %187, %192 : vector<8x8x128xf32>
    %194 = math.exp %183 : vector<8x8x128xf32>
    %195 = math.exp %193 : vector<8x8x128xf32>
    %196 = vector.shape_cast %98 : vector<8x128xf32> to vector<1x8x128xf32>
    %197 = vector.broadcast %196 : vector<1x8x128xf32> to vector<8x8x128xf32>
    %198 = arith.mulf %195, %197 : vector<8x8x128xf32>
    %cst_54 = arith.constant dense<0.000000e+00> : vector<8x128xf32>
    %199 = vector.multi_reduction <add>, %198, %cst_54 [1] : vector<8x8x128xf32> to vector<8x128xf32>
    %200 = arith.mulf %162, %199 : vector<8x128xf32>
    %201 = arith.addf %200, %163 : vector<8x128xf32>
    %cst_55 = arith.constant 0.000000e+00 : f32
    %202 = vector.broadcast %cst_55 : f32 to vector<8x128xf32>
    %203 = arith.subf %202, %201 : vector<8x128xf32>
    %cst_56 = arith.constant 0.000000e+00 : f32
    %204 = vector.broadcast %cst_56 : f32 to vector<8x128xf32>
    %205 = arith.maximumf %203, %204 : vector<8x128xf32>
    %206 = vector.broadcast %cst_56 : f32 to vector<8x128xf32>
    %207 = arith.subf %203, %206 : vector<8x128xf32>
    %208 = arith.cmpf one, %207, %207 : vector<8x128xf32>
    %209 = vector.broadcast %cst_56 : f32 to vector<8x128xf32>
    %210 = arith.addf %203, %209 : vector<8x128xf32>
    %211 = math.absf %207 : vector<8x128xf32>
    %cst_57 = arith.constant 0.000000e+00 : f32
    %212 = vector.broadcast %cst_57 : f32 to vector<8x128xf32>
    %213 = arith.subf %212, %211 : vector<8x128xf32>
    %214 = math.exp %213 : vector<8x128xf32>
    %215 = math.log1p %214 : vector<8x128xf32>
    %216 = arith.addf %205, %215 : vector<8x128xf32>
    %217 = arith.select %208, %210, %216 : vector<8x128xi1>, vector<8x128xf32>
    %cst_58 = arith.constant 0.000000e+00 : f32
    %218 = vector.broadcast %cst_58 : f32 to vector<8x128xf32>
    %219 = arith.subf %218, %217 : vector<8x128xf32>
    %220 = math.exp %219 : vector<8x128xf32>
    %221 = vector.shape_cast %220 : vector<8x128xf32> to vector<1x8x128xf32>
    %222 = vector.broadcast %221 : vector<1x8x128xf32> to vector<8x8x128xf32>
    %223 = arith.mulf %194, %222 : vector<8x8x128xf32>
    %cst_59 = arith.constant dense<0.000000e+00> : vector<8x128xf32>
    %224 = vector.multi_reduction <add>, %223, %cst_59 [1] : vector<8x8x128xf32> to vector<8x128xf32>
    %cst_60 = arith.constant 0.999998986 : f32
    %225 = vector.broadcast %cst_60 : f32 to vector<8x128xf32>
    %226 = arith.mulf %224, %225 : vector<8x128xf32>
    %cst_61 = arith.constant 5.000000e-07 : f32
    %227 = vector.broadcast %cst_61 : f32 to vector<8x128xf32>
    %228 = arith.addf %226, %227 : vector<8x128xf32>
    %cst_62 = arith.constant 1.000000e+02 : f32
    %229 = vector.broadcast %cst_62 : f32 to vector<8x128xf32>
    %230 = arith.mulf %228, %229 : vector<8x128xf32>
    %231 = math.log %230 : vector<8x128xf32>
    %cst_63 = arith.constant 4.60517025 : f32
    %232 = vector.broadcast %cst_63 : f32 to vector<8x128xf32>
    %233 = arith.subf %231, %232 : vector<8x128xf32>
    %cst_64 = arith.constant 1.000000e+00 : f32
    %234 = vector.broadcast %cst_64 : f32 to vector<8x128xf32>
    %235 = arith.subf %234, %228 : vector<8x128xf32>
    %cst_65 = arith.constant 1.000000e+02 : f32
    %236 = vector.broadcast %cst_65 : f32 to vector<8x128xf32>
    %237 = arith.mulf %235, %236 : vector<8x128xf32>
    %238 = math.log %237 : vector<8x128xf32>
    %cst_66 = arith.constant 4.60517025 : f32
    %239 = vector.broadcast %cst_66 : f32 to vector<8x128xf32>
    %240 = arith.subf %238, %239 : vector<8x128xf32>
    %241 = arith.subf %233, %240 : vector<8x128xf32>
    %cst_67 = arith.constant 2.000000e+00 : f32
    %242 = vector.broadcast %cst_67 : f32 to vector<8x128xf32>
    %243 = arith.mulf %242, %217 : vector<8x128xf32>
    %244 = arith.addf %201, %243 : vector<8x128xf32>
    %cst_68 = arith.constant 0.000000e+00 : f32
    %245 = vector.broadcast %cst_68 : f32 to vector<8x128xf32>
    %246 = arith.subf %245, %244 : vector<8x128xf32>
    %cst_69 = arith.constant 2.000000e-06 : f32
    %247 = vector.broadcast %cst_69 : f32 to vector<8x128xf32>
    %248 = arith.subf %246, %247 : vector<8x128xf32>
    %cst_70 = arith.constant 1.000000e+02 : f32
    %249 = vector.broadcast %cst_70 : f32 to vector<8x128xf32>
    %250 = arith.mulf %162, %249 : vector<8x128xf32>
    %251 = math.log %250 : vector<8x128xf32>
    %cst_71 = arith.constant 4.60517025 : f32
    %252 = vector.broadcast %cst_71 : f32 to vector<8x128xf32>
    %253 = arith.subf %251, %252 : vector<8x128xf32>
    %254 = arith.addf %248, %253 : vector<8x128xf32>
    %255 = vector.shape_cast %254 : vector<8x128xf32> to vector<1x8x128xf32>
    %256 = vector.broadcast %255 : vector<1x8x128xf32> to vector<8x8x128xf32>
    %257 = arith.addf %183, %256 : vector<8x8x128xf32>
    %cst_72 = arith.constant dense<0xFF800000> : vector<8x128xf32>
    %258 = vector.multi_reduction <maximumf>, %257, %cst_72 [1] : vector<8x8x128xf32> to vector<8x128xf32>
    %259 = vector.shape_cast %258 : vector<8x128xf32> to vector<8x1x128xf32>
    %260 = vector.broadcast %259 : vector<8x1x128xf32> to vector<8x8x128xf32>
    %261 = arith.subf %257, %260 : vector<8x8x128xf32>
    %262 = math.exp %261 : vector<8x8x128xf32>
    %263 = vector.shape_cast %262 : vector<8x8x128xf32> to vector<8x8x1x128xf32>
    %264 = vector.shape_cast %195 : vector<8x8x128xf32> to vector<1x8x8x128xf32>
    %265 = vector.broadcast %263 : vector<8x8x1x128xf32> to vector<8x8x8x128xf32>
    %266 = vector.broadcast %264 : vector<1x8x8x128xf32> to vector<8x8x8x128xf32>
    %267 = arith.mulf %265, %266 : vector<8x8x8x128xf32>
    %cst_73 = arith.constant dense<0.000000e+00> : vector<8x8x128xf32>
    %268 = vector.multi_reduction <add>, %267, %cst_73 [1] : vector<8x8x8x128xf32> to vector<8x8x128xf32>
    %269 = math.log %268 : vector<8x8x128xf32>
    %270 = vector.broadcast %259 : vector<8x1x128xf32> to vector<8x8x128xf32>
    %271 = arith.addf %269, %270 : vector<8x8x128xf32>
    %cst_74 = arith.constant -1.00000045E-6 : f32
    %272 = vector.broadcast %cst_74 : f32 to vector<8x8x128xf32>
    %273 = arith.addf %271, %272 : vector<8x8x128xf32>
    %274 = arith.addf %233, %240 : vector<8x128xf32>
    %275 = vector.shape_cast %274 : vector<8x128xf32> to vector<8x1x128xf32>
    %276 = vector.broadcast %275 : vector<8x1x128xf32> to vector<8x8x128xf32>
    %277 = arith.subf %273, %276 : vector<8x8x128xf32>
    %278 = vector.shape_cast %142 : vector<8x128xf32> to vector<1x8x128xf32>
    %279 = vector.broadcast %278 : vector<1x8x128xf32> to vector<8x8x128xf32>
    %280 = arith.addf %277, %279 : vector<8x8x128xf32>
    %cst_75 = arith.constant dense<0xFF800000> : vector<8x128xf32>
    %281 = vector.multi_reduction <maximumf>, %280, %cst_75 [1] : vector<8x8x128xf32> to vector<8x128xf32>
    %282 = vector.shape_cast %281 : vector<8x128xf32> to vector<8x1x128xf32>
    %283 = vector.broadcast %282 : vector<8x1x128xf32> to vector<8x8x128xf32>
    %284 = arith.subf %280, %283 : vector<8x8x128xf32>
    %285 = math.exp %284 : vector<8x8x128xf32>
    %cst_76 = arith.constant dense<0.000000e+00> : vector<8x128xf32>
    %286 = vector.multi_reduction <add>, %285, %cst_76 [1] : vector<8x8x128xf32> to vector<8x128xf32>
    %287 = math.log %286 : vector<8x128xf32>
    %288 = vector.shape_cast %282 : vector<8x1x128xf32> to vector<8x128xf32>
    %289 = arith.addf %287, %288 : vector<8x128xf32>
    %c0_77 = arith.constant 0 : index
    %c0_78 = arith.constant 0 : index
    %290 = vector.load %arg8[%c0_77, %c0_78] : memref<32x128xf32, #tpu.memory_space<vmem>>, vector<32x128xf32>
    %c0_79 = arith.constant 0 : index
    %c0_80 = arith.constant 0 : index
    %c0_81 = arith.constant 0 : index
    %291 = vector.load %arg9[%c0_79, %c0_80, %c0_81] : memref<8x8x1xf32, #tpu.memory_space<vmem>>, vector<8x8x1xf32>
    %c0_82 = arith.constant 0 : index
    %c0_83 = arith.constant 0 : index
    %c0_84 = arith.constant 0 : index
    %292 = vector.load %arg10[%c0_82, %c0_83, %c0_84] : memref<1x8x1xf32, #tpu.memory_space<vmem>>, vector<1x8x1xf32>
    %293 = vector.extract_strided_slice %290 {offsets = [0, 0], sizes = [8, 128], strides = [1, 1]} : vector<32x128xf32> to vector<8x128xf32>
    %cst_85 = arith.constant 0.541323245 : f32
    %294 = vector.broadcast %cst_85 : f32 to vector<8x128xf32>
    %295 = arith.addf %293, %294 : vector<8x128xf32>
    %cst_86 = arith.constant 0.000000e+00 : f32
    %296 = vector.broadcast %cst_86 : f32 to vector<8x128xf32>
    %297 = arith.maximumf %295, %296 : vector<8x128xf32>
    %298 = vector.broadcast %cst_86 : f32 to vector<8x128xf32>
    %299 = arith.subf %295, %298 : vector<8x128xf32>
    %300 = arith.cmpf one, %299, %299 : vector<8x128xf32>
    %301 = vector.broadcast %cst_86 : f32 to vector<8x128xf32>
    %302 = arith.addf %295, %301 : vector<8x128xf32>
    %303 = math.absf %299 : vector<8x128xf32>
    %cst_87 = arith.constant 0.000000e+00 : f32
    %304 = vector.broadcast %cst_87 : f32 to vector<8x128xf32>
    %305 = arith.subf %304, %303 : vector<8x128xf32>
    %306 = math.exp %305 : vector<8x128xf32>
    %307 = math.log1p %306 : vector<8x128xf32>
    %308 = arith.addf %297, %307 : vector<8x128xf32>
    %309 = arith.select %300, %302, %308 : vector<8x128xi1>, vector<8x128xf32>
    %310 = vector.extract_strided_slice %290 {offsets = [8, 0], sizes = [8, 128], strides = [1, 1]} : vector<32x128xf32> to vector<8x128xf32>
    %311 = vector.extract_strided_slice %290 {offsets = [16, 0], sizes = [8, 128], strides = [1, 1]} : vector<32x128xf32> to vector<8x128xf32>
    %312 = vector.shape_cast %311 : vector<8x128xf32> to vector<1x8x128xf32>
    %313 = vector.broadcast %292 : vector<1x8x1xf32> to vector<1x8x128xf32>
    %314 = arith.addf %313, %312 : vector<1x8x128xf32>
    %315 = vector.extract_strided_slice %290 {offsets = [24, 0], sizes = [8, 128], strides = [1, 1]} : vector<32x128xf32> to vector<8x128xf32>
    %316 = vector.shape_cast %315 : vector<8x128xf32> to vector<1x8x128xf32>
    %317 = vector.broadcast %291 : vector<8x8x1xf32> to vector<8x8x128xf32>
    %318 = vector.broadcast %316 : vector<1x8x128xf32> to vector<8x8x128xf32>
    %319 = arith.addf %317, %318 : vector<8x8x128xf32>
    %cst_88 = arith.constant dense<0xFF800000> : vector<1x128xf32>
    %320 = vector.multi_reduction <maximumf>, %314, %cst_88 [1] : vector<1x8x128xf32> to vector<1x128xf32>
    %321 = vector.shape_cast %320 : vector<1x128xf32> to vector<1x1x128xf32>
    %322 = vector.broadcast %321 : vector<1x1x128xf32> to vector<1x8x128xf32>
    %323 = arith.subf %314, %322 : vector<1x8x128xf32>
    %324 = math.exp %323 : vector<1x8x128xf32>
    %cst_89 = arith.constant dense<0.000000e+00> : vector<1x128xf32>
    %325 = vector.multi_reduction <add>, %324, %cst_89 [1] : vector<1x8x128xf32> to vector<1x128xf32>
    %326 = vector.shape_cast %325 : vector<1x128xf32> to vector<1x1x128xf32>
    %327 = math.log %326 : vector<1x1x128xf32>
    %328 = vector.broadcast %327 : vector<1x1x128xf32> to vector<1x8x128xf32>
    %329 = arith.subf %323, %328 : vector<1x8x128xf32>
    %cst_90 = arith.constant dense<0xFF800000> : vector<8x128xf32>
    %330 = vector.multi_reduction <maximumf>, %319, %cst_90 [1] : vector<8x8x128xf32> to vector<8x128xf32>
    %331 = vector.shape_cast %330 : vector<8x128xf32> to vector<8x1x128xf32>
    %332 = vector.broadcast %331 : vector<8x1x128xf32> to vector<8x8x128xf32>
    %333 = arith.subf %319, %332 : vector<8x8x128xf32>
    %334 = math.exp %333 : vector<8x8x128xf32>
    %cst_91 = arith.constant dense<0.000000e+00> : vector<8x128xf32>
    %335 = vector.multi_reduction <add>, %334, %cst_91 [1] : vector<8x8x128xf32> to vector<8x128xf32>
    %336 = vector.shape_cast %335 : vector<8x128xf32> to vector<8x1x128xf32>
    %337 = math.log %336 : vector<8x1x128xf32>
    %338 = vector.broadcast %337 : vector<8x1x128xf32> to vector<8x8x128xf32>
    %339 = arith.subf %333, %338 : vector<8x8x128xf32>
    %340 = math.exp %329 : vector<1x8x128xf32>
    %341 = math.exp %339 : vector<8x8x128xf32>
    %342 = vector.shape_cast %241 : vector<8x128xf32> to vector<1x8x128xf32>
    %343 = vector.broadcast %342 : vector<1x8x128xf32> to vector<8x8x128xf32>
    %344 = arith.mulf %341, %343 : vector<8x8x128xf32>
    %cst_92 = arith.constant dense<0.000000e+00> : vector<8x128xf32>
    %345 = vector.multi_reduction <add>, %344, %cst_92 [1] : vector<8x8x128xf32> to vector<8x128xf32>
    %346 = arith.mulf %309, %345 : vector<8x128xf32>
    %347 = arith.addf %346, %310 : vector<8x128xf32>
    %cst_93 = arith.constant 0.000000e+00 : f32
    %348 = vector.broadcast %cst_93 : f32 to vector<8x128xf32>
    %349 = arith.subf %348, %347 : vector<8x128xf32>
    %cst_94 = arith.constant 0.000000e+00 : f32
    %350 = vector.broadcast %cst_94 : f32 to vector<8x128xf32>
    %351 = arith.maximumf %349, %350 : vector<8x128xf32>
    %352 = vector.broadcast %cst_94 : f32 to vector<8x128xf32>
    %353 = arith.subf %349, %352 : vector<8x128xf32>
    %354 = arith.cmpf one, %353, %353 : vector<8x128xf32>
    %355 = vector.broadcast %cst_94 : f32 to vector<8x128xf32>
    %356 = arith.addf %349, %355 : vector<8x128xf32>
    %357 = math.absf %353 : vector<8x128xf32>
    %cst_95 = arith.constant 0.000000e+00 : f32
    %358 = vector.broadcast %cst_95 : f32 to vector<8x128xf32>
    %359 = arith.subf %358, %357 : vector<8x128xf32>
    %360 = math.exp %359 : vector<8x128xf32>
    %361 = math.log1p %360 : vector<8x128xf32>
    %362 = arith.addf %351, %361 : vector<8x128xf32>
    %363 = arith.select %354, %356, %362 : vector<8x128xi1>, vector<8x128xf32>
    %cst_96 = arith.constant 0.000000e+00 : f32
    %364 = vector.broadcast %cst_96 : f32 to vector<8x128xf32>
    %365 = arith.subf %364, %363 : vector<8x128xf32>
    %366 = math.exp %365 : vector<8x128xf32>
    %367 = vector.shape_cast %366 : vector<8x128xf32> to vector<1x8x128xf32>
    %368 = arith.mulf %340, %367 : vector<1x8x128xf32>
    %cst_97 = arith.constant dense<0.000000e+00> : vector<1x128xf32>
    %369 = vector.multi_reduction <add>, %368, %cst_97 [1] : vector<1x8x128xf32> to vector<1x128xf32>
    %cst_98 = arith.constant 0.999998986 : f32
    %370 = vector.broadcast %cst_98 : f32 to vector<1x128xf32>
    %371 = arith.mulf %369, %370 : vector<1x128xf32>
    %cst_99 = arith.constant 5.000000e-07 : f32
    %372 = vector.broadcast %cst_99 : f32 to vector<1x128xf32>
    %373 = arith.addf %371, %372 : vector<1x128xf32>
    %cst_100 = arith.constant 1.000000e+02 : f32
    %374 = vector.broadcast %cst_100 : f32 to vector<1x128xf32>
    %375 = arith.mulf %373, %374 : vector<1x128xf32>
    %376 = math.log %375 : vector<1x128xf32>
    %cst_101 = arith.constant 4.60517025 : f32
    %377 = vector.broadcast %cst_101 : f32 to vector<1x128xf32>
    %378 = arith.subf %376, %377 : vector<1x128xf32>
    %cst_102 = arith.constant 1.000000e+00 : f32
    %379 = vector.broadcast %cst_102 : f32 to vector<1x128xf32>
    %380 = arith.subf %379, %373 : vector<1x128xf32>
    %cst_103 = arith.constant 1.000000e+02 : f32
    %381 = vector.broadcast %cst_103 : f32 to vector<1x128xf32>
    %382 = arith.mulf %380, %381 : vector<1x128xf32>
    %383 = math.log %382 : vector<1x128xf32>
    %cst_104 = arith.constant 4.60517025 : f32
    %384 = vector.broadcast %cst_104 : f32 to vector<1x128xf32>
    %385 = arith.subf %383, %384 : vector<1x128xf32>
    %386 = arith.subf %378, %385 : vector<1x128xf32>
    %cst_105 = arith.constant 2.000000e+00 : f32
    %387 = vector.broadcast %cst_105 : f32 to vector<8x128xf32>
    %388 = arith.mulf %387, %363 : vector<8x128xf32>
    %389 = arith.addf %347, %388 : vector<8x128xf32>
    %cst_106 = arith.constant 0.000000e+00 : f32
    %390 = vector.broadcast %cst_106 : f32 to vector<8x128xf32>
    %391 = arith.subf %390, %389 : vector<8x128xf32>
    %cst_107 = arith.constant 2.000000e-06 : f32
    %392 = vector.broadcast %cst_107 : f32 to vector<8x128xf32>
    %393 = arith.subf %391, %392 : vector<8x128xf32>
    %cst_108 = arith.constant 1.000000e+02 : f32
    %394 = vector.broadcast %cst_108 : f32 to vector<8x128xf32>
    %395 = arith.mulf %309, %394 : vector<8x128xf32>
    %396 = math.log %395 : vector<8x128xf32>
    %cst_109 = arith.constant 4.60517025 : f32
    %397 = vector.broadcast %cst_109 : f32 to vector<8x128xf32>
    %398 = arith.subf %396, %397 : vector<8x128xf32>
    %399 = arith.addf %393, %398 : vector<8x128xf32>
    %400 = vector.shape_cast %399 : vector<8x128xf32> to vector<1x8x128xf32>
    %401 = arith.addf %329, %400 : vector<1x8x128xf32>
    %cst_110 = arith.constant dense<0xFF800000> : vector<1x128xf32>
    %402 = vector.multi_reduction <maximumf>, %401, %cst_110 [1] : vector<1x8x128xf32> to vector<1x128xf32>
    %403 = vector.shape_cast %402 : vector<1x128xf32> to vector<1x1x128xf32>
    %404 = vector.broadcast %403 : vector<1x1x128xf32> to vector<1x8x128xf32>
    %405 = arith.subf %401, %404 : vector<1x8x128xf32>
    %406 = math.exp %405 : vector<1x8x128xf32>
    %407 = vector.shape_cast %406 : vector<1x8x128xf32> to vector<1x8x1x128xf32>
    %408 = vector.shape_cast %341 : vector<8x8x128xf32> to vector<1x8x8x128xf32>
    %409 = vector.broadcast %407 : vector<1x8x1x128xf32> to vector<1x8x8x128xf32>
    %410 = arith.mulf %409, %408 : vector<1x8x8x128xf32>
    %cst_111 = arith.constant dense<0.000000e+00> : vector<1x8x128xf32>
    %411 = vector.multi_reduction <add>, %410, %cst_111 [1] : vector<1x8x8x128xf32> to vector<1x8x128xf32>
    %412 = math.log %411 : vector<1x8x128xf32>
    %413 = vector.broadcast %403 : vector<1x1x128xf32> to vector<1x8x128xf32>
    %414 = arith.addf %412, %413 : vector<1x8x128xf32>
    %cst_112 = arith.constant -1.00000045E-6 : f32
    %415 = vector.broadcast %cst_112 : f32 to vector<1x8x128xf32>
    %416 = arith.addf %414, %415 : vector<1x8x128xf32>
    %417 = arith.addf %378, %385 : vector<1x128xf32>
    %418 = vector.shape_cast %417 : vector<1x128xf32> to vector<1x1x128xf32>
    %419 = vector.broadcast %418 : vector<1x1x128xf32> to vector<1x8x128xf32>
    %420 = arith.subf %416, %419 : vector<1x8x128xf32>
    %421 = vector.shape_cast %289 : vector<8x128xf32> to vector<1x8x128xf32>
    %422 = arith.addf %420, %421 : vector<1x8x128xf32>
    %cst_113 = arith.constant dense<0xFF800000> : vector<1x128xf32>
    %423 = vector.multi_reduction <maximumf>, %422, %cst_113 [1] : vector<1x8x128xf32> to vector<1x128xf32>
    %424 = vector.shape_cast %423 : vector<1x128xf32> to vector<1x1x128xf32>
    %425 = vector.broadcast %424 : vector<1x1x128xf32> to vector<1x8x128xf32>
    %426 = arith.subf %422, %425 : vector<1x8x128xf32>
    %427 = math.exp %426 : vector<1x8x128xf32>
    %cst_114 = arith.constant dense<0.000000e+00> : vector<1x128xf32>
    %428 = vector.multi_reduction <add>, %427, %cst_114 [1] : vector<1x8x128xf32> to vector<1x128xf32>
    %429 = math.log %428 : vector<1x128xf32>
    %430 = vector.shape_cast %424 : vector<1x1x128xf32> to vector<1x128xf32>
    %431 = arith.addf %429, %430 : vector<1x128xf32>
    %c0_115 = arith.constant 0 : index
    %c0_116 = arith.constant 0 : index
    %432 = vector.load %arg11[%c0_115, %c0_116] : memref<1x128xf32, #tpu.memory_space<vmem>>, vector<1x128xf32>
    tpu.vector_store %arg11[%c0_115, %c0_116], %386 {strides = array<i32>} : memref<1x128xf32, #tpu.memory_space<vmem>>, vector<1x128xf32>,
    %c0_117 = arith.constant 0 : index
    %c0_118 = arith.constant 0 : index
    %433 = vector.load %arg12[%c0_117, %c0_118] : memref<1x128xf32, #tpu.memory_space<vmem>>, vector<1x128xf32>
    tpu.vector_store %arg12[%c0_117, %c0_118], %431 {strides = array<i32>} : memref<1x128xf32, #tpu.memory_space<vmem>>, vector<1x128xf32>,
    return
  }
  func.func @transform_0(%arg0: i32) -> (i32, i32) {
    %c0_i32 = arith.constant 0 : i32
    %c0_i32_0 = arith.constant 0 : i32
    return %c0_i32, %arg0 : i32, i32
  }
  func.func @transform_1(%arg0: i32) -> (i32, i32) {
    %c0_i32 = arith.constant 0 : i32
    %c0_i32_0 = arith.constant 0 : i32
    return %c0_i32, %arg0 : i32, i32
  }
  func.func @transform_2(%arg0: i32) -> (i32, i32, i32) {
    %c0_i32 = arith.constant 0 : i32
    %c0_i32_0 = arith.constant 0 : i32
    %c0_i32_1 = arith.constant 0 : i32
    %c0_i32_2 = arith.constant 0 : i32
    return %c0_i32, %c0_i32_0, %c0_i32_1 : i32, i32, i32
  }
  func.func @transform_3(%arg0: i32) -> (i32, i32, i32) {
    %c0_i32 = arith.constant 0 : i32
    %c0_i32_0 = arith.constant 0 : i32
    %c0_i32_1 = arith.constant 0 : i32
    %c0_i32_2 = arith.constant 0 : i32
    return %c0_i32, %c0_i32_0, %c0_i32_1 : i32, i32, i32
  }
  func.func @transform_4(%arg0: i32) -> (i32, i32) {
    %c0_i32 = arith.constant 0 : i32
    %c0_i32_0 = arith.constant 0 : i32
    return %c0_i32, %arg0 : i32, i32
  }
  func.func @transform_5(%arg0: i32) -> (i32, i32, i32) {
    %c0_i32 = arith.constant 0 : i32
    %c0_i32_0 = arith.constant 0 : i32
    %c0_i32_1 = arith.constant 0 : i32
    %c0_i32_2 = arith.constant 0 : i32
    return %c0_i32, %c0_i32_0, %c0_i32_1 : i32, i32, i32
  }
  func.func @transform_6(%arg0: i32) -> (i32, i32, i32) {
    %c0_i32 = arith.constant 0 : i32
    %c0_i32_0 = arith.constant 0 : i32
    %c0_i32_1 = arith.constant 0 : i32
    %c0_i32_2 = arith.constant 0 : i32
    return %c0_i32, %c0_i32_0, %c0_i32_1 : i32, i32, i32
  }
  func.func @transform_7(%arg0: i32) -> (i32, i32) {
    %c0_i32 = arith.constant 0 : i32
    %c0_i32_0 = arith.constant 0 : i32
    return %c0_i32, %arg0 : i32, i32
  }
  func.func @transform_8(%arg0: i32) -> (i32, i32, i32) {
    %c0_i32 = arith.constant 0 : i32
    %c0_i32_0 = arith.constant 0 : i32
    %c0_i32_1 = arith.constant 0 : i32
    %c0_i32_2 = arith.constant 0 : i32
    return %c0_i32, %c0_i32_0, %c0_i32_1 : i32, i32, i32
  }
  func.func @transform_9(%arg0: i32) -> (i32, i32, i32) {
    %c0_i32 = arith.constant 0 : i32
    %c0_i32_0 = arith.constant 0 : i32
    %c0_i32_1 = arith.constant 0 : i32
    %c0_i32_2 = arith.constant 0 : i32
    return %c0_i32, %c0_i32_0, %c0_i32_1 : i32, i32, i32
  }
  func.func @transform_10(%arg0: i32) -> (i32, i32) {
    %c0_i32 = arith.constant 0 : i32
    %c0_i32_0 = arith.constant 0 : i32
    return %c0_i32, %arg0 : i32, i32
  }
  func.func @transform_11(%arg0: i32) -> (i32, i32) {
    %c0_i32 = arith.constant 0 : i32
    %c0_i32_0 = arith.constant 0 : i32
    return %c0_i32, %arg0 : i32, i32
  }
}

</mosaic_0001>

<llo_original>
// kernel: tpu_custom_call.1
$region0: #{tpu_custom_call.1}
  #allocation0 [shape = 'u32[]', space=smem, size = 0x4, offset = 0x4, fixed_abs, tag = 'smem constant byte address 0x4 - core index']
  #allocation1 [shape = 'u32[72,128]{1,0:T(1,128)}', space=vmem, size = 0x9000, scoped, tag = 'internal scratch']
  %s0 = inlined_call_operand.vmem [shape: f32[1,128], index: 0, kind: input, shape index: {}]
  %s1 = inlined_call_operand.vmem [shape: f32[25,128], index: 1, kind: input, shape index: {}]
  %s2 = inlined_call_operand.vmem [shape: f32[8,1,1], index: 2, kind: input, shape index: {}]
  %s3 = inlined_call_operand.vmem [shape: f32[8,8,1], index: 3, kind: input, shape index: {}]
  %s4 = inlined_call_operand.vmem [shape: f32[32,128], index: 4, kind: input, shape index: {}]
  %s5 = inlined_call_operand.vmem [shape: f32[8,8,1], index: 5, kind: input, shape index: {}]
  %s6 = inlined_call_operand.vmem [shape: f32[8,8,1], index: 6, kind: input, shape index: {}]
  %s7 = inlined_call_operand.vmem [shape: f32[32,128], index: 7, kind: input, shape index: {}]
  %s8 = inlined_call_operand.vmem [shape: f32[8,8,1], index: 8, kind: input, shape index: {}]
  %s9 = inlined_call_operand.vmem [shape: f32[1,8,1], index: 9, kind: input, shape index: {}]
  %s10 = inlined_call_operand.hbm [shape: f32[1,128], index: 10, kind: output, shape index: {0}]
  %s11 = inlined_call_operand.hbm [shape: f32[1,128], index: 11, kind: output, shape index: {1}]
  %12 = xla_tuple %s10, %s11
  %s13 = sld [smem:[#allocation0]]
  $region58: #{tpu_custom_call.1} parent=0
    _
  %s15 = ssub.s32 1, %s13
  %s16 = scalar_select 0, %s15, %s13
  $region1: #{tpu_custom_call.1} parent=0
    #allocation2 [shape = 'u8[512]{0}', space=vmem, size = 0x400, scoped, tag = 'output window, operand 0, single buffered']
    #allocation3 [shape = 's32[1]{0}', space=sflag, size = 0x4, scoped, tag = 'scoped memory for tpu_custom_call.1']
    #allocation4 [shape = 'u8[512]{0}', space=vmem, size = 0x400, scoped, tag = 'output window, operand 1, single buffered']
    #allocation5 [shape = 's32[1]{0}', space=sflag, size = 0x4, scoped, tag = 'scoped memory for tpu_custom_call.1']
    %17 = vsyncpa [#allocation3], 0
    %18 = vsyncpa [#allocation5], 0
    // Predicated region
    $region2: #{tpu_custom_call.1} parent=1 // pred_check
      _
    $region3: #{tpu_custom_call.1} parent=1 // pred_check_branch
      %20 = sbr.rel (0) target = $region5
    $region4: #{tpu_custom_call.1} parent=1 // pred_region
      _
    $region5: #{tpu_custom_call.1} parent=1 // pred_fallthru
      _
    // Predicated region
    $region6: #{tpu_custom_call.1} parent=1 // pred_check
      _
    $region7: #{tpu_custom_call.1} parent=1 // pred_check_branch
      %22 = sbr.rel (0) target = $region9
    $region8: #{tpu_custom_call.1} parent=1 // pred_region
      _
    $region9: #{tpu_custom_call.1} parent=1 // pred_fallthru
      _
    // Predicated region
    $region10: #{tpu_custom_call.1} parent=1 // pred_check
      _
    $region11: #{tpu_custom_call.1} parent=1 // pred_check_branch
      %24 = sbr.rel (0) target = $region13
    $region12: #{tpu_custom_call.1} parent=1 // pred_region
      _
    $region13: #{tpu_custom_call.1} parent=1 // pred_fallthru
      _
    // Predicated region
    $region14: #{tpu_custom_call.1} parent=1 // pred_check
      _
    $region15: #{tpu_custom_call.1} parent=1 // pred_check_branch
      %26 = sbr.rel (0) target = $region17
    $region16: #{tpu_custom_call.1} parent=1 // pred_region
      _
    $region17: #{tpu_custom_call.1} parent=1 // pred_fallthru
      _
    // Predicated region
    $region18: #{tpu_custom_call.1} parent=1 // pred_check
      _
    $region19: #{tpu_custom_call.1} parent=1 // pred_check_branch
      %28 = sbr.rel (0) target = $region21
    $region20: #{tpu_custom_call.1} parent=1 // pred_region
      _
    $region21: #{tpu_custom_call.1} parent=1 // pred_fallthru
      _
    // Predicated region
    $region22: #{tpu_custom_call.1} parent=1 // pred_check
      _
    $region23: #{tpu_custom_call.1} parent=1 // pred_check_branch
      %30 = sbr.rel (0) target = $region25
    $region24: #{tpu_custom_call.1} parent=1 // pred_region
      _
    $region25: #{tpu_custom_call.1} parent=1 // pred_fallthru
      _
    // Predicated region
    $region26: #{tpu_custom_call.1} parent=1 // pred_check
      _
    $region27: #{tpu_custom_call.1} parent=1 // pred_check_branch
      %32 = sbr.rel (0) target = $region29
    $region28: #{tpu_custom_call.1} parent=1 // pred_region
      _
    $region29: #{tpu_custom_call.1} parent=1 // pred_fallthru
      _
    // Predicated region
    $region30: #{tpu_custom_call.1} parent=1 // pred_check
      _
    $region31: #{tpu_custom_call.1} parent=1 // pred_check_branch
      %34 = sbr.rel (0) target = $region33
    $region32: #{tpu_custom_call.1} parent=1 // pred_region
      _
    $region33: #{tpu_custom_call.1} parent=1 // pred_fallthru
      _
    // Predicated region
    $region34: #{tpu_custom_call.1} parent=1 // pred_check
      _
    $region35: #{tpu_custom_call.1} parent=1 // pred_check_branch
      %36 = sbr.rel (0) target = $region37
    $region36: #{tpu_custom_call.1} parent=1 // pred_region
      _
    $region37: #{tpu_custom_call.1} parent=1 // pred_fallthru
      _
    // Predicated region
    $region38: #{tpu_custom_call.1} parent=1 // pred_check
      _
    $region39: #{tpu_custom_call.1} parent=1 // pred_check_branch
      %38 = sbr.rel (0) target = $region41
    $region40: #{tpu_custom_call.1} parent=1 // pred_region
      _
    $region41: #{tpu_custom_call.1} parent=1 // pred_fallthru
      _
    %v39 = vld [vmem:[%s0] sm:$0x1]
    %v40 = vld [vmem:[%s1] sm:$0xff]
    %v41 = vld [vmem:[%s1 + $0x8] sm:$0xff]
    %v42 = vld [vmem:[%s1 + $0x10] sm:$0xff]
    %v43 = vld [vmem:[%s1 + $0x18] sm:$0x1]
    %v44 = vld [vmem:[%s2] sm:$0x1]
    %v45 = vld [vmem:[%s2 + $0x1] sm:$0x1]
    %v46 = vld [vmem:[%s2 + $0x2] sm:$0x1]
    %v47 = vld [vmem:[%s2 + $0x3] sm:$0x1]
    %v48 = vld [vmem:[%s2 + $0x4] sm:$0x1]
    %v49 = vld [vmem:[%s2 + $0x5] sm:$0x1]
    %v50 = vld [vmem:[%s2 + $0x6] sm:$0x1]
    %v51 = vld [vmem:[%s2 + $0x7] sm:$0x1]
    %v52 = vld [vmem:[%s3] sm:$0xff]
    %v53 = vld [vmem:[%s3 + $0x8] sm:$0xff]
    %v54 = vld [vmem:[%s3 + $0x10] sm:$0xff]
    %v55 = vld [vmem:[%s3 + $0x18] sm:$0xff]
    %v56 = vld [vmem:[%s3 + $0x20] sm:$0xff]
    %v57 = vld [vmem:[%s3 + $0x28] sm:$0xff]
    %v58 = vld [vmem:[%s3 + $0x30] sm:$0xff]
    %v59 = vld [vmem:[%s3 + $0x38] sm:$0xff]
    %v60 = vadd.f32 %v40, 0.54132324
    %v61 = vmax.f32 %v60, 0.0
    %vm62 = vcmp.ne.f32.partialorder %v60, %v60
    %v63 = vadd.f32 %v60, 0.0
    %v64 = vand.u32 2147483647, %v60
    %v65 = vsub.f32 0.0, %v64
    %v66 = vmul.f32 %v65, 1.442695
    %v67 = vpow.pop %v66
    %v68 = vadd.f32 %v67, 1.0
    %v69 = vlog2.pop %v68
    %v70 = vmul.f32 %v69, 0.6931472
    %v71 = vmul.f32 -0.5, %v67
    %v72 = vadd.f32 %v71, 1.0
    %v73 = vmul.f32 %v72, %v67
    %v74 = vand.u32 2147483647, %v67
    %vm75 = vcmp.lt.f32.partialorder %v74, 0.0004427343
    %v76 = vsel %vm75, %v73, %v70
    %v77 = vadd.f32 %v61, %v76
    %v78 = vsel %vm62, %v63, %v77
    %80 = vset.pattern.permute.xlu0 0
    %81 = vperm.xlu0 %80, %v52
    %v82 = vpop.permute.xlu0 %81
    %85 = vset.pattern.permute.xlu0 0
    %86 = vperm.xlu0 %85, %v53
    %v87 = vpop.permute.xlu0 %86
    %90 = vset.pattern.permute.xlu0 0
    %91 = vperm.xlu0 %90, %v54
    %v92 = vpop.permute.xlu0 %91
    %95 = vset.pattern.permute.xlu0 0
    %96 = vperm.xlu0 %95, %v55
    %v97 = vpop.permute.xlu0 %96
    %100 = vset.pattern.permute.xlu0 0
    %101 = vperm.xlu0 %100, %v56
    %v102 = vpop.permute.xlu0 %101
    %105 = vset.pattern.permute.xlu0 0
    %106 = vperm.xlu0 %105, %v57
    %v107 = vpop.permute.xlu0 %106
    %110 = vset.pattern.permute.xlu0 0
    %111 = vperm.xlu0 %110, %v58
    %v112 = vpop.permute.xlu0 %111
    %115 = vset.pattern.permute.xlu0 0
    %116 = vperm.xlu0 %115, %v59
    %v117 = vpop.permute.xlu0 %116
    %v119 = vadd.f32 %v82, %v42
    %v120 = vadd.f32 %v87, %v42
    %v121 = vadd.f32 %v92, %v42
    %v122 = vadd.f32 %v97, %v42
    %v123 = vadd.f32 %v102, %v42
    %v124 = vadd.f32 %v107, %v42
    %v125 = vadd.f32 %v112, %v42
    %v126 = vadd.f32 %v117, %v42
    %128 = vset.pattern.permute.xlu0 0
    %129 = vperm.xlu0 %128, %v44
    %v130 = vpop.permute.xlu0 %129
    %v132 = vperm.slane %v130, 0
    %134 = vset.pattern.permute.xlu0 0
    %135 = vperm.xlu0 %134, %v45
    %v136 = vpop.permute.xlu0 %135
    %v138 = vperm.slane %v136, 0
    %140 = vset.pattern.permute.xlu0 0
    %141 = vperm.xlu0 %140, %v46
    %v142 = vpop.permute.xlu0 %141
    %v144 = vperm.slane %v142, 0
    %146 = vset.pattern.permute.xlu0 0
    %147 = vperm.xlu0 %146, %v47
    %v148 = vpop.permute.xlu0 %147
    %v150 = vperm.slane %v148, 0
    %152 = vset.pattern.permute.xlu0 0
    %153 = vperm.xlu0 %152, %v48
    %v154 = vpop.permute.xlu0 %153
    %v156 = vperm.slane %v154, 0
    %158 = vset.pattern.permute.xlu0 0
    %159 = vperm.xlu0 %158, %v49
    %v160 = vpop.permute.xlu0 %159
    %v162 = vperm.slane %v160, 0
    %164 = vset.pattern.permute.xlu0 0
    %165 = vperm.xlu0 %164, %v50
    %v166 = vpop.permute.xlu0 %165
    %v168 = vperm.slane %v166, 0
    %170 = vset.pattern.permute.xlu0 0
    %171 = vperm.xlu0 %170, %v51
    %v172 = vpop.permute.xlu0 %171
    %v174 = vperm.slane %v172, 0
    %v175 = vadd.f32 %v132, %v43
    %v176 = vadd.f32 %v138, %v43
    %v177 = vadd.f32 %v144, %v43
    %v178 = vadd.f32 %v150, %v43
    %v179 = vadd.f32 %v156, %v43
    %v180 = vadd.f32 %v162, %v43
    %v181 = vadd.f32 %v168, %v43
    %v182 = vadd.f32 %v174, %v43
    %v183 = vrot.slane %v119, 4
    %v184 = vmax.f32 %v119, %v183
    %v185 = vrot.slane %v184, 2
    %v186 = vmax.f32 %v184, %v185
    %v187 = vrot.slane %v186, 1
    %v188 = vmax.f32 %v186, %v187
    %v189 = vrot.slane %v120, 4
    %v190 = vmax.f32 %v120, %v189
    %v191 = vrot.slane %v190, 2
    %v192 = vmax.f32 %v190, %v191
    %v193 = vrot.slane %v192, 1
    %v194 = vmax.f32 %v192, %v193
    %v195 = vrot.slane %v121, 4
    %v196 = vmax.f32 %v121, %v195
    %v197 = vrot.slane %v196, 2
    %v198 = vmax.f32 %v196, %v197
    %v199 = vrot.slane %v198, 1
    %v200 = vmax.f32 %v198, %v199
    %v201 = vrot.slane %v122, 4
    %v202 = vmax.f32 %v122, %v201
    %v203 = vrot.slane %v202, 2
    %v204 = vmax.f32 %v202, %v203
    %v205 = vrot.slane %v204, 1
    %v206 = vmax.f32 %v204, %v205
    %v207 = vrot.slane %v123, 4
    %v208 = vmax.f32 %v123, %v207
    %v209 = vrot.slane %v208, 2
    %v210 = vmax.f32 %v208, %v209
    %v211 = vrot.slane %v210, 1
    %v212 = vmax.f32 %v210, %v211
    %v213 = vrot.slane %v124, 4
    %v214 = vmax.f32 %v124, %v213
    %v215 = vrot.slane %v214, 2
    %v216 = vmax.f32 %v214, %v215
    %v217 = vrot.slane %v216, 1
    %v218 = vmax.f32 %v216, %v217
    %v219 = vrot.slane %v125, 4
    %v220 = vmax.f32 %v125, %v219
    %v221 = vrot.slane %v220, 2
    %v222 = vmax.f32 %v220, %v221
    %v223 = vrot.slane %v222, 1
    %v224 = vmax.f32 %v222, %v223
    %v225 = vrot.slane %v126, 4
    %v226 = vmax.f32 %v126, %v225
    %v227 = vrot.slane %v226, 2
    %v228 = vmax.f32 %v226, %v227
    %v229 = vrot.slane %v228, 1
    %v230 = vmax.f32 %v228, %v229
    %v231 = vsub.f32 %v119, %v188
    %v232 = vsub.f32 %v120, %v194
    %v233 = vsub.f32 %v121, %v200
    %v234 = vsub.f32 %v122, %v206
    %v235 = vsub.f32 %v123, %v212
    %v236 = vsub.f32 %v124, %v218
    %v237 = vsub.f32 %v125, %v224
    %v238 = vsub.f32 %v126, %v230
    %v239 = vmul.f32 %v231, 1.442695
    %v240 = vpow.pop %v239
    %v241 = vmul.f32 %v232, 1.442695
    %v242 = vpow.pop %v241
    %v243 = vmul.f32 %v233, 1.442695
    %v244 = vpow.pop %v243
    %v245 = vmul.f32 %v234, 1.442695
    %v246 = vpow.pop %v245
    %v247 = vmul.f32 %v235, 1.442695
    %v248 = vpow.pop %v247
    %v249 = vmul.f32 %v236, 1.442695
    %v250 = vpow.pop %v249
    %v251 = vmul.f32 %v237, 1.442695
    %v252 = vpow.pop %v251
    %v253 = vmul.f32 %v238, 1.442695
    %v254 = vpow.pop %v253
    %v255 = vrot.slane %v240, 4
    %v256 = vadd.f32 %v240, %v255
    %v257 = vrot.slane %v256, 2
    %v258 = vadd.f32 %v256, %v257
    %v259 = vrot.slane %v258, 1
    %v260 = vadd.f32 %v258, %v259
    %v261 = vrot.slane %v242, 4
    %v262 = vadd.f32 %v242, %v261
    %v263 = vrot.slane %v262, 2
    %v264 = vadd.f32 %v262, %v263
    %v265 = vrot.slane %v264, 1
    %v266 = vadd.f32 %v264, %v265
    %v267 = vrot.slane %v244, 4
    %v268 = vadd.f32 %v244, %v267
    %v269 = vrot.slane %v268, 2
    %v270 = vadd.f32 %v268, %v269
    %v271 = vrot.slane %v270, 1
    %v272 = vadd.f32 %v270, %v271
    %v273 = vrot.slane %v246, 4
    %v274 = vadd.f32 %v246, %v273
    %v275 = vrot.slane %v274, 2
    %v276 = vadd.f32 %v274, %v275
    %v277 = vrot.slane %v276, 1
    %v278 = vadd.f32 %v276, %v277
    %v279 = vrot.slane %v248, 4
    %v280 = vadd.f32 %v248, %v279
    %v281 = vrot.slane %v280, 2
    %v282 = vadd.f32 %v280, %v281
    %v283 = vrot.slane %v282, 1
    %v284 = vadd.f32 %v282, %v283
    %v285 = vrot.slane %v250, 4
    %v286 = vadd.f32 %v250, %v285
    %v287 = vrot.slane %v286, 2
    %v288 = vadd.f32 %v286, %v287
    %v289 = vrot.slane %v288, 1
    %v290 = vadd.f32 %v288, %v289
    %v291 = vrot.slane %v252, 4
    %v292 = vadd.f32 %v252, %v291
    %v293 = vrot.slane %v292, 2
    %v294 = vadd.f32 %v292, %v293
    %v295 = vrot.slane %v294, 1
    %v296 = vadd.f32 %v294, %v295
    %v297 = vrot.slane %v254, 4
    %v298 = vadd.f32 %v254, %v297
    %v299 = vrot.slane %v298, 2
    %v300 = vadd.f32 %v298, %v299
    %v301 = vrot.slane %v300, 1
    %v302 = vadd.f32 %v300, %v301
    %v303 = vlog2.pop %v260
    %v304 = vmul.f32 %v303, 0.6931472
    %v305 = vlog2.pop %v266
    %v306 = vmul.f32 %v305, 0.6931472
    %v307 = vlog2.pop %v272
    %v308 = vmul.f32 %v307, 0.6931472
    %v309 = vlog2.pop %v278
    %v310 = vmul.f32 %v309, 0.6931472
    %v311 = vlog2.pop %v284
    %v312 = vmul.f32 %v311, 0.6931472
    %v313 = vlog2.pop %v290
    %v314 = vmul.f32 %v313, 0.6931472
    %v315 = vlog2.pop %v296
    %v316 = vmul.f32 %v315, 0.6931472
    %v317 = vlog2.pop %v302
    %v318 = vmul.f32 %v317, 0.6931472
    %v319 = vsub.f32 %v231, %v304
    %v320 = vsub.f32 %v232, %v306
    %v321 = vsub.f32 %v233, %v308
    %v322 = vsub.f32 %v234, %v310
    %v323 = vsub.f32 %v235, %v312
    %v324 = vsub.f32 %v236, %v314
    %v325 = vsub.f32 %v237, %v316
    %v326 = vsub.f32 %v238, %v318
    %v327 = vsub.f32 %v175, %v175
    %v328 = vsub.f32 %v176, %v176
    %v329 = vsub.f32 %v177, %v177
    %v330 = vsub.f32 %v178, %v178
    %v331 = vsub.f32 %v179, %v179
    %v332 = vsub.f32 %v180, %v180
    %v333 = vsub.f32 %v181, %v181
    %v334 = vsub.f32 %v182, %v182
    %v335 = vmul.f32 %v327, 1.442695
    %v336 = vpow.pop %v335
    %v337 = vmul.f32 %v328, 1.442695
    %v338 = vpow.pop %v337
    %v339 = vmul.f32 %v329, 1.442695
    %v340 = vpow.pop %v339
    %v341 = vmul.f32 %v330, 1.442695
    %v342 = vpow.pop %v341
    %v343 = vmul.f32 %v331, 1.442695
    %v344 = vpow.pop %v343
    %v345 = vmul.f32 %v332, 1.442695
    %v346 = vpow.pop %v345
    %v347 = vmul.f32 %v333, 1.442695
    %v348 = vpow.pop %v347
    %v349 = vmul.f32 %v334, 1.442695
    %v350 = vpow.pop %v349
    %v351 = vadd.f32 %v336, 0.0
    %v352 = vadd.f32 %v338, 0.0
    %v353 = vadd.f32 %v340, 0.0
    %v354 = vadd.f32 %v342, 0.0
    %v355 = vadd.f32 %v344, 0.0
    %v356 = vadd.f32 %v346, 0.0
    %v357 = vadd.f32 %v348, 0.0
    %v358 = vadd.f32 %v350, 0.0
    %v359 = vlog2.pop %v351
    %v360 = vmul.f32 %v359, 0.6931472
    %v361 = vlog2.pop %v352
    %v362 = vmul.f32 %v361, 0.6931472
    %v363 = vlog2.pop %v353
    %v364 = vmul.f32 %v363, 0.6931472
    %v365 = vlog2.pop %v354
    %v366 = vmul.f32 %v365, 0.6931472
    %v367 = vlog2.pop %v355
    %v368 = vmul.f32 %v367, 0.6931472
    %v369 = vlog2.pop %v356
    %v370 = vmul.f32 %v369, 0.6931472
    %v371 = vlog2.pop %v357
    %v372 = vmul.f32 %v371, 0.6931472
    %v373 = vlog2.pop %v358
    %v374 = vmul.f32 %v373, 0.6931472
    %v375 = vsub.f32 %v327, %v360
    %v376 = vsub.f32 %v328, %v362
    %v377 = vsub.f32 %v329, %v364
    %v378 = vsub.f32 %v330, %v366
    %v379 = vsub.f32 %v331, %v368
    %v380 = vsub.f32 %v332, %v370
    %v381 = vsub.f32 %v333, %v372
    %v382 = vsub.f32 %v334, %v374
    %v383 = vmul.f32 %v319, 1.442695
    %v384 = vpow.pop %v383
    %v385 = vmul.f32 %v320, 1.442695
    %v386 = vpow.pop %v385
    %v387 = vmul.f32 %v321, 1.442695
    %v388 = vpow.pop %v387
    %v389 = vmul.f32 %v322, 1.442695
    %v390 = vpow.pop %v389
    %v391 = vmul.f32 %v323, 1.442695
    %v392 = vpow.pop %v391
    %v393 = vmul.f32 %v324, 1.442695
    %v394 = vpow.pop %v393
    %v395 = vmul.f32 %v325, 1.442695
    %v396 = vpow.pop %v395
    %v397 = vmul.f32 %v326, 1.442695
    %v398 = vpow.pop %v397
    %v399 = vmul.f32 %v375, 1.442695
    %v400 = vpow.pop %v399
    %v401 = vmul.f32 %v376, 1.442695
    %v402 = vpow.pop %v401
    %v403 = vmul.f32 %v377, 1.442695
    %v404 = vpow.pop %v403
    %v405 = vmul.f32 %v378, 1.442695
    %v406 = vpow.pop %v405
    %v407 = vmul.f32 %v379, 1.442695
    %v408 = vpow.pop %v407
    %v409 = vmul.f32 %v380, 1.442695
    %v410 = vpow.pop %v409
    %v411 = vmul.f32 %v381, 1.442695
    %v412 = vpow.pop %v411
    %v413 = vmul.f32 %v382, 1.442695
    %v414 = vpow.pop %v413
    %v415 = vmul.f32 %v400, %v39
    %v416 = vmul.f32 %v402, %v39
    %v417 = vmul.f32 %v404, %v39
    %v418 = vmul.f32 %v406, %v39
    %v419 = vmul.f32 %v408, %v39
    %v420 = vmul.f32 %v410, %v39
    %v421 = vmul.f32 %v412, %v39
    %v422 = vmul.f32 %v414, %v39
    %v423 = vadd.f32 %v415, 0.0
    %v424 = vadd.f32 %v416, 0.0
    %v425 = vadd.f32 %v417, 0.0
    %v426 = vadd.f32 %v418, 0.0
    %v427 = vadd.f32 %v419, 0.0
    %v428 = vadd.f32 %v420, 0.0
    %v429 = vadd.f32 %v421, 0.0
    %v430 = vadd.f32 %v422, 0.0
    %v439 = vrot.slane %v424, 7
    %vm440 = vcmask 1041409
    %v441 = vsel %vm440, %v439, %v423
    %v442 = vrot.slane %v425, 6
    %vm443 = vcmask 1042434
    %v444 = vsel %vm443, %v442, %v441
    %v445 = vrot.slane %v426, 5
    %vm446 = vcmask 1043459
    %v447 = vsel %vm446, %v445, %v444
    %v448 = vrot.slane %v427, 4
    %vm449 = vcmask 1044484
    %v450 = vsel %vm449, %v448, %v447
    %v451 = vrot.slane %v428, 3
    %vm452 = vcmask 1045509
    %v453 = vsel %vm452, %v451, %v450
    %v454 = vrot.slane %v429, 2
    %vm455 = vcmask 1046534
    %v456 = vsel %vm455, %v454, %v453
    %v457 = vrot.slane %v430, 1
    %vm458 = vcmask 1047559
    %v459 = vsel %vm458, %v457, %v456
    %v461 = vmul.f32 %v78, %v459
    %v462 = vadd.f32 %v461, %v41
    %v463 = vsub.f32 0.0, %v462
    %v464 = vmax.f32 %v463, 0.0
    %vm465 = vcmp.ne.f32.partialorder %v463, %v463
    %v466 = vadd.f32 %v463, 0.0
    %v467 = vand.u32 2147483647, %v463
    %v468 = vsub.f32 0.0, %v467
    %v469 = vmul.f32 %v468, 1.442695
    %v470 = vpow.pop %v469
    %v471 = vadd.f32 %v470, 1.0
    %v472 = vlog2.pop %v471
    %v473 = vmul.f32 %v472, 0.6931472
    %v474 = vmul.f32 -0.5, %v470
    %v475 = vadd.f32 %v474, 1.0
    %v476 = vmul.f32 %v475, %v470
    %v477 = vand.u32 2147483647, %v470
    %vm478 = vcmp.lt.f32.partialorder %v477, 0.0004427343
    %v479 = vsel %vm478, %v476, %v473
    %v480 = vadd.f32 %v464, %v479
    %v481 = vsel %vm465, %v466, %v480
    %v482 = vsub.f32 0.0, %v481
    %v483 = vmul.f32 %v482, 1.442695
    %v484 = vpow.pop %v483
    %v485 = vmul.f32 %v384, %v484
    %v486 = vmul.f32 %v386, %v484
    %v487 = vmul.f32 %v388, %v484
    %v488 = vmul.f32 %v390, %v484
    %v489 = vmul.f32 %v392, %v484
    %v490 = vmul.f32 %v394, %v484
    %v491 = vmul.f32 %v396, %v484
    %v492 = vmul.f32 %v398, %v484
    %v493 = vrot.slane %v485, 4
    %v494 = vadd.f32 %v485, %v493
    %v495 = vrot.slane %v494, 2
    %v496 = vadd.f32 %v494, %v495
    %v497 = vrot.slane %v496, 1
    %v498 = vadd.f32 %v496, %v497
    %v499 = vrot.slane %v486, 4
    %v500 = vadd.f32 %v486, %v499
    %v501 = vrot.slane %v500, 2
    %v502 = vadd.f32 %v500, %v501
    %v503 = vrot.slane %v502, 1
    %v504 = vadd.f32 %v502, %v503
    %v505 = vrot.slane %v487, 4
    %v506 = vadd.f32 %v487, %v505
    %v507 = vrot.slane %v506, 2
    %v508 = vadd.f32 %v506, %v507
    %v509 = vrot.slane %v508, 1
    %v510 = vadd.f32 %v508, %v509
    %v511 = vrot.slane %v488, 4
    %v512 = vadd.f32 %v488, %v511
    %v513 = vrot.slane %v512, 2
    %v514 = vadd.f32 %v512, %v513
    %v515 = vrot.slane %v514, 1
    %v516 = vadd.f32 %v514, %v515
    %v517 = vrot.slane %v489, 4
    %v518 = vadd.f32 %v489, %v517
    %v519 = vrot.slane %v518, 2
    %v520 = vadd.f32 %v518, %v519
    %v521 = vrot.slane %v520, 1
    %v522 = vadd.f32 %v520, %v521
    %v523 = vrot.slane %v490, 4
    %v524 = vadd.f32 %v490, %v523
    %v525 = vrot.slane %v524, 2
    %v526 = vadd.f32 %v524, %v525
    %v527 = vrot.slane %v526, 1
    %v528 = vadd.f32 %v526, %v527
    %v529 = vrot.slane %v491, 4
    %v530 = vadd.f32 %v491, %v529
    %v531 = vrot.slane %v530, 2
    %v532 = vadd.f32 %v530, %v531
    %v533 = vrot.slane %v532, 1
    %v534 = vadd.f32 %v532, %v533
    %v535 = vrot.slane %v492, 4
    %v536 = vadd.f32 %v492, %v535
    %v537 = vrot.slane %v536, 2
    %v538 = vadd.f32 %v536, %v537
    %v539 = vrot.slane %v538, 1
    %v540 = vadd.f32 %v538, %v539
    %v541 = vmul.f32 %v498, 0.999999
    %v542 = vmul.f32 %v504, 0.999999
    %v543 = vmul.f32 %v510, 0.999999
    %v544 = vmul.f32 %v516, 0.999999
    %v545 = vmul.f32 %v522, 0.999999
    %v546 = vmul.f32 %v528, 0.999999
    %v547 = vmul.f32 %v534, 0.999999
    %v548 = vmul.f32 %v540, 0.999999
    %v549 = vadd.f32 %v541, 5e-07
    %v550 = vadd.f32 %v542, 5e-07
    %v551 = vadd.f32 %v543, 5e-07
    %v552 = vadd.f32 %v544, 5e-07
    %v553 = vadd.f32 %v545, 5e-07
    %v554 = vadd.f32 %v546, 5e-07
    %v555 = vadd.f32 %v547, 5e-07
    %v556 = vadd.f32 %v548, 5e-07
    %v557 = vmul.f32 %v549, 100.0
    %v558 = vmul.f32 %v550, 100.0
    %v559 = vmul.f32 %v551, 100.0
    %v560 = vmul.f32 %v552, 100.0
    %v561 = vmul.f32 %v553, 100.0
    %v562 = vmul.f32 %v554, 100.0
    %v563 = vmul.f32 %v555, 100.0
    %v564 = vmul.f32 %v556, 100.0
    %v565 = vlog2.pop %v557
    %v566 = vmul.f32 %v565, 0.6931472
    %v567 = vlog2.pop %v558
    %v568 = vmul.f32 %v567, 0.6931472
    %v569 = vlog2.pop %v559
    %v570 = vmul.f32 %v569, 0.6931472
    %v571 = vlog2.pop %v560
    %v572 = vmul.f32 %v571, 0.6931472
    %v573 = vlog2.pop %v561
    %v574 = vmul.f32 %v573, 0.6931472
    %v575 = vlog2.pop %v562
    %v576 = vmul.f32 %v575, 0.6931472
    %v577 = vlog2.pop %v563
    %v578 = vmul.f32 %v577, 0.6931472
    %v579 = vlog2.pop %v564
    %v580 = vmul.f32 %v579, 0.6931472
    %v581 = vsub.f32 %v566, 4.6051702
    %v582 = vsub.f32 %v568, 4.6051702
    %v583 = vsub.f32 %v570, 4.6051702
    %v584 = vsub.f32 %v572, 4.6051702
    %v585 = vsub.f32 %v574, 4.6051702
    %v586 = vsub.f32 %v576, 4.6051702
    %v587 = vsub.f32 %v578, 4.6051702
    %v588 = vsub.f32 %v580, 4.6051702
    %v589 = vsub.f32 1.0, %v549
    %v590 = vsub.f32 1.0, %v550
    %v591 = vsub.f32 1.0, %v551
    %v592 = vsub.f32 1.0, %v552
    %v593 = vsub.f32 1.0, %v553
    %v594 = vsub.f32 1.0, %v554
    %v595 = vsub.f32 1.0, %v555
    %v596 = vsub.f32 1.0, %v556
    %v597 = vmul.f32 %v589, 100.0
    %v598 = vmul.f32 %v590, 100.0
    %v599 = vmul.f32 %v591, 100.0
    %v600 = vmul.f32 %v592, 100.0
    %v601 = vmul.f32 %v593, 100.0
    %v602 = vmul.f32 %v594, 100.0
    %v603 = vmul.f32 %v595, 100.0
    %v604 = vmul.f32 %v596, 100.0
    %v605 = vlog2.pop %v597
    %v606 = vmul.f32 %v605, 0.6931472
    %v607 = vlog2.pop %v598
    %v608 = vmul.f32 %v607, 0.6931472
    %v609 = vlog2.pop %v599
    %v610 = vmul.f32 %v609, 0.6931472
    %v611 = vlog2.pop %v600
    %v612 = vmul.f32 %v611, 0.6931472
    %v613 = vlog2.pop %v601
    %v614 = vmul.f32 %v613, 0.6931472
    %v615 = vlog2.pop %v602
    %v616 = vmul.f32 %v615, 0.6931472
    %v617 = vlog2.pop %v603
    %v618 = vmul.f32 %v617, 0.6931472
    %v619 = vlog2.pop %v604
    %v620 = vmul.f32 %v619, 0.6931472
    %v621 = vsub.f32 %v606, 4.6051702
    %v622 = vsub.f32 %v608, 4.6051702
    %v623 = vsub.f32 %v610, 4.6051702
    %v624 = vsub.f32 %v612, 4.6051702
    %v625 = vsub.f32 %v614, 4.6051702
    %v626 = vsub.f32 %v616, 4.6051702
    %v627 = vsub.f32 %v618, 4.6051702
    %v628 = vsub.f32 %v620, 4.6051702
    %v629 = vsub.f32 %v581, %v621
    %v630 = vsub.f32 %v582, %v622
    %v631 = vsub.f32 %v583, %v623
    %v632 = vsub.f32 %v584, %v624
    %v633 = vsub.f32 %v585, %v625
    %v634 = vsub.f32 %v586, %v626
    %v635 = vsub.f32 %v587, %v627
    %v636 = vsub.f32 %v588, %v628
    %v637 = vmul.f32 %v481, 2.0
    %v638 = vadd.f32 %v462, %v637
    %v639 = vsub.f32 0.0, %v638
    %v640 = vsub.f32 %v639, 2e-06
    %v641 = vmul.f32 %v78, 100.0
    %v642 = vlog2.pop %v641
    %v643 = vmul.f32 %v642, 0.6931472
    %v644 = vsub.f32 %v643, 4.6051702
    %v645 = vadd.f32 %v640, %v644
    %v646 = vadd.f32 %v319, %v645
    %v647 = vadd.f32 %v320, %v645
    %v648 = vadd.f32 %v321, %v645
    %v649 = vadd.f32 %v322, %v645
    %v650 = vadd.f32 %v323, %v645
    %v651 = vadd.f32 %v324, %v645
    %v652 = vadd.f32 %v325, %v645
    %v653 = vadd.f32 %v326, %v645
    %v654 = vrot.slane %v646, 4
    %v655 = vmax.f32 %v646, %v654
    %v656 = vrot.slane %v655, 2
    %v657 = vmax.f32 %v655, %v656
    %v658 = vrot.slane %v657, 1
    %v659 = vmax.f32 %v657, %v658
    %v660 = vrot.slane %v647, 4
    %v661 = vmax.f32 %v647, %v660
    %v662 = vrot.slane %v661, 2
    %v663 = vmax.f32 %v661, %v662
    %v664 = vrot.slane %v663, 1
    %v665 = vmax.f32 %v663, %v664
    %v666 = vrot.slane %v648, 4
    %v667 = vmax.f32 %v648, %v666
    %v668 = vrot.slane %v667, 2
    %v669 = vmax.f32 %v667, %v668
    %v670 = vrot.slane %v669, 1
    %v671 = vmax.f32 %v669, %v670
    %v672 = vrot.slane %v649, 4
    %v673 = vmax.f32 %v649, %v672
    %v674 = vrot.slane %v673, 2
    %v675 = vmax.f32 %v673, %v674
    %v676 = vrot.slane %v675, 1
    %v677 = vmax.f32 %v675, %v676
    %v678 = vrot.slane %v650, 4
    %v679 = vmax.f32 %v650, %v678
    %v680 = vrot.slane %v679, 2
    %v681 = vmax.f32 %v679, %v680
    %v682 = vrot.slane %v681, 1
    %v683 = vmax.f32 %v681, %v682
    %v684 = vrot.slane %v651, 4
    %v685 = vmax.f32 %v651, %v684
    %v686 = vrot.slane %v685, 2
    %v687 = vmax.f32 %v685, %v686
    %v688 = vrot.slane %v687, 1
    %v689 = vmax.f32 %v687, %v688
    %v690 = vrot.slane %v652, 4
    %v691 = vmax.f32 %v652, %v690
    %v692 = vrot.slane %v691, 2
    %v693 = vmax.f32 %v691, %v692
    %v694 = vrot.slane %v693, 1
    %v695 = vmax.f32 %v693, %v694
    %v696 = vrot.slane %v653, 4
    %v697 = vmax.f32 %v653, %v696
    %v698 = vrot.slane %v697, 2
    %v699 = vmax.f32 %v697, %v698
    %v700 = vrot.slane %v699, 1
    %v701 = vmax.f32 %v699, %v700
    %v702 = vsub.f32 %v646, %v659
    %v703 = vsub.f32 %v647, %v665
    %v704 = vsub.f32 %v648, %v671
    %v705 = vsub.f32 %v649, %v677
    %v706 = vsub.f32 %v650, %v683
    %v707 = vsub.f32 %v651, %v689
    %v708 = vsub.f32 %v652, %v695
    %v709 = vsub.f32 %v653, %v701
    %v710 = vmul.f32 %v702, 1.442695
    %v711 = vpow.pop %v710
    %v712 = vmul.f32 %v703, 1.442695
    %v713 = vpow.pop %v712
    %v714 = vmul.f32 %v704, 1.442695
    %v715 = vpow.pop %v714
    %v716 = vmul.f32 %v705, 1.442695
    %v717 = vpow.pop %v716
    %v718 = vmul.f32 %v706, 1.442695
    %v719 = vpow.pop %v718
    %v720 = vmul.f32 %v707, 1.442695
    %v721 = vpow.pop %v720
    %v722 = vmul.f32 %v708, 1.442695
    %v723 = vpow.pop %v722
    %v724 = vmul.f32 %v709, 1.442695
    %v725 = vpow.pop %v724
    %v734 = vrot.slane %v711, 1
    %v735 = vrot.slane %v711, 2
    %v736 = vrot.slane %v711, 3
    %v737 = vrot.slane %v711, 4
    %v738 = vrot.slane %v711, 5
    %v739 = vrot.slane %v711, 6
    %v740 = vrot.slane %v711, 7
    %v741 = vrot.slane %v713, 1
    %v742 = vrot.slane %v713, 2
    %v743 = vrot.slane %v713, 3
    %v744 = vrot.slane %v713, 4
    %v745 = vrot.slane %v713, 5
    %v746 = vrot.slane %v713, 6
    %v747 = vrot.slane %v713, 7
    %v748 = vrot.slane %v715, 1
    %v749 = vrot.slane %v715, 2
    %v750 = vrot.slane %v715, 3
    %v751 = vrot.slane %v715, 4
    %v752 = vrot.slane %v715, 5
    %v753 = vrot.slane %v715, 6
    %v754 = vrot.slane %v715, 7
    %v755 = vrot.slane %v717, 1
    %v756 = vrot.slane %v717, 2
    %v757 = vrot.slane %v717, 3
    %v758 = vrot.slane %v717, 4
    %v759 = vrot.slane %v717, 5
    %v760 = vrot.slane %v717, 6
    %v761 = vrot.slane %v717, 7
    %v762 = vrot.slane %v719, 1
    %v763 = vrot.slane %v719, 2
    %v764 = vrot.slane %v719, 3
    %v765 = vrot.slane %v719, 4
    %v766 = vrot.slane %v719, 5
    %v767 = vrot.slane %v719, 6
    %v768 = vrot.slane %v719, 7
    %v769 = vrot.slane %v721, 1
    %v770 = vrot.slane %v721, 2
    %v771 = vrot.slane %v721, 3
    %v772 = vrot.slane %v721, 4
    %v773 = vrot.slane %v721, 5
    %v774 = vrot.slane %v721, 6
    %v775 = vrot.slane %v721, 7
    %v776 = vrot.slane %v723, 1
    %v777 = vrot.slane %v723, 2
    %v778 = vrot.slane %v723, 3
    %v779 = vrot.slane %v723, 4
    %v780 = vrot.slane %v723, 5
    %v781 = vrot.slane %v723, 6
    %v782 = vrot.slane %v723, 7
    %v783 = vrot.slane %v725, 1
    %v784 = vrot.slane %v725, 2
    %v785 = vrot.slane %v725, 3
    %v786 = vrot.slane %v725, 4
    %v787 = vrot.slane %v725, 5
    %v788 = vrot.slane %v725, 6
    %v789 = vrot.slane %v725, 7
    %v846 = vmul.f32 %v711, %v400
    %v847 = vmul.f32 %v734, %v402
    %v848 = vmul.f32 %v735, %v404
    %v849 = vmul.f32 %v736, %v406
    %v850 = vmul.f32 %v737, %v408
    %v851 = vmul.f32 %v738, %v410
    %v852 = vmul.f32 %v739, %v412
    %v853 = vmul.f32 %v740, %v414
    %v854 = vmul.f32 %v713, %v400
    %v855 = vmul.f32 %v741, %v402
    %v856 = vmul.f32 %v742, %v404
    %v857 = vmul.f32 %v743, %v406
    %v858 = vmul.f32 %v744, %v408
    %v859 = vmul.f32 %v745, %v410
    %v860 = vmul.f32 %v746, %v412
    %v861 = vmul.f32 %v747, %v414
    %v862 = vmul.f32 %v715, %v400
    %v863 = vmul.f32 %v748, %v402
    %v864 = vmul.f32 %v749, %v404
    %v865 = vmul.f32 %v750, %v406
    %v866 = vmul.f32 %v751, %v408
    %v867 = vmul.f32 %v752, %v410
    %v868 = vmul.f32 %v753, %v412
    %v869 = vmul.f32 %v754, %v414
    %v870 = vmul.f32 %v717, %v400
    %v871 = vmul.f32 %v755, %v402
    %v872 = vmul.f32 %v756, %v404
    %v873 = vmul.f32 %v757, %v406
    %v874 = vmul.f32 %v758, %v408
    %v875 = vmul.f32 %v759, %v410
    %v876 = vmul.f32 %v760, %v412
    %v877 = vmul.f32 %v761, %v414
    %v878 = vmul.f32 %v719, %v400
    %v879 = vmul.f32 %v762, %v402
    %v880 = vmul.f32 %v763, %v404
    %v881 = vmul.f32 %v764, %v406
    %v882 = vmul.f32 %v765, %v408
    %v883 = vmul.f32 %v766, %v410
    %v884 = vmul.f32 %v767, %v412
    %v885 = vmul.f32 %v768, %v414
    %v886 = vmul.f32 %v721, %v400
    %v887 = vmul.f32 %v769, %v402
    %v888 = vmul.f32 %v770, %v404
    %v889 = vmul.f32 %v771, %v406
    %v890 = vmul.f32 %v772, %v408
    %v891 = vmul.f32 %v773, %v410
    %v892 = vmul.f32 %v774, %v412
    %v893 = vmul.f32 %v775, %v414
    %v894 = vmul.f32 %v723, %v400
    %v895 = vmul.f32 %v776, %v402
    %v896 = vmul.f32 %v777, %v404
    %v897 = vmul.f32 %v778, %v406
    %v898 = vmul.f32 %v779, %v408
    %v899 = vmul.f32 %v780, %v410
    %v900 = vmul.f32 %v781, %v412
    %v901 = vmul.f32 %v782, %v414
    %v902 = vmul.f32 %v725, %v400
    %v903 = vmul.f32 %v783, %v402
    %v904 = vmul.f32 %v784, %v404
    %v905 = vmul.f32 %v785, %v406
    %v906 = vmul.f32 %v786, %v408
    %v907 = vmul.f32 %v787, %v410
    %v908 = vmul.f32 %v788, %v412
    %v909 = vmul.f32 %v789, %v414
    %vm910 = vcmask 1040384
    %v911 = vsel %vm910, %v846, 0.0
    %v912 = vsel %vm910, %v847, 0.0
    %v913 = vadd.f32 %v911, %v912
    %v914 = vsel %vm910, %v848, 0.0
    %v915 = vadd.f32 %v913, %v914
    %v916 = vsel %vm910, %v849, 0.0
    %v917 = vadd.f32 %v915, %v916
    %v918 = vsel %vm910, %v850, 0.0
    %v919 = vadd.f32 %v917, %v918
    %v920 = vsel %vm910, %v851, 0.0
    %v921 = vadd.f32 %v919, %v920
    %v922 = vsel %vm910, %v852, 0.0
    %v923 = vadd.f32 %v921, %v922
    %v924 = vsel %vm910, %v853, 0.0
    %v925 = vadd.f32 %v923, %v924
    %v926 = vsel %vm910, %v854, 0.0
    %v927 = vsel %vm910, %v855, 0.0
    %v928 = vadd.f32 %v926, %v927
    %v929 = vsel %vm910, %v856, 0.0
    %v930 = vadd.f32 %v928, %v929
    %v931 = vsel %vm910, %v857, 0.0
    %v932 = vadd.f32 %v930, %v931
    %v933 = vsel %vm910, %v858, 0.0
    %v934 = vadd.f32 %v932, %v933
    %v935 = vsel %vm910, %v859, 0.0
    %v936 = vadd.f32 %v934, %v935
    %v937 = vsel %vm910, %v860, 0.0
    %v938 = vadd.f32 %v936, %v937
    %v939 = vsel %vm910, %v861, 0.0
    %v940 = vadd.f32 %v938, %v939
    %v941 = vsel %vm910, %v862, 0.0
    %v942 = vsel %vm910, %v863, 0.0
    %v943 = vadd.f32 %v941, %v942
    %v944 = vsel %vm910, %v864, 0.0
    %v945 = vadd.f32 %v943, %v944
    %v946 = vsel %vm910, %v865, 0.0
    %v947 = vadd.f32 %v945, %v946
    %v948 = vsel %vm910, %v866, 0.0
    %v949 = vadd.f32 %v947, %v948
    %v950 = vsel %vm910, %v867, 0.0
    %v951 = vadd.f32 %v949, %v950
    %v952 = vsel %vm910, %v868, 0.0
    %v953 = vadd.f32 %v951, %v952
    %v954 = vsel %vm910, %v869, 0.0
    %v955 = vadd.f32 %v953, %v954
    %v956 = vsel %vm910, %v870, 0.0
    %v957 = vsel %vm910, %v871, 0.0
    %v958 = vadd.f32 %v956, %v957
    %v959 = vsel %vm910, %v872, 0.0
    %v960 = vadd.f32 %v958, %v959
    %v961 = vsel %vm910, %v873, 0.0
    %v962 = vadd.f32 %v960, %v961
    %v963 = vsel %vm910, %v874, 0.0
    %v964 = vadd.f32 %v962, %v963
    %v965 = vsel %vm910, %v875, 0.0
    %v966 = vadd.f32 %v964, %v965
    %v967 = vsel %vm910, %v876, 0.0
    %v968 = vadd.f32 %v966, %v967
    %v969 = vsel %vm910, %v877, 0.0
    %v970 = vadd.f32 %v968, %v969
    %v971 = vsel %vm910, %v878, 0.0
    %v972 = vsel %vm910, %v879, 0.0
    %v973 = vadd.f32 %v971, %v972
    %v974 = vsel %vm910, %v880, 0.0
    %v975 = vadd.f32 %v973, %v974
    %v976 = vsel %vm910, %v881, 0.0
    %v977 = vadd.f32 %v975, %v976
    %v978 = vsel %vm910, %v882, 0.0
    %v979 = vadd.f32 %v977, %v978
    %v980 = vsel %vm910, %v883, 0.0
    %v981 = vadd.f32 %v979, %v980
    %v982 = vsel %vm910, %v884, 0.0
    %v983 = vadd.f32 %v981, %v982
    %v984 = vsel %vm910, %v885, 0.0
    %v985 = vadd.f32 %v983, %v984
    %v986 = vsel %vm910, %v886, 0.0
    %v987 = vsel %vm910, %v887, 0.0
    %v988 = vadd.f32 %v986, %v987
    %v989 = vsel %vm910, %v888, 0.0
    %v990 = vadd.f32 %v988, %v989
    %v991 = vsel %vm910, %v889, 0.0
    %v992 = vadd.f32 %v990, %v991
    %v993 = vsel %vm910, %v890, 0.0
    %v994 = vadd.f32 %v992, %v993
    %v995 = vsel %vm910, %v891, 0.0
    %v996 = vadd.f32 %v994, %v995
    %v997 = vsel %vm910, %v892, 0.0
    %v998 = vadd.f32 %v996, %v997
    %v999 = vsel %vm910, %v893, 0.0
    %v1000 = vadd.f32 %v998, %v999
    %v1001 = vsel %vm910, %v894, 0.0
    %v1002 = vsel %vm910, %v895, 0.0
    %v1003 = vadd.f32 %v1001, %v1002
    %v1004 = vsel %vm910, %v896, 0.0
    %v1005 = vadd.f32 %v1003, %v1004
    %v1006 = vsel %vm910, %v897, 0.0
    %v1007 = vadd.f32 %v1005, %v1006
    %v1008 = vsel %vm910, %v898, 0.0
    %v1009 = vadd.f32 %v1007, %v1008
    %v1010 = vsel %vm910, %v899, 0.0
    %v1011 = vadd.f32 %v1009, %v1010
    %v1012 = vsel %vm910, %v900, 0.0
    %v1013 = vadd.f32 %v1011, %v1012
    %v1014 = vsel %vm910, %v901, 0.0
    %v1015 = vadd.f32 %v1013, %v1014
    %v1016 = vsel %vm910, %v902, 0.0
    %v1017 = vsel %vm910, %v903, 0.0
    %v1018 = vadd.f32 %v1016, %v1017
    %v1019 = vsel %vm910, %v904, 0.0
    %v1020 = vadd.f32 %v1018, %v1019
    %v1021 = vsel %vm910, %v905, 0.0
    %v1022 = vadd.f32 %v1020, %v1021
    %v1023 = vsel %vm910, %v906, 0.0
    %v1024 = vadd.f32 %v1022, %v1023
    %v1025 = vsel %vm910, %v907, 0.0
    %v1026 = vadd.f32 %v1024, %v1025
    %v1027 = vsel %vm910, %v908, 0.0
    %v1028 = vadd.f32 %v1026, %v1027
    %v1029 = vsel %vm910, %v909, 0.0
    %v1030 = vadd.f32 %v1028, %v1029
    %v1031 = vlog2.pop %v925
    %v1032 = vmul.f32 %v1031, 0.6931472
    %v1033 = vlog2.pop %v940
    %v1034 = vmul.f32 %v1033, 0.6931472
    %v1035 = vlog2.pop %v955
    %v1036 = vmul.f32 %v1035, 0.6931472
    %v1037 = vlog2.pop %v970
    %v1038 = vmul.f32 %v1037, 0.6931472
    %v1039 = vlog2.pop %v985
    %v1040 = vmul.f32 %v1039, 0.6931472
    %v1041 = vlog2.pop %v1000
    %v1042 = vmul.f32 %v1041, 0.6931472
    %v1043 = vlog2.pop %v1015
    %v1044 = vmul.f32 %v1043, 0.6931472
    %v1045 = vlog2.pop %v1030
    %v1046 = vmul.f32 %v1045, 0.6931472
    %v1047 = vadd.f32 %v1032, %v659
    %v1048 = vadd.f32 %v1034, %v665
    %v1049 = vadd.f32 %v1036, %v671
    %v1050 = vadd.f32 %v1038, %v677
    %v1051 = vadd.f32 %v1040, %v683
    %v1052 = vadd.f32 %v1042, %v689
    %v1053 = vadd.f32 %v1044, %v695
    %v1054 = vadd.f32 %v1046, %v701
    %v1055 = vadd.f32 %v1047, -1.0000005e-06
    %v1056 = vadd.f32 %v1048, -1.0000005e-06
    %v1057 = vadd.f32 %v1049, -1.0000005e-06
    %v1058 = vadd.f32 %v1050, -1.0000005e-06
    %v1059 = vadd.f32 %v1051, -1.0000005e-06
    %v1060 = vadd.f32 %v1052, -1.0000005e-06
    %v1061 = vadd.f32 %v1053, -1.0000005e-06
    %v1062 = vadd.f32 %v1054, -1.0000005e-06
    %v1063 = vadd.f32 %v581, %v621
    %v1064 = vadd.f32 %v582, %v622
    %v1065 = vadd.f32 %v583, %v623
    %v1066 = vadd.f32 %v584, %v624
    %v1067 = vadd.f32 %v585, %v625
    %v1068 = vadd.f32 %v586, %v626
    %v1069 = vadd.f32 %v587, %v627
    %v1070 = vadd.f32 %v588, %v628
    %v1071 = vsub.f32 %v1055, %v1063
    %v1072 = vsub.f32 %v1056, %v1064
    %v1073 = vsub.f32 %v1057, %v1065
    %v1074 = vsub.f32 %v1058, %v1066
    %v1075 = vsub.f32 %v1059, %v1067
    %v1076 = vsub.f32 %v1060, %v1068
    %v1077 = vsub.f32 %v1061, %v1069
    %v1078 = vsub.f32 %v1062, %v1070
    %v1079 = vadd.f32 %v1071, 0.0
    %v1080 = vadd.f32 %v1072, 0.0
    %v1081 = vadd.f32 %v1073, 0.0
    %v1082 = vadd.f32 %v1074, 0.0
    %v1083 = vadd.f32 %v1075, 0.0
    %v1084 = vadd.f32 %v1076, 0.0
    %v1085 = vadd.f32 %v1077, 0.0
    %v1086 = vadd.f32 %v1078, 0.0
    %v1087 = vsub.f32 %v1079, %v1079
    %v1088 = vsub.f32 %v1080, %v1080
    %v1089 = vsub.f32 %v1081, %v1081
    %v1090 = vsub.f32 %v1082, %v1082
    %v1091 = vsub.f32 %v1083, %v1083
    %v1092 = vsub.f32 %v1084, %v1084
    %v1093 = vsub.f32 %v1085, %v1085
    %v1094 = vsub.f32 %v1086, %v1086
    %v1095 = vmul.f32 %v1087, 1.442695
    %v1096 = vpow.pop %v1095
    %v1097 = vmul.f32 %v1088, 1.442695
    %v1098 = vpow.pop %v1097
    %v1099 = vmul.f32 %v1089, 1.442695
    %v1100 = vpow.pop %v1099
    %v1101 = vmul.f32 %v1090, 1.442695
    %v1102 = vpow.pop %v1101
    %v1103 = vmul.f32 %v1091, 1.442695
    %v1104 = vpow.pop %v1103
    %v1105 = vmul.f32 %v1092, 1.442695
    %v1106 = vpow.pop %v1105
    %v1107 = vmul.f32 %v1093, 1.442695
    %v1108 = vpow.pop %v1107
    %v1109 = vmul.f32 %v1094, 1.442695
    %v1110 = vpow.pop %v1109
    %v1111 = vadd.f32 %v1096, 0.0
    %v1112 = vadd.f32 %v1098, 0.0
    %v1113 = vadd.f32 %v1100, 0.0
    %v1114 = vadd.f32 %v1102, 0.0
    %v1115 = vadd.f32 %v1104, 0.0
    %v1116 = vadd.f32 %v1106, 0.0
    %v1117 = vadd.f32 %v1108, 0.0
    %v1118 = vadd.f32 %v1110, 0.0
    %v1119 = vlog2.pop %v1111
    %v1120 = vmul.f32 %v1119, 0.6931472
    %v1121 = vlog2.pop %v1112
    %v1122 = vmul.f32 %v1121, 0.6931472
    %v1123 = vlog2.pop %v1113
    %v1124 = vmul.f32 %v1123, 0.6931472
    %v1125 = vlog2.pop %v1114
    %v1126 = vmul.f32 %v1125, 0.6931472
    %v1127 = vlog2.pop %v1115
    %v1128 = vmul.f32 %v1127, 0.6931472
    %v1129 = vlog2.pop %v1116
    %v1130 = vmul.f32 %v1129, 0.6931472
    %v1131 = vlog2.pop %v1117
    %v1132 = vmul.f32 %v1131, 0.6931472
    %v1133 = vlog2.pop %v1118
    %v1134 = vmul.f32 %v1133, 0.6931472
    %v1135 = vadd.f32 %v1120, %v1079
    %v1136 = vadd.f32 %v1122, %v1080
    %v1137 = vadd.f32 %v1124, %v1081
    %v1138 = vadd.f32 %v1126, %v1082
    %v1139 = vadd.f32 %v1128, %v1083
    %v1140 = vadd.f32 %v1130, %v1084
    %v1141 = vadd.f32 %v1132, %v1085
    %v1142 = vadd.f32 %v1134, %v1086
    %v1143 = vld [vmem:[%s4] sm:$0xff]
    %v1144 = vld [vmem:[%s4 + $0x8] sm:$0xff]
    %v1145 = vld [vmem:[%s4 + $0x10] sm:$0xff]
    %v1146 = vld [vmem:[%s4 + $0x18] sm:$0xff]
    %v1147 = vld [vmem:[%s5] sm:$0xff]
    %v1148 = vld [vmem:[%s5 + $0x8] sm:$0xff]
    %v1149 = vld [vmem:[%s5 + $0x10] sm:$0xff]
    %v1150 = vld [vmem:[%s5 + $0x18] sm:$0xff]
    %v1151 = vld [vmem:[%s5 + $0x20] sm:$0xff]
    %v1152 = vld [vmem:[%s5 + $0x28] sm:$0xff]
    %v1153 = vld [vmem:[%s5 + $0x30] sm:$0xff]
    %v1154 = vld [vmem:[%s5 + $0x38] sm:$0xff]
    %v1155 = vld [vmem:[%s6] sm:$0xff]
    %v1156 = vld [vmem:[%s6 + $0x8] sm:$0xff]
    %v1157 = vld [vmem:[%s6 + $0x10] sm:$0xff]
    %v1158 = vld [vmem:[%s6 + $0x18] sm:$0xff]
    %v1159 = vld [vmem:[%s6 + $0x20] sm:$0xff]
    %v1160 = vld [vmem:[%s6 + $0x28] sm:$0xff]
    %v1161 = vld [vmem:[%s6 + $0x30] sm:$0xff]
    %v1162 = vld [vmem:[%s6 + $0x38] sm:$0xff]
    %v1163 = vadd.f32 %v1143, 0.54132324
    %v1164 = vmax.f32 %v1163, 0.0
    %vm1165 = vcmp.ne.f32.partialorder %v1163, %v1163
    %v1166 = vadd.f32 %v1163, 0.0
    %v1167 = vand.u32 2147483647, %v1163
    %v1168 = vsub.f32 0.0, %v1167
    %v1169 = vmul.f32 %v1168, 1.442695
    %v1170 = vpow.pop %v1169
    %v1171 = vadd.f32 %v1170, 1.0
    %v1172 = vlog2.pop %v1171
    %v1173 = vmul.f32 %v1172, 0.6931472
    %v1174 = vmul.f32 -0.5, %v1170
    %v1175 = vadd.f32 %v1174, 1.0
    %v1176 = vmul.f32 %v1175, %v1170
    %v1177 = vand.u32 2147483647, %v1170
    %vm1178 = vcmp.lt.f32.partialorder %v1177, 0.0004427343
    %v1179 = vsel %vm1178, %v1176, %v1173
    %v1180 = vadd.f32 %v1164, %v1179
    %v1181 = vsel %vm1165, %v1166, %v1180
    %1183 = vset.pattern.permute.xlu0 0
    %1184 = vperm.xlu0 %1183, %v1155
    %v1185 = vpop.permute.xlu0 %1184
    %1188 = vset.pattern.permute.xlu0 0
    %1189 = vperm.xlu0 %1188, %v1156
    %v1190 = vpop.permute.xlu0 %1189
    %1193 = vset.pattern.permute.xlu0 0
    %1194 = vperm.xlu0 %1193, %v1157
    %v1195 = vpop.permute.xlu0 %1194
    %1198 = vset.pattern.permute.xlu0 0
    %1199 = vperm.xlu0 %1198, %v1158
    %v1200 = vpop.permute.xlu0 %1199
    %1203 = vset.pattern.permute.xlu0 0
    %1204 = vperm.xlu0 %1203, %v1159
    %v1205 = vpop.permute.xlu0 %1204
    %1208 = vset.pattern.permute.xlu0 0
    %1209 = vperm.xlu0 %1208, %v1160
    %v1210 = vpop.permute.xlu0 %1209
    %1213 = vset.pattern.permute.xlu0 0
    %1214 = vperm.xlu0 %1213, %v1161
    %v1215 = vpop.permute.xlu0 %1214
    %1218 = vset.pattern.permute.xlu0 0
    %1219 = vperm.xlu0 %1218, %v1162
    %v1220 = vpop.permute.xlu0 %1219
    %v1222 = vadd.f32 %v1185, %v1145
    %v1223 = vadd.f32 %v1190, %v1145
    %v1224 = vadd.f32 %v1195, %v1145
    %v1225 = vadd.f32 %v1200, %v1145
    %v1226 = vadd.f32 %v1205, %v1145
    %v1227 = vadd.f32 %v1210, %v1145
    %v1228 = vadd.f32 %v1215, %v1145
    %v1229 = vadd.f32 %v1220, %v1145
    %1231 = vset.pattern.permute.xlu0 0
    %1232 = vperm.xlu0 %1231, %v1147
    %v1233 = vpop.permute.xlu0 %1232
    %1236 = vset.pattern.permute.xlu0 0
    %1237 = vperm.xlu0 %1236, %v1148
    %v1238 = vpop.permute.xlu0 %1237
    %1241 = vset.pattern.permute.xlu0 0
    %1242 = vperm.xlu0 %1241, %v1149
    %v1243 = vpop.permute.xlu0 %1242
    %1246 = vset.pattern.permute.xlu0 0
    %1247 = vperm.xlu0 %1246, %v1150
    %v1248 = vpop.permute.xlu0 %1247
    %1251 = vset.pattern.permute.xlu0 0
    %1252 = vperm.xlu0 %1251, %v1151
    %v1253 = vpop.permute.xlu0 %1252
    %1256 = vset.pattern.permute.xlu0 0
    %1257 = vperm.xlu0 %1256, %v1152
    %v1258 = vpop.permute.xlu0 %1257
    %1261 = vset.pattern.permute.xlu0 0
    %1262 = vperm.xlu0 %1261, %v1153
    %v1263 = vpop.permute.xlu0 %1262
    %1266 = vset.pattern.permute.xlu0 0
    %1267 = vperm.xlu0 %1266, %v1154
    %v1268 = vpop.permute.xlu0 %1267
    %v1270 = vadd.f32 %v1233, %v1146
    %v1271 = vadd.f32 %v1238, %v1146
    %v1272 = vadd.f32 %v1243, %v1146
    %v1273 = vadd.f32 %v1248, %v1146
    %v1274 = vadd.f32 %v1253, %v1146
    %v1275 = vadd.f32 %v1258, %v1146
    %v1276 = vadd.f32 %v1263, %v1146
    %v1277 = vadd.f32 %v1268, %v1146
    %v1278 = vrot.slane %v1222, 4
    %v1279 = vmax.f32 %v1222, %v1278
    %v1280 = vrot.slane %v1279, 2
    %v1281 = vmax.f32 %v1279, %v1280
    %v1282 = vrot.slane %v1281, 1
    %v1283 = vmax.f32 %v1281, %v1282
    %v1284 = vrot.slane %v1223, 4
    %v1285 = vmax.f32 %v1223, %v1284
    %v1286 = vrot.slane %v1285, 2
    %v1287 = vmax.f32 %v1285, %v1286
    %v1288 = vrot.slane %v1287, 1
    %v1289 = vmax.f32 %v1287, %v1288
    %v1290 = vrot.slane %v1224, 4
    %v1291 = vmax.f32 %v1224, %v1290
    %v1292 = vrot.slane %v1291, 2
    %v1293 = vmax.f32 %v1291, %v1292
    %v1294 = vrot.slane %v1293, 1
    %v1295 = vmax.f32 %v1293, %v1294
    %v1296 = vrot.slane %v1225, 4
    %v1297 = vmax.f32 %v1225, %v1296
    %v1298 = vrot.slane %v1297, 2
    %v1299 = vmax.f32 %v1297, %v1298
    %v1300 = vrot.slane %v1299, 1
    %v1301 = vmax.f32 %v1299, %v1300
    %v1302 = vrot.slane %v1226, 4
    %v1303 = vmax.f32 %v1226, %v1302
    %v1304 = vrot.slane %v1303, 2
    %v1305 = vmax.f32 %v1303, %v1304
    %v1306 = vrot.slane %v1305, 1
    %v1307 = vmax.f32 %v1305, %v1306
    %v1308 = vrot.slane %v1227, 4
    %v1309 = vmax.f32 %v1227, %v1308
    %v1310 = vrot.slane %v1309, 2
    %v1311 = vmax.f32 %v1309, %v1310
    %v1312 = vrot.slane %v1311, 1
    %v1313 = vmax.f32 %v1311, %v1312
    %v1314 = vrot.slane %v1228, 4
    %v1315 = vmax.f32 %v1228, %v1314
    %v1316 = vrot.slane %v1315, 2
    %v1317 = vmax.f32 %v1315, %v1316
    %v1318 = vrot.slane %v1317, 1
    %v1319 = vmax.f32 %v1317, %v1318
    %v1320 = vrot.slane %v1229, 4
    %v1321 = vmax.f32 %v1229, %v1320
    %v1322 = vrot.slane %v1321, 2
    %v1323 = vmax.f32 %v1321, %v1322
    %v1324 = vrot.slane %v1323, 1
    %v1325 = vmax.f32 %v1323, %v1324
    %v1326 = vsub.f32 %v1222, %v1283
    %v1327 = vsub.f32 %v1223, %v1289
    %v1328 = vsub.f32 %v1224, %v1295
    %v1329 = vsub.f32 %v1225, %v1301
    %v1330 = vsub.f32 %v1226, %v1307
    %v1331 = vsub.f32 %v1227, %v1313
    %v1332 = vsub.f32 %v1228, %v1319
    %v1333 = vsub.f32 %v1229, %v1325
    %v1334 = vmul.f32 %v1326, 1.442695
    %v1335 = vpow.pop %v1334
    %v1336 = vmul.f32 %v1327, 1.442695
    %v1337 = vpow.pop %v1336
    %v1338 = vmul.f32 %v1328, 1.442695
    %v1339 = vpow.pop %v1338
    %v1340 = vmul.f32 %v1329, 1.442695
    %v1341 = vpow.pop %v1340
    %v1342 = vmul.f32 %v1330, 1.442695
    %v1343 = vpow.pop %v1342
    %v1344 = vmul.f32 %v1331, 1.442695
    %v1345 = vpow.pop %v1344
    %v1346 = vmul.f32 %v1332, 1.442695
    %v1347 = vpow.pop %v1346
    %v1348 = vmul.f32 %v1333, 1.442695
    %v1349 = vpow.pop %v1348
    %v1350 = vrot.slane %v1335, 4
    %v1351 = vadd.f32 %v1335, %v1350
    %v1352 = vrot.slane %v1351, 2
    %v1353 = vadd.f32 %v1351, %v1352
    %v1354 = vrot.slane %v1353, 1
    %v1355 = vadd.f32 %v1353, %v1354
    %v1356 = vrot.slane %v1337, 4
    %v1357 = vadd.f32 %v1337, %v1356
    %v1358 = vrot.slane %v1357, 2
    %v1359 = vadd.f32 %v1357, %v1358
    %v1360 = vrot.slane %v1359, 1
    %v1361 = vadd.f32 %v1359, %v1360
    %v1362 = vrot.slane %v1339, 4
    %v1363 = vadd.f32 %v1339, %v1362
    %v1364 = vrot.slane %v1363, 2
    %v1365 = vadd.f32 %v1363, %v1364
    %v1366 = vrot.slane %v1365, 1
    %v1367 = vadd.f32 %v1365, %v1366
    %v1368 = vrot.slane %v1341, 4
    %v1369 = vadd.f32 %v1341, %v1368
    %v1370 = vrot.slane %v1369, 2
    %v1371 = vadd.f32 %v1369, %v1370
    %v1372 = vrot.slane %v1371, 1
    %v1373 = vadd.f32 %v1371, %v1372
    %v1374 = vrot.slane %v1343, 4
    %v1375 = vadd.f32 %v1343, %v1374
    %v1376 = vrot.slane %v1375, 2
    %v1377 = vadd.f32 %v1375, %v1376
    %v1378 = vrot.slane %v1377, 1
    %v1379 = vadd.f32 %v1377, %v1378
    %v1380 = vrot.slane %v1345, 4
    %v1381 = vadd.f32 %v1345, %v1380
    %v1382 = vrot.slane %v1381, 2
    %v1383 = vadd.f32 %v1381, %v1382
    %v1384 = vrot.slane %v1383, 1
    %v1385 = vadd.f32 %v1383, %v1384
    %v1386 = vrot.slane %v1347, 4
    %v1387 = vadd.f32 %v1347, %v1386
    %v1388 = vrot.slane %v1387, 2
    %v1389 = vadd.f32 %v1387, %v1388
    %v1390 = vrot.slane %v1389, 1
    %v1391 = vadd.f32 %v1389, %v1390
    %v1392 = vrot.slane %v1349, 4
    %v1393 = vadd.f32 %v1349, %v1392
    %v1394 = vrot.slane %v1393, 2
    %v1395 = vadd.f32 %v1393, %v1394
    %v1396 = vrot.slane %v1395, 1
    %v1397 = vadd.f32 %v1395, %v1396
    %v1398 = vlog2.pop %v1355
    %v1399 = vmul.f32 %v1398, 0.6931472
    %v1400 = vlog2.pop %v1361
    %v1401 = vmul.f32 %v1400, 0.6931472
    %v1402 = vlog2.pop %v1367
    %v1403 = vmul.f32 %v1402, 0.6931472
    %v1404 = vlog2.pop %v1373
    %v1405 = vmul.f32 %v1404, 0.6931472
    %v1406 = vlog2.pop %v1379
    %v1407 = vmul.f32 %v1406, 0.6931472
    %v1408 = vlog2.pop %v1385
    %v1409 = vmul.f32 %v1408, 0.6931472
    %v1410 = vlog2.pop %v1391
    %v1411 = vmul.f32 %v1410, 0.6931472
    %v1412 = vlog2.pop %v1397
    %v1413 = vmul.f32 %v1412, 0.6931472
    %v1414 = vsub.f32 %v1326, %v1399
    %v1415 = vsub.f32 %v1327, %v1401
    %v1416 = vsub.f32 %v1328, %v1403
    %v1417 = vsub.f32 %v1329, %v1405
    %v1418 = vsub.f32 %v1330, %v1407
    %v1419 = vsub.f32 %v1331, %v1409
    %v1420 = vsub.f32 %v1332, %v1411
    %v1421 = vsub.f32 %v1333, %v1413
    %v1422 = vrot.slane %v1270, 4
    %v1423 = vmax.f32 %v1270, %v1422
    %v1424 = vrot.slane %v1423, 2
    %v1425 = vmax.f32 %v1423, %v1424
    %v1426 = vrot.slane %v1425, 1
    %v1427 = vmax.f32 %v1425, %v1426
    %v1428 = vrot.slane %v1271, 4
    %v1429 = vmax.f32 %v1271, %v1428
    %v1430 = vrot.slane %v1429, 2
    %v1431 = vmax.f32 %v1429, %v1430
    %v1432 = vrot.slane %v1431, 1
    %v1433 = vmax.f32 %v1431, %v1432
    %v1434 = vrot.slane %v1272, 4
    %v1435 = vmax.f32 %v1272, %v1434
    %v1436 = vrot.slane %v1435, 2
    %v1437 = vmax.f32 %v1435, %v1436
    %v1438 = vrot.slane %v1437, 1
    %v1439 = vmax.f32 %v1437, %v1438
    %v1440 = vrot.slane %v1273, 4
    %v1441 = vmax.f32 %v1273, %v1440
    %v1442 = vrot.slane %v1441, 2
    %v1443 = vmax.f32 %v1441, %v1442
    %v1444 = vrot.slane %v1443, 1
    %v1445 = vmax.f32 %v1443, %v1444
    %v1446 = vrot.slane %v1274, 4
    %v1447 = vmax.f32 %v1274, %v1446
    %v1448 = vrot.slane %v1447, 2
    %v1449 = vmax.f32 %v1447, %v1448
    %v1450 = vrot.slane %v1449, 1
    %v1451 = vmax.f32 %v1449, %v1450
    %v1452 = vrot.slane %v1275, 4
    %v1453 = vmax.f32 %v1275, %v1452
    %v1454 = vrot.slane %v1453, 2
    %v1455 = vmax.f32 %v1453, %v1454
    %v1456 = vrot.slane %v1455, 1
    %v1457 = vmax.f32 %v1455, %v1456
    %v1458 = vrot.slane %v1276, 4
    %v1459 = vmax.f32 %v1276, %v1458
    %v1460 = vrot.slane %v1459, 2
    %v1461 = vmax.f32 %v1459, %v1460
    %v1462 = vrot.slane %v1461, 1
    %v1463 = vmax.f32 %v1461, %v1462
    %v1464 = vrot.slane %v1277, 4
    %v1465 = vmax.f32 %v1277, %v1464
    %v1466 = vrot.slane %v1465, 2
    %v1467 = vmax.f32 %v1465, %v1466
    %v1468 = vrot.slane %v1467, 1
    %v1469 = vmax.f32 %v1467, %v1468
    %v1470 = vsub.f32 %v1270, %v1427
    %v1471 = vsub.f32 %v1271, %v1433
    %v1472 = vsub.f32 %v1272, %v1439
    %v1473 = vsub.f32 %v1273, %v1445
    %v1474 = vsub.f32 %v1274, %v1451
    %v1475 = vsub.f32 %v1275, %v1457
    %v1476 = vsub.f32 %v1276, %v1463
    %v1477 = vsub.f32 %v1277, %v1469
    %v1478 = vmul.f32 %v1470, 1.442695
    %v1479 = vpow.pop %v1478
    %v1480 = vmul.f32 %v1471, 1.442695
    %v1481 = vpow.pop %v1480
    %v1482 = vmul.f32 %v1472, 1.442695
    %v1483 = vpow.pop %v1482
    %v1484 = vmul.f32 %v1473, 1.442695
    %v1485 = vpow.pop %v1484
    %v1486 = vmul.f32 %v1474, 1.442695
    %v1487 = vpow.pop %v1486
    %v1488 = vmul.f32 %v1475, 1.442695
    %v1489 = vpow.pop %v1488
    %v1490 = vmul.f32 %v1476, 1.442695
    %v1491 = vpow.pop %v1490
    %v1492 = vmul.f32 %v1477, 1.442695
    %v1493 = vpow.pop %v1492
    %v1494 = vrot.slane %v1479, 4
    %v1495 = vadd.f32 %v1479, %v1494
    %v1496 = vrot.slane %v1495, 2
    %v1497 = vadd.f32 %v1495, %v1496
    %v1498 = vrot.slane %v1497, 1
    %v1499 = vadd.f32 %v1497, %v1498
    %v1500 = vrot.slane %v1481, 4
    %v1501 = vadd.f32 %v1481, %v1500
    %v1502 = vrot.slane %v1501, 2
    %v1503 = vadd.f32 %v1501, %v1502
    %v1504 = vrot.slane %v1503, 1
    %v1505 = vadd.f32 %v1503, %v1504
    %v1506 = vrot.slane %v1483, 4
    %v1507 = vadd.f32 %v1483, %v1506
    %v1508 = vrot.slane %v1507, 2
    %v1509 = vadd.f32 %v1507, %v1508
    %v1510 = vrot.slane %v1509, 1
    %v1511 = vadd.f32 %v1509, %v1510
    %v1512 = vrot.slane %v1485, 4
    %v1513 = vadd.f32 %v1485, %v1512
    %v1514 = vrot.slane %v1513, 2
    %v1515 = vadd.f32 %v1513, %v1514
    %v1516 = vrot.slane %v1515, 1
    %v1517 = vadd.f32 %v1515, %v1516
    %v1518 = vrot.slane %v1487, 4
    %v1519 = vadd.f32 %v1487, %v1518
    %v1520 = vrot.slane %v1519, 2
    %v1521 = vadd.f32 %v1519, %v1520
    %v1522 = vrot.slane %v1521, 1
    %v1523 = vadd.f32 %v1521, %v1522
    %v1524 = vrot.slane %v1489, 4
    %v1525 = vadd.f32 %v1489, %v1524
    %v1526 = vrot.slane %v1525, 2
    %v1527 = vadd.f32 %v1525, %v1526
    %v1528 = vrot.slane %v1527, 1
    %v1529 = vadd.f32 %v1527, %v1528
    %v1530 = vrot.slane %v1491, 4
    %v1531 = vadd.f32 %v1491, %v1530
    %v1532 = vrot.slane %v1531, 2
    %v1533 = vadd.f32 %v1531, %v1532
    %v1534 = vrot.slane %v1533, 1
    %v1535 = vadd.f32 %v1533, %v1534
    %v1536 = vrot.slane %v1493, 4
    %v1537 = vadd.f32 %v1493, %v1536
    %v1538 = vrot.slane %v1537, 2
    %v1539 = vadd.f32 %v1537, %v1538
    %v1540 = vrot.slane %v1539, 1
    %v1541 = vadd.f32 %v1539, %v1540
    %v1542 = vlog2.pop %v1499
    %v1543 = vmul.f32 %v1542, 0.6931472
    %v1544 = vlog2.pop %v1505
    %v1545 = vmul.f32 %v1544, 0.6931472
    %v1546 = vlog2.pop %v1511
    %v1547 = vmul.f32 %v1546, 0.6931472
    %v1548 = vlog2.pop %v1517
    %v1549 = vmul.f32 %v1548, 0.6931472
    %v1550 = vlog2.pop %v1523
    %v1551 = vmul.f32 %v1550, 0.6931472
    %v1552 = vlog2.pop %v1529
    %v1553 = vmul.f32 %v1552, 0.6931472
    %v1554 = vlog2.pop %v1535
    %v1555 = vmul.f32 %v1554, 0.6931472
    %v1556 = vlog2.pop %v1541
    %v1557 = vmul.f32 %v1556, 0.6931472
    %v1558 = vsub.f32 %v1470, %v1543
    %v1559 = vsub.f32 %v1471, %v1545
    %v1560 = vsub.f32 %v1472, %v1547
    %v1561 = vsub.f32 %v1473, %v1549
    %v1562 = vsub.f32 %v1474, %v1551
    %v1563 = vsub.f32 %v1475, %v1553
    %v1564 = vsub.f32 %v1476, %v1555
    %v1565 = vsub.f32 %v1477, %v1557
    %v1566 = vmul.f32 %v1414, 1.442695
    %v1567 = vpow.pop %v1566
    %v1568 = vmul.f32 %v1415, 1.442695
    %v1569 = vpow.pop %v1568
    %v1570 = vmul.f32 %v1416, 1.442695
    %v1571 = vpow.pop %v1570
    %v1572 = vmul.f32 %v1417, 1.442695
    %v1573 = vpow.pop %v1572
    %v1574 = vmul.f32 %v1418, 1.442695
    %v1575 = vpow.pop %v1574
    %v1576 = vmul.f32 %v1419, 1.442695
    %v1577 = vpow.pop %v1576
    %v1578 = vmul.f32 %v1420, 1.442695
    %v1579 = vpow.pop %v1578
    %v1580 = vmul.f32 %v1421, 1.442695
    %v1581 = vpow.pop %v1580
    %v1582 = vmul.f32 %v1558, 1.442695
    %v1583 = vpow.pop %v1582
    %v1584 = vmul.f32 %v1559, 1.442695
    %v1585 = vpow.pop %v1584
    %v1586 = vmul.f32 %v1560, 1.442695
    %v1587 = vpow.pop %v1586
    %v1588 = vmul.f32 %v1561, 1.442695
    %v1589 = vpow.pop %v1588
    %v1590 = vmul.f32 %v1562, 1.442695
    %v1591 = vpow.pop %v1590
    %v1592 = vmul.f32 %v1563, 1.442695
    %v1593 = vpow.pop %v1592
    %v1594 = vmul.f32 %v1564, 1.442695
    %v1595 = vpow.pop %v1594
    %v1596 = vmul.f32 %v1565, 1.442695
    %v1597 = vpow.pop %v1596
    %v1606 = vsel %vm440, %v630, %v629
    %v1607 = vsel %vm443, %v631, %v1606
    %v1608 = vsel %vm446, %v632, %v1607
    %v1609 = vsel %vm449, %v633, %v1608
    %v1610 = vsel %vm452, %v634, %v1609
    %v1611 = vsel %vm455, %v635, %v1610
    %v1612 = vsel %vm458, %v636, %v1611
    %v1614 = vmul.f32 %v1583, %v1612
    %v1615 = vmul.f32 %v1585, %v1612
    %v1616 = vmul.f32 %v1587, %v1612
    %v1617 = vmul.f32 %v1589, %v1612
    %v1618 = vmul.f32 %v1591, %v1612
    %v1619 = vmul.f32 %v1593, %v1612
    %v1620 = vmul.f32 %v1595, %v1612
    %v1621 = vmul.f32 %v1597, %v1612
    %v1622 = vrot.slane %v1614, 4
    %v1623 = vadd.f32 %v1614, %v1622
    %v1624 = vrot.slane %v1623, 2
    %v1625 = vadd.f32 %v1623, %v1624
    %v1626 = vrot.slane %v1625, 1
    %v1627 = vadd.f32 %v1625, %v1626
    %v1628 = vrot.slane %v1615, 4
    %v1629 = vadd.f32 %v1615, %v1628
    %v1630 = vrot.slane %v1629, 2
    %v1631 = vadd.f32 %v1629, %v1630
    %v1632 = vrot.slane %v1631, 1
    %v1633 = vadd.f32 %v1631, %v1632
    %v1634 = vrot.slane %v1616, 4
    %v1635 = vadd.f32 %v1616, %v1634
    %v1636 = vrot.slane %v1635, 2
    %v1637 = vadd.f32 %v1635, %v1636
    %v1638 = vrot.slane %v1637, 1
    %v1639 = vadd.f32 %v1637, %v1638
    %v1640 = vrot.slane %v1617, 4
    %v1641 = vadd.f32 %v1617, %v1640
    %v1642 = vrot.slane %v1641, 2
    %v1643 = vadd.f32 %v1641, %v1642
    %v1644 = vrot.slane %v1643, 1
    %v1645 = vadd.f32 %v1643, %v1644
    %v1646 = vrot.slane %v1618, 4
    %v1647 = vadd.f32 %v1618, %v1646
    %v1648 = vrot.slane %v1647, 2
    %v1649 = vadd.f32 %v1647, %v1648
    %v1650 = vrot.slane %v1649, 1
    %v1651 = vadd.f32 %v1649, %v1650
    %v1652 = vrot.slane %v1619, 4
    %v1653 = vadd.f32 %v1619, %v1652
    %v1654 = vrot.slane %v1653, 2
    %v1655 = vadd.f32 %v1653, %v1654
    %v1656 = vrot.slane %v1655, 1
    %v1657 = vadd.f32 %v1655, %v1656
    %v1658 = vrot.slane %v1620, 4
    %v1659 = vadd.f32 %v1620, %v1658
    %v1660 = vrot.slane %v1659, 2
    %v1661 = vadd.f32 %v1659, %v1660
    %v1662 = vrot.slane %v1661, 1
    %v1663 = vadd.f32 %v1661, %v1662
    %v1664 = vrot.slane %v1621, 4
    %v1665 = vadd.f32 %v1621, %v1664
    %v1666 = vrot.slane %v1665, 2
    %v1667 = vadd.f32 %v1665, %v1666
    %v1668 = vrot.slane %v1667, 1
    %v1669 = vadd.f32 %v1667, %v1668
    %v1678 = vsel %vm440, %v1633, %v1627
    %v1679 = vsel %vm443, %v1639, %v1678
    %v1680 = vsel %vm446, %v1645, %v1679
    %v1681 = vsel %vm449, %v1651, %v1680
    %v1682 = vsel %vm452, %v1657, %v1681
    %v1683 = vsel %vm455, %v1663, %v1682
    %v1684 = vsel %vm458, %v1669, %v1683
    %v1686 = vmul.f32 %v1181, %v1684
    %v1687 = vadd.f32 %v1686, %v1144
    %v1688 = vsub.f32 0.0, %v1687
    %v1689 = vmax.f32 %v1688, 0.0
    %vm1690 = vcmp.ne.f32.partialorder %v1688, %v1688
    %v1691 = vadd.f32 %v1688, 0.0
    %v1692 = vand.u32 2147483647, %v1688
    %v1693 = vsub.f32 0.0, %v1692
    %v1694 = vmul.f32 %v1693, 1.442695
    %v1695 = vpow.pop %v1694
    %v1696 = vadd.f32 %v1695, 1.0
    %v1697 = vlog2.pop %v1696
    %v1698 = vmul.f32 %v1697, 0.6931472
    %v1699 = vmul.f32 -0.5, %v1695
    %v1700 = vadd.f32 %v1699, 1.0
    %v1701 = vmul.f32 %v1700, %v1695
    %v1702 = vand.u32 2147483647, %v1695
    %vm1703 = vcmp.lt.f32.partialorder %v1702, 0.0004427343
    %v1704 = vsel %vm1703, %v1701, %v1698
    %v1705 = vadd.f32 %v1689, %v1704
    %v1706 = vsel %vm1690, %v1691, %v1705
    %v1707 = vsub.f32 0.0, %v1706
    %v1708 = vmul.f32 %v1707, 1.442695
    %v1709 = vpow.pop %v1708
    %v1710 = vmul.f32 %v1567, %v1709
    %v1711 = vmul.f32 %v1569, %v1709
    %v1712 = vmul.f32 %v1571, %v1709
    %v1713 = vmul.f32 %v1573, %v1709
    %v1714 = vmul.f32 %v1575, %v1709
    %v1715 = vmul.f32 %v1577, %v1709
    %v1716 = vmul.f32 %v1579, %v1709
    %v1717 = vmul.f32 %v1581, %v1709
    %v1718 = vrot.slane %v1710, 4
    %v1719 = vadd.f32 %v1710, %v1718
    %v1720 = vrot.slane %v1719, 2
    %v1721 = vadd.f32 %v1719, %v1720
    %v1722 = vrot.slane %v1721, 1
    %v1723 = vadd.f32 %v1721, %v1722
    %v1724 = vrot.slane %v1711, 4
    %v1725 = vadd.f32 %v1711, %v1724
    %v1726 = vrot.slane %v1725, 2
    %v1727 = vadd.f32 %v1725, %v1726
    %v1728 = vrot.slane %v1727, 1
    %v1729 = vadd.f32 %v1727, %v1728
    %v1730 = vrot.slane %v1712, 4
    %v1731 = vadd.f32 %v1712, %v1730
    %v1732 = vrot.slane %v1731, 2
    %v1733 = vadd.f32 %v1731, %v1732
    %v1734 = vrot.slane %v1733, 1
    %v1735 = vadd.f32 %v1733, %v1734
    %v1736 = vrot.slane %v1713, 4
    %v1737 = vadd.f32 %v1713, %v1736
    %v1738 = vrot.slane %v1737, 2
    %v1739 = vadd.f32 %v1737, %v1738
    %v1740 = vrot.slane %v1739, 1
    %v1741 = vadd.f32 %v1739, %v1740
    %v1742 = vrot.slane %v1714, 4
    %v1743 = vadd.f32 %v1714, %v1742
    %v1744 = vrot.slane %v1743, 2
    %v1745 = vadd.f32 %v1743, %v1744
    %v1746 = vrot.slane %v1745, 1
    %v1747 = vadd.f32 %v1745, %v1746
    %v1748 = vrot.slane %v1715, 4
    %v1749 = vadd.f32 %v1715, %v1748
    %v1750 = vrot.slane %v1749, 2
    %v1751 = vadd.f32 %v1749, %v1750
    %v1752 = vrot.slane %v1751, 1
    %v1753 = vadd.f32 %v1751, %v1752
    %v1754 = vrot.slane %v1716, 4
    %v1755 = vadd.f32 %v1716, %v1754
    %v1756 = vrot.slane %v1755, 2
    %v1757 = vadd.f32 %v1755, %v1756
    %v1758 = vrot.slane %v1757, 1
    %v1759 = vadd.f32 %v1757, %v1758
    %v1760 = vrot.slane %v1717, 4
    %v1761 = vadd.f32 %v1717, %v1760
    %v1762 = vrot.slane %v1761, 2
    %v1763 = vadd.f32 %v1761, %v1762
    %v1764 = vrot.slane %v1763, 1
    %v1765 = vadd.f32 %v1763, %v1764
    %v1766 = vmul.f32 %v1723, 0.999999
    %v1767 = vmul.f32 %v1729, 0.999999
    %v1768 = vmul.f32 %v1735, 0.999999
    %v1769 = vmul.f32 %v1741, 0.999999
    %v1770 = vmul.f32 %v1747, 0.999999
    %v1771 = vmul.f32 %v1753, 0.999999
    %v1772 = vmul.f32 %v1759, 0.999999
    %v1773 = vmul.f32 %v1765, 0.999999
    %v1774 = vadd.f32 %v1766, 5e-07
    %v1775 = vadd.f32 %v1767, 5e-07
    %v1776 = vadd.f32 %v1768, 5e-07
    %v1777 = vadd.f32 %v1769, 5e-07
    %v1778 = vadd.f32 %v1770, 5e-07
    %v1779 = vadd.f32 %v1771, 5e-07
    %v1780 = vadd.f32 %v1772, 5e-07
    %v1781 = vadd.f32 %v1773, 5e-07
    %v1782 = vmul.f32 %v1774, 100.0
    %v1783 = vmul.f32 %v1775, 100.0
    %v1784 = vmul.f32 %v1776, 100.0
    %v1785 = vmul.f32 %v1777, 100.0
    %v1786 = vmul.f32 %v1778, 100.0
    %v1787 = vmul.f32 %v1779, 100.0
    %v1788 = vmul.f32 %v1780, 100.0
    %v1789 = vmul.f32 %v1781, 100.0
    %v1790 = vlog2.pop %v1782
    %v1791 = vmul.f32 %v1790, 0.6931472
    %v1792 = vlog2.pop %v1783
    %v1793 = vmul.f32 %v1792, 0.6931472
    %v1794 = vlog2.pop %v1784
    %v1795 = vmul.f32 %v1794, 0.6931472
    %v1796 = vlog2.pop %v1785
    %v1797 = vmul.f32 %v1796, 0.6931472
    %v1798 = vlog2.pop %v1786
    %v1799 = vmul.f32 %v1798, 0.6931472
    %v1800 = vlog2.pop %v1787
    %v1801 = vmul.f32 %v1800, 0.6931472
    %v1802 = vlog2.pop %v1788
    %v1803 = vmul.f32 %v1802, 0.6931472
    %v1804 = vlog2.pop %v1789
    %v1805 = vmul.f32 %v1804, 0.6931472
    %v1806 = vsub.f32 %v1791, 4.6051702
    %v1807 = vsub.f32 %v1793, 4.6051702
    %v1808 = vsub.f32 %v1795, 4.6051702
    %v1809 = vsub.f32 %v1797, 4.6051702
    %v1810 = vsub.f32 %v1799, 4.6051702
    %v1811 = vsub.f32 %v1801, 4.6051702
    %v1812 = vsub.f32 %v1803, 4.6051702
    %v1813 = vsub.f32 %v1805, 4.6051702
    %v1814 = vsub.f32 1.0, %v1774
    %v1815 = vsub.f32 1.0, %v1775
    %v1816 = vsub.f32 1.0, %v1776
    %v1817 = vsub.f32 1.0, %v1777
    %v1818 = vsub.f32 1.0, %v1778
    %v1819 = vsub.f32 1.0, %v1779
    %v1820 = vsub.f32 1.0, %v1780
    %v1821 = vsub.f32 1.0, %v1781
    %v1822 = vmul.f32 %v1814, 100.0
    %v1823 = vmul.f32 %v1815, 100.0
    %v1824 = vmul.f32 %v1816, 100.0
    %v1825 = vmul.f32 %v1817, 100.0
    %v1826 = vmul.f32 %v1818, 100.0
    %v1827 = vmul.f32 %v1819, 100.0
    %v1828 = vmul.f32 %v1820, 100.0
    %v1829 = vmul.f32 %v1821, 100.0
    %v1830 = vlog2.pop %v1822
    %v1831 = vmul.f32 %v1830, 0.6931472
    %v1832 = vlog2.pop %v1823
    %v1833 = vmul.f32 %v1832, 0.6931472
    %v1834 = vlog2.pop %v1824
    %v1835 = vmul.f32 %v1834, 0.6931472
    %v1836 = vlog2.pop %v1825
    %v1837 = vmul.f32 %v1836, 0.6931472
    %v1838 = vlog2.pop %v1826
    %v1839 = vmul.f32 %v1838, 0.6931472
    %v1840 = vlog2.pop %v1827
    %v1841 = vmul.f32 %v1840, 0.6931472
    %v1842 = vlog2.pop %v1828
    %v1843 = vmul.f32 %v1842, 0.6931472
    %v1844 = vlog2.pop %v1829
    %v1845 = vmul.f32 %v1844, 0.6931472
    %v1846 = vsub.f32 %v1831, 4.6051702
    %v1847 = vsub.f32 %v1833, 4.6051702
    %v1848 = vsub.f32 %v1835, 4.6051702
    %v1849 = vsub.f32 %v1837, 4.6051702
    %v1850 = vsub.f32 %v1839, 4.6051702
    %v1851 = vsub.f32 %v1841, 4.6051702
    %v1852 = vsub.f32 %v1843, 4.6051702
    %v1853 = vsub.f32 %v1845, 4.6051702
    %v1854 = vsub.f32 %v1806, %v1846
    %v1855 = vsub.f32 %v1807, %v1847
    %v1856 = vsub.f32 %v1808, %v1848
    %v1857 = vsub.f32 %v1809, %v1849
    %v1858 = vsub.f32 %v1810, %v1850
    %v1859 = vsub.f32 %v1811, %v1851
    %v1860 = vsub.f32 %v1812, %v1852
    %v1861 = vsub.f32 %v1813, %v1853
    %v1862 = vmul.f32 %v1706, 2.0
    %v1863 = vadd.f32 %v1687, %v1862
    %v1864 = vsub.f32 0.0, %v1863
    %v1865 = vsub.f32 %v1864, 2e-06
    %v1866 = vmul.f32 %v1181, 100.0
    %v1867 = vlog2.pop %v1866
    %v1868 = vmul.f32 %v1867, 0.6931472
    %v1869 = vsub.f32 %v1868, 4.6051702
    %v1870 = vadd.f32 %v1865, %v1869
    %v1871 = vadd.f32 %v1414, %v1870
    %v1872 = vadd.f32 %v1415, %v1870
    %v1873 = vadd.f32 %v1416, %v1870
    %v1874 = vadd.f32 %v1417, %v1870
    %v1875 = vadd.f32 %v1418, %v1870
    %v1876 = vadd.f32 %v1419, %v1870
    %v1877 = vadd.f32 %v1420, %v1870
    %v1878 = vadd.f32 %v1421, %v1870
    %v1879 = vrot.slane %v1871, 4
    %v1880 = vmax.f32 %v1871, %v1879
    %v1881 = vrot.slane %v1880, 2
    %v1882 = vmax.f32 %v1880, %v1881
    %v1883 = vrot.slane %v1882, 1
    %v1884 = vmax.f32 %v1882, %v1883
    %v1885 = vrot.slane %v1872, 4
    %v1886 = vmax.f32 %v1872, %v1885
    %v1887 = vrot.slane %v1886, 2
    %v1888 = vmax.f32 %v1886, %v1887
    %v1889 = vrot.slane %v1888, 1
    %v1890 = vmax.f32 %v1888, %v1889
    %v1891 = vrot.slane %v1873, 4
    %v1892 = vmax.f32 %v1873, %v1891
    %v1893 = vrot.slane %v1892, 2
    %v1894 = vmax.f32 %v1892, %v1893
    %v1895 = vrot.slane %v1894, 1
    %v1896 = vmax.f32 %v1894, %v1895
    %v1897 = vrot.slane %v1874, 4
    %v1898 = vmax.f32 %v1874, %v1897
    %v1899 = vrot.slane %v1898, 2
    %v1900 = vmax.f32 %v1898, %v1899
    %v1901 = vrot.slane %v1900, 1
    %v1902 = vmax.f32 %v1900, %v1901
    %v1903 = vrot.slane %v1875, 4
    %v1904 = vmax.f32 %v1875, %v1903
    %v1905 = vrot.slane %v1904, 2
    %v1906 = vmax.f32 %v1904, %v1905
    %v1907 = vrot.slane %v1906, 1
    %v1908 = vmax.f32 %v1906, %v1907
    %v1909 = vrot.slane %v1876, 4
    %v1910 = vmax.f32 %v1876, %v1909
    %v1911 = vrot.slane %v1910, 2
    %v1912 = vmax.f32 %v1910, %v1911
    %v1913 = vrot.slane %v1912, 1
    %v1914 = vmax.f32 %v1912, %v1913
    %v1915 = vrot.slane %v1877, 4
    %v1916 = vmax.f32 %v1877, %v1915
    %v1917 = vrot.slane %v1916, 2
    %v1918 = vmax.f32 %v1916, %v1917
    %v1919 = vrot.slane %v1918, 1
    %v1920 = vmax.f32 %v1918, %v1919
    %v1921 = vrot.slane %v1878, 4
    %v1922 = vmax.f32 %v1878, %v1921
    %v1923 = vrot.slane %v1922, 2
    %v1924 = vmax.f32 %v1922, %v1923
    %v1925 = vrot.slane %v1924, 1
    %v1926 = vmax.f32 %v1924, %v1925
    %v1927 = vsub.f32 %v1871, %v1884
    %v1928 = vsub.f32 %v1872, %v1890
    %v1929 = vsub.f32 %v1873, %v1896
    %v1930 = vsub.f32 %v1874, %v1902
    %v1931 = vsub.f32 %v1875, %v1908
    %v1932 = vsub.f32 %v1876, %v1914
    %v1933 = vsub.f32 %v1877, %v1920
    %v1934 = vsub.f32 %v1878, %v1926
    %v1935 = vmul.f32 %v1927, 1.442695
    %v1936 = vpow.pop %v1935
    %v1937 = vmul.f32 %v1928, 1.442695
    %v1938 = vpow.pop %v1937
    %v1939 = vmul.f32 %v1929, 1.442695
    %v1940 = vpow.pop %v1939
    %v1941 = vmul.f32 %v1930, 1.442695
    %v1942 = vpow.pop %v1941
    %v1943 = vmul.f32 %v1931, 1.442695
    %v1944 = vpow.pop %v1943
    %v1945 = vmul.f32 %v1932, 1.442695
    %v1946 = vpow.pop %v1945
    %v1947 = vmul.f32 %v1933, 1.442695
    %v1948 = vpow.pop %v1947
    %v1949 = vmul.f32 %v1934, 1.442695
    %v1950 = vpow.pop %v1949
    %v1959 = vrot.slane %v1936, 1
    %v1960 = vrot.slane %v1936, 2
    %v1961 = vrot.slane %v1936, 3
    %v1962 = vrot.slane %v1936, 4
    %v1963 = vrot.slane %v1936, 5
    %v1964 = vrot.slane %v1936, 6
    %v1965 = vrot.slane %v1936, 7
    %v1966 = vrot.slane %v1938, 1
    %v1967 = vrot.slane %v1938, 2
    %v1968 = vrot.slane %v1938, 3
    %v1969 = vrot.slane %v1938, 4
    %v1970 = vrot.slane %v1938, 5
    %v1971 = vrot.slane %v1938, 6
    %v1972 = vrot.slane %v1938, 7
    %v1973 = vrot.slane %v1940, 1
    %v1974 = vrot.slane %v1940, 2
    %v1975 = vrot.slane %v1940, 3
    %v1976 = vrot.slane %v1940, 4
    %v1977 = vrot.slane %v1940, 5
    %v1978 = vrot.slane %v1940, 6
    %v1979 = vrot.slane %v1940, 7
    %v1980 = vrot.slane %v1942, 1
    %v1981 = vrot.slane %v1942, 2
    %v1982 = vrot.slane %v1942, 3
    %v1983 = vrot.slane %v1942, 4
    %v1984 = vrot.slane %v1942, 5
    %v1985 = vrot.slane %v1942, 6
    %v1986 = vrot.slane %v1942, 7
    %v1987 = vrot.slane %v1944, 1
    %v1988 = vrot.slane %v1944, 2
    %v1989 = vrot.slane %v1944, 3
    %v1990 = vrot.slane %v1944, 4
    %v1991 = vrot.slane %v1944, 5
    %v1992 = vrot.slane %v1944, 6
    %v1993 = vrot.slane %v1944, 7
    %v1994 = vrot.slane %v1946, 1
    %v1995 = vrot.slane %v1946, 2
    %v1996 = vrot.slane %v1946, 3
    %v1997 = vrot.slane %v1946, 4
    %v1998 = vrot.slane %v1946, 5
    %v1999 = vrot.slane %v1946, 6
    %v2000 = vrot.slane %v1946, 7
    %v2001 = vrot.slane %v1948, 1
    %v2002 = vrot.slane %v1948, 2
    %v2003 = vrot.slane %v1948, 3
    %v2004 = vrot.slane %v1948, 4
    %v2005 = vrot.slane %v1948, 5
    %v2006 = vrot.slane %v1948, 6
    %v2007 = vrot.slane %v1948, 7
    %v2008 = vrot.slane %v1950, 1
    %v2009 = vrot.slane %v1950, 2
    %v2010 = vrot.slane %v1950, 3
    %v2011 = vrot.slane %v1950, 4
    %v2012 = vrot.slane %v1950, 5
    %v2013 = vrot.slane %v1950, 6
    %v2014 = vrot.slane %v1950, 7
    %v2015 = vperm.slane %v1936, 0
    %v2016 = vperm.slane %v1959, 0
    %v2017 = vperm.slane %v1960, 0
    %v2018 = vperm.slane %v1961, 0
    %v2019 = vperm.slane %v1962, 0
    %v2020 = vperm.slane %v1963, 0
    %v2021 = vperm.slane %v1964, 0
    %v2022 = vperm.slane %v1965, 0
    %v2023 = vperm.slane %v1938, 0
    %v2024 = vperm.slane %v1966, 0
    %v2025 = vperm.slane %v1967, 0
    %v2026 = vperm.slane %v1968, 0
    %v2027 = vperm.slane %v1969, 0
    %v2028 = vperm.slane %v1970, 0
    %v2029 = vperm.slane %v1971, 0
    %v2030 = vperm.slane %v1972, 0
    %v2031 = vperm.slane %v1940, 0
    %v2032 = vperm.slane %v1973, 0
    %v2033 = vperm.slane %v1974, 0
    %v2034 = vperm.slane %v1975, 0
    %v2035 = vperm.slane %v1976, 0
    %v2036 = vperm.slane %v1977, 0
    %v2037 = vperm.slane %v1978, 0
    %v2038 = vperm.slane %v1979, 0
    %v2039 = vperm.slane %v1942, 0
    %v2040 = vperm.slane %v1980, 0
    %v2041 = vperm.slane %v1981, 0
    %v2042 = vperm.slane %v1982, 0
    %v2043 = vperm.slane %v1983, 0
    %v2044 = vperm.slane %v1984, 0
    %v2045 = vperm.slane %v1985, 0
    %v2046 = vperm.slane %v1986, 0
    %v2047 = vperm.slane %v1944, 0
    %v2048 = vperm.slane %v1987, 0
    %v2049 = vperm.slane %v1988, 0
    %v2050 = vperm.slane %v1989, 0
    %v2051 = vperm.slane %v1990, 0
    %v2052 = vperm.slane %v1991, 0
    %v2053 = vperm.slane %v1992, 0
    %v2054 = vperm.slane %v1993, 0
    %v2055 = vperm.slane %v1946, 0
    %v2056 = vperm.slane %v1994, 0
    %v2057 = vperm.slane %v1995, 0
    %v2058 = vperm.slane %v1996, 0
    %v2059 = vperm.slane %v1997, 0
    %v2060 = vperm.slane %v1998, 0
    %v2061 = vperm.slane %v1999, 0
    %v2062 = vperm.slane %v2000, 0
    %v2063 = vperm.slane %v1948, 0
    %v2064 = vperm.slane %v2001, 0
    %v2065 = vperm.slane %v2002, 0
    %v2066 = vperm.slane %v2003, 0
    %v2067 = vperm.slane %v2004, 0
    %v2068 = vperm.slane %v2005, 0
    %v2069 = vperm.slane %v2006, 0
    %v2070 = vperm.slane %v2007, 0
    %v2071 = vperm.slane %v1950, 0
    %v2072 = vperm.slane %v2008, 0
    %v2073 = vperm.slane %v2009, 0
    %v2074 = vperm.slane %v2010, 0
    %v2075 = vperm.slane %v2011, 0
    %v2076 = vperm.slane %v2012, 0
    %v2077 = vperm.slane %v2013, 0
    %v2078 = vperm.slane %v2014, 0
    %v2143 = vmul.f32 %v2015, %v1583
    %v2144 = vmul.f32 %v2016, %v1585
    %v2145 = vmul.f32 %v2017, %v1587
    %v2146 = vmul.f32 %v2018, %v1589
    %v2147 = vmul.f32 %v2019, %v1591
    %v2148 = vmul.f32 %v2020, %v1593
    %v2149 = vmul.f32 %v2021, %v1595
    %v2150 = vmul.f32 %v2022, %v1597
    %v2151 = vmul.f32 %v2023, %v1583
    %v2152 = vmul.f32 %v2024, %v1585
    %v2153 = vmul.f32 %v2025, %v1587
    %v2154 = vmul.f32 %v2026, %v1589
    %v2155 = vmul.f32 %v2027, %v1591
    %v2156 = vmul.f32 %v2028, %v1593
    %v2157 = vmul.f32 %v2029, %v1595
    %v2158 = vmul.f32 %v2030, %v1597
    %v2159 = vmul.f32 %v2031, %v1583
    %v2160 = vmul.f32 %v2032, %v1585
    %v2161 = vmul.f32 %v2033, %v1587
    %v2162 = vmul.f32 %v2034, %v1589
    %v2163 = vmul.f32 %v2035, %v1591
    %v2164 = vmul.f32 %v2036, %v1593
    %v2165 = vmul.f32 %v2037, %v1595
    %v2166 = vmul.f32 %v2038, %v1597
    %v2167 = vmul.f32 %v2039, %v1583
    %v2168 = vmul.f32 %v2040, %v1585
    %v2169 = vmul.f32 %v2041, %v1587
    %v2170 = vmul.f32 %v2042, %v1589
    %v2171 = vmul.f32 %v2043, %v1591
    %v2172 = vmul.f32 %v2044, %v1593
    %v2173 = vmul.f32 %v2045, %v1595
    %v2174 = vmul.f32 %v2046, %v1597
    %v2175 = vmul.f32 %v2047, %v1583
    %v2176 = vmul.f32 %v2048, %v1585
    %v2177 = vmul.f32 %v2049, %v1587
    %v2178 = vmul.f32 %v2050, %v1589
    %v2179 = vmul.f32 %v2051, %v1591
    %v2180 = vmul.f32 %v2052, %v1593
    %v2181 = vmul.f32 %v2053, %v1595
    %v2182 = vmul.f32 %v2054, %v1597
    %v2183 = vmul.f32 %v2055, %v1583
    %v2184 = vmul.f32 %v2056, %v1585
    %v2185 = vmul.f32 %v2057, %v1587
    %v2186 = vmul.f32 %v2058, %v1589
    %v2187 = vmul.f32 %v2059, %v1591
    %v2188 = vmul.f32 %v2060, %v1593
    %v2189 = vmul.f32 %v2061, %v1595
    %v2190 = vmul.f32 %v2062, %v1597
    %v2191 = vmul.f32 %v2063, %v1583
    %v2192 = vmul.f32 %v2064, %v1585
    %v2193 = vmul.f32 %v2065, %v1587
    %v2194 = vmul.f32 %v2066, %v1589
    %v2195 = vmul.f32 %v2067, %v1591
    %v2196 = vmul.f32 %v2068, %v1593
    %v2197 = vmul.f32 %v2069, %v1595
    %v2198 = vmul.f32 %v2070, %v1597
    %v2199 = vmul.f32 %v2071, %v1583
    %v2200 = vmul.f32 %v2072, %v1585
    %v2201 = vmul.f32 %v2073, %v1587
    %v2202 = vmul.f32 %v2074, %v1589
    %v2203 = vmul.f32 %v2075, %v1591
    %v2204 = vmul.f32 %v2076, %v1593
    %v2205 = vmul.f32 %v2077, %v1595
    %v2206 = vmul.f32 %v2078, %v1597
    %v2207 = vadd.f32 %v2143, %v2144
    %v2208 = vadd.f32 %v2207, %v2145
    %v2209 = vadd.f32 %v2208, %v2146
    %v2210 = vadd.f32 %v2209, %v2147
    %v2211 = vadd.f32 %v2210, %v2148
    %v2212 = vadd.f32 %v2211, %v2149
    %v2213 = vadd.f32 %v2212, %v2150
    %v2214 = vadd.f32 %v2151, %v2152
    %v2215 = vadd.f32 %v2214, %v2153
    %v2216 = vadd.f32 %v2215, %v2154
    %v2217 = vadd.f32 %v2216, %v2155
    %v2218 = vadd.f32 %v2217, %v2156
    %v2219 = vadd.f32 %v2218, %v2157
    %v2220 = vadd.f32 %v2219, %v2158
    %v2221 = vadd.f32 %v2159, %v2160
    %v2222 = vadd.f32 %v2221, %v2161
    %v2223 = vadd.f32 %v2222, %v2162
    %v2224 = vadd.f32 %v2223, %v2163
    %v2225 = vadd.f32 %v2224, %v2164
    %v2226 = vadd.f32 %v2225, %v2165
    %v2227 = vadd.f32 %v2226, %v2166
    %v2228 = vadd.f32 %v2167, %v2168
    %v2229 = vadd.f32 %v2228, %v2169
    %v2230 = vadd.f32 %v2229, %v2170
    %v2231 = vadd.f32 %v2230, %v2171
    %v2232 = vadd.f32 %v2231, %v2172
    %v2233 = vadd.f32 %v2232, %v2173
    %v2234 = vadd.f32 %v2233, %v2174
    %v2235 = vadd.f32 %v2175, %v2176
    %v2236 = vadd.f32 %v2235, %v2177
    %v2237 = vadd.f32 %v2236, %v2178
    %v2238 = vadd.f32 %v2237, %v2179
    %v2239 = vadd.f32 %v2238, %v2180
    %v2240 = vadd.f32 %v2239, %v2181
    %v2241 = vadd.f32 %v2240, %v2182
    %v2242 = vadd.f32 %v2183, %v2184
    %v2243 = vadd.f32 %v2242, %v2185
    %v2244 = vadd.f32 %v2243, %v2186
    %v2245 = vadd.f32 %v2244, %v2187
    %v2246 = vadd.f32 %v2245, %v2188
    %v2247 = vadd.f32 %v2246, %v2189
    %v2248 = vadd.f32 %v2247, %v2190
    %v2249 = vadd.f32 %v2191, %v2192
    %v2250 = vadd.f32 %v2249, %v2193
    %v2251 = vadd.f32 %v2250, %v2194
    %v2252 = vadd.f32 %v2251, %v2195
    %v2253 = vadd.f32 %v2252, %v2196
    %v2254 = vadd.f32 %v2253, %v2197
    %v2255 = vadd.f32 %v2254, %v2198
    %v2256 = vadd.f32 %v2199, %v2200
    %v2257 = vadd.f32 %v2256, %v2201
    %v2258 = vadd.f32 %v2257, %v2202
    %v2259 = vadd.f32 %v2258, %v2203
    %v2260 = vadd.f32 %v2259, %v2204
    %v2261 = vadd.f32 %v2260, %v2205
    %v2262 = vadd.f32 %v2261, %v2206
    %v2263 = vlog2.pop %v2213
    %v2264 = vmul.f32 %v2263, 0.6931472
    %v2265 = vlog2.pop %v2220
    %v2266 = vmul.f32 %v2265, 0.6931472
    %v2267 = vlog2.pop %v2227
    %v2268 = vmul.f32 %v2267, 0.6931472
    %v2269 = vlog2.pop %v2234
    %v2270 = vmul.f32 %v2269, 0.6931472
    %v2271 = vlog2.pop %v2241
    %v2272 = vmul.f32 %v2271, 0.6931472
    %v2273 = vlog2.pop %v2248
    %v2274 = vmul.f32 %v2273, 0.6931472
    %v2275 = vlog2.pop %v2255
    %v2276 = vmul.f32 %v2275, 0.6931472
    %v2277 = vlog2.pop %v2262
    %v2278 = vmul.f32 %v2277, 0.6931472
    %v2279 = vadd.f32 %v2264, %v1884
    %v2280 = vadd.f32 %v2266, %v1890
    %v2281 = vadd.f32 %v2268, %v1896
    %v2282 = vadd.f32 %v2270, %v1902
    %v2283 = vadd.f32 %v2272, %v1908
    %v2284 = vadd.f32 %v2274, %v1914
    %v2285 = vadd.f32 %v2276, %v1920
    %v2286 = vadd.f32 %v2278, %v1926
    %v2287 = vadd.f32 %v2279, -1.0000005e-06
    %v2288 = vadd.f32 %v2280, -1.0000005e-06
    %v2289 = vadd.f32 %v2281, -1.0000005e-06
    %v2290 = vadd.f32 %v2282, -1.0000005e-06
    %v2291 = vadd.f32 %v2283, -1.0000005e-06
    %v2292 = vadd.f32 %v2284, -1.0000005e-06
    %v2293 = vadd.f32 %v2285, -1.0000005e-06
    %v2294 = vadd.f32 %v2286, -1.0000005e-06
    %v2295 = vadd.f32 %v1806, %v1846
    %v2296 = vadd.f32 %v1807, %v1847
    %v2297 = vadd.f32 %v1808, %v1848
    %v2298 = vadd.f32 %v1809, %v1849
    %v2299 = vadd.f32 %v1810, %v1850
    %v2300 = vadd.f32 %v1811, %v1851
    %v2301 = vadd.f32 %v1812, %v1852
    %v2302 = vadd.f32 %v1813, %v1853
    %v2303 = vsub.f32 %v2287, %v2295
    %v2304 = vsub.f32 %v2288, %v2296
    %v2305 = vsub.f32 %v2289, %v2297
    %v2306 = vsub.f32 %v2290, %v2298
    %v2307 = vsub.f32 %v2291, %v2299
    %v2308 = vsub.f32 %v2292, %v2300
    %v2309 = vsub.f32 %v2293, %v2301
    %v2310 = vsub.f32 %v2294, %v2302
    %v2319 = vrot.slane %v1136, 7
    %v2320 = vsel %vm440, %v2319, %v1135
    %v2321 = vrot.slane %v1137, 6
    %v2322 = vsel %vm443, %v2321, %v2320
    %v2323 = vrot.slane %v1138, 5
    %v2324 = vsel %vm446, %v2323, %v2322
    %v2325 = vrot.slane %v1139, 4
    %v2326 = vsel %vm449, %v2325, %v2324
    %v2327 = vrot.slane %v1140, 3
    %v2328 = vsel %vm452, %v2327, %v2326
    %v2329 = vrot.slane %v1141, 2
    %v2330 = vsel %vm455, %v2329, %v2328
    %v2331 = vrot.slane %v1142, 1
    %v2332 = vsel %vm458, %v2331, %v2330
    %v2334 = vadd.f32 %v2303, %v2332
    %v2335 = vadd.f32 %v2304, %v2332
    %v2336 = vadd.f32 %v2305, %v2332
    %v2337 = vadd.f32 %v2306, %v2332
    %v2338 = vadd.f32 %v2307, %v2332
    %v2339 = vadd.f32 %v2308, %v2332
    %v2340 = vadd.f32 %v2309, %v2332
    %v2341 = vadd.f32 %v2310, %v2332
    %v2342 = vrot.slane %v2334, 4
    %v2343 = vmax.f32 %v2334, %v2342
    %v2344 = vrot.slane %v2343, 2
    %v2345 = vmax.f32 %v2343, %v2344
    %v2346 = vrot.slane %v2345, 1
    %v2347 = vmax.f32 %v2345, %v2346
    %v2348 = vrot.slane %v2335, 4
    %v2349 = vmax.f32 %v2335, %v2348
    %v2350 = vrot.slane %v2349, 2
    %v2351 = vmax.f32 %v2349, %v2350
    %v2352 = vrot.slane %v2351, 1
    %v2353 = vmax.f32 %v2351, %v2352
    %v2354 = vrot.slane %v2336, 4
    %v2355 = vmax.f32 %v2336, %v2354
    %v2356 = vrot.slane %v2355, 2
    %v2357 = vmax.f32 %v2355, %v2356
    %v2358 = vrot.slane %v2357, 1
    %v2359 = vmax.f32 %v2357, %v2358
    %v2360 = vrot.slane %v2337, 4
    %v2361 = vmax.f32 %v2337, %v2360
    %v2362 = vrot.slane %v2361, 2
    %v2363 = vmax.f32 %v2361, %v2362
    %v2364 = vrot.slane %v2363, 1
    %v2365 = vmax.f32 %v2363, %v2364
    %v2366 = vrot.slane %v2338, 4
    %v2367 = vmax.f32 %v2338, %v2366
    %v2368 = vrot.slane %v2367, 2
    %v2369 = vmax.f32 %v2367, %v2368
    %v2370 = vrot.slane %v2369, 1
    %v2371 = vmax.f32 %v2369, %v2370
    %v2372 = vrot.slane %v2339, 4
    %v2373 = vmax.f32 %v2339, %v2372
    %v2374 = vrot.slane %v2373, 2
    %v2375 = vmax.f32 %v2373, %v2374
    %v2376 = vrot.slane %v2375, 1
    %v2377 = vmax.f32 %v2375, %v2376
    %v2378 = vrot.slane %v2340, 4
    %v2379 = vmax.f32 %v2340, %v2378
    %v2380 = vrot.slane %v2379, 2
    %v2381 = vmax.f32 %v2379, %v2380
    %v2382 = vrot.slane %v2381, 1
    %v2383 = vmax.f32 %v2381, %v2382
    %v2384 = vrot.slane %v2341, 4
    %v2385 = vmax.f32 %v2341, %v2384
    %v2386 = vrot.slane %v2385, 2
    %v2387 = vmax.f32 %v2385, %v2386
    %v2388 = vrot.slane %v2387, 1
    %v2389 = vmax.f32 %v2387, %v2388
    %v2390 = vsub.f32 %v2334, %v2347
    %v2391 = vsub.f32 %v2335, %v2353
    %v2392 = vsub.f32 %v2336, %v2359
    %v2393 = vsub.f32 %v2337, %v2365
    %v2394 = vsub.f32 %v2338, %v2371
    %v2395 = vsub.f32 %v2339, %v2377
    %v2396 = vsub.f32 %v2340, %v2383
    %v2397 = vsub.f32 %v2341, %v2389
    %v2398 = vmul.f32 %v2390, 1.442695
    %v2399 = vpow.pop %v2398
    %v2400 = vmul.f32 %v2391, 1.442695
    %v2401 = vpow.pop %v2400
    %v2402 = vmul.f32 %v2392, 1.442695
    %v2403 = vpow.pop %v2402
    %v2404 = vmul.f32 %v2393, 1.442695
    %v2405 = vpow.pop %v2404
    %v2406 = vmul.f32 %v2394, 1.442695
    %v2407 = vpow.pop %v2406
    %v2408 = vmul.f32 %v2395, 1.442695
    %v2409 = vpow.pop %v2408
    %v2410 = vmul.f32 %v2396, 1.442695
    %v2411 = vpow.pop %v2410
    %v2412 = vmul.f32 %v2397, 1.442695
    %v2413 = vpow.pop %v2412
    %v2414 = vrot.slane %v2399, 4
    %v2415 = vadd.f32 %v2399, %v2414
    %v2416 = vrot.slane %v2415, 2
    %v2417 = vadd.f32 %v2415, %v2416
    %v2418 = vrot.slane %v2417, 1
    %v2419 = vadd.f32 %v2417, %v2418
    %v2420 = vrot.slane %v2401, 4
    %v2421 = vadd.f32 %v2401, %v2420
    %v2422 = vrot.slane %v2421, 2
    %v2423 = vadd.f32 %v2421, %v2422
    %v2424 = vrot.slane %v2423, 1
    %v2425 = vadd.f32 %v2423, %v2424
    %v2426 = vrot.slane %v2403, 4
    %v2427 = vadd.f32 %v2403, %v2426
    %v2428 = vrot.slane %v2427, 2
    %v2429 = vadd.f32 %v2427, %v2428
    %v2430 = vrot.slane %v2429, 1
    %v2431 = vadd.f32 %v2429, %v2430
    %v2432 = vrot.slane %v2405, 4
    %v2433 = vadd.f32 %v2405, %v2432
    %v2434 = vrot.slane %v2433, 2
    %v2435 = vadd.f32 %v2433, %v2434
    %v2436 = vrot.slane %v2435, 1
    %v2437 = vadd.f32 %v2435, %v2436
    %v2438 = vrot.slane %v2407, 4
    %v2439 = vadd.f32 %v2407, %v2438
    %v2440 = vrot.slane %v2439, 2
    %v2441 = vadd.f32 %v2439, %v2440
    %v2442 = vrot.slane %v2441, 1
    %v2443 = vadd.f32 %v2441, %v2442
    %v2444 = vrot.slane %v2409, 4
    %v2445 = vadd.f32 %v2409, %v2444
    %v2446 = vrot.slane %v2445, 2
    %v2447 = vadd.f32 %v2445, %v2446
    %v2448 = vrot.slane %v2447, 1
    %v2449 = vadd.f32 %v2447, %v2448
    %v2450 = vrot.slane %v2411, 4
    %v2451 = vadd.f32 %v2411, %v2450
    %v2452 = vrot.slane %v2451, 2
    %v2453 = vadd.f32 %v2451, %v2452
    %v2454 = vrot.slane %v2453, 1
    %v2455 = vadd.f32 %v2453, %v2454
    %v2456 = vrot.slane %v2413, 4
    %v2457 = vadd.f32 %v2413, %v2456
    %v2458 = vrot.slane %v2457, 2
    %v2459 = vadd.f32 %v2457, %v2458
    %v2460 = vrot.slane %v2459, 1
    %v2461 = vadd.f32 %v2459, %v2460
    %v2462 = vlog2.pop %v2419
    %v2463 = vmul.f32 %v2462, 0.6931472
    %v2464 = vlog2.pop %v2425
    %v2465 = vmul.f32 %v2464, 0.6931472
    %v2466 = vlog2.pop %v2431
    %v2467 = vmul.f32 %v2466, 0.6931472
    %v2468 = vlog2.pop %v2437
    %v2469 = vmul.f32 %v2468, 0.6931472
    %v2470 = vlog2.pop %v2443
    %v2471 = vmul.f32 %v2470, 0.6931472
    %v2472 = vlog2.pop %v2449
    %v2473 = vmul.f32 %v2472, 0.6931472
    %v2474 = vlog2.pop %v2455
    %v2475 = vmul.f32 %v2474, 0.6931472
    %v2476 = vlog2.pop %v2461
    %v2477 = vmul.f32 %v2476, 0.6931472
    %v2478 = vadd.f32 %v2463, %v2347
    %v2479 = vadd.f32 %v2465, %v2353
    %v2480 = vadd.f32 %v2467, %v2359
    %v2481 = vadd.f32 %v2469, %v2365
    %v2482 = vadd.f32 %v2471, %v2371
    %v2483 = vadd.f32 %v2473, %v2377
    %v2484 = vadd.f32 %v2475, %v2383
    %v2485 = vadd.f32 %v2477, %v2389
    %v2486 = vld [vmem:[%s7] sm:$0xff]
    %v2487 = vld [vmem:[%s7 + $0x8] sm:$0xff]
    %v2488 = vld [vmem:[%s7 + $0x10] sm:$0xff]
    %v2489 = vld [vmem:[%s7 + $0x18] sm:$0xff]
    %v2490 = vld [vmem:[%s8] sm:$0xff]
    %v2491 = vld [vmem:[%s8 + $0x8] sm:$0xff]
    %v2492 = vld [vmem:[%s8 + $0x10] sm:$0xff]
    %v2493 = vld [vmem:[%s8 + $0x18] sm:$0xff]
    %v2494 = vld [vmem:[%s8 + $0x20] sm:$0xff]
    %v2495 = vld [vmem:[%s8 + $0x28] sm:$0xff]
    %v2496 = vld [vmem:[%s8 + $0x30] sm:$0xff]
    %v2497 = vld [vmem:[%s8 + $0x38] sm:$0xff]
    %v2498 = vld [vmem:[%s9] sm:$0xff]
    %v2499 = vadd.f32 %v2486, 0.54132324
    %v2500 = vmax.f32 %v2499, 0.0
    %vm2501 = vcmp.ne.f32.partialorder %v2499, %v2499
    %v2502 = vadd.f32 %v2499, 0.0
    %v2503 = vand.u32 2147483647, %v2499
    %v2504 = vsub.f32 0.0, %v2503
    %v2505 = vmul.f32 %v2504, 1.442695
    %v2506 = vpow.pop %v2505
    %v2507 = vadd.f32 %v2506, 1.0
    %v2508 = vlog2.pop %v2507
    %v2509 = vmul.f32 %v2508, 0.6931472
    %v2510 = vmul.f32 -0.5, %v2506
    %v2511 = vadd.f32 %v2510, 1.0
    %v2512 = vmul.f32 %v2511, %v2506
    %v2513 = vand.u32 2147483647, %v2506
    %vm2514 = vcmp.lt.f32.partialorder %v2513, 0.0004427343
    %v2515 = vsel %vm2514, %v2512, %v2509
    %v2516 = vadd.f32 %v2500, %v2515
    %v2517 = vsel %vm2501, %v2502, %v2516
    %2519 = vset.pattern.permute.xlu0 0
    %2520 = vperm.xlu0 %2519, %v2498
    %v2521 = vpop.permute.xlu0 %2520
    %v2523 = vadd.f32 %v2521, %v2488
    %2525 = vset.pattern.permute.xlu0 0
    %2526 = vperm.xlu0 %2525, %v2490
    %v2527 = vpop.permute.xlu0 %2526
    %2530 = vset.pattern.permute.xlu0 0
    %2531 = vperm.xlu0 %2530, %v2491
    %v2532 = vpop.permute.xlu0 %2531
    %2535 = vset.pattern.permute.xlu0 0
    %2536 = vperm.xlu0 %2535, %v2492
    %v2537 = vpop.permute.xlu0 %2536
    %2540 = vset.pattern.permute.xlu0 0
    %2541 = vperm.xlu0 %2540, %v2493
    %v2542 = vpop.permute.xlu0 %2541
    %2545 = vset.pattern.permute.xlu0 0
    %2546 = vperm.xlu0 %2545, %v2494
    %v2547 = vpop.permute.xlu0 %2546
    %2550 = vset.pattern.permute.xlu0 0
    %2551 = vperm.xlu0 %2550, %v2495
    %v2552 = vpop.permute.xlu0 %2551
    %2555 = vset.pattern.permute.xlu0 0
    %2556 = vperm.xlu0 %2555, %v2496
    %v2557 = vpop.permute.xlu0 %2556
    %2560 = vset.pattern.permute.xlu0 0
    %2561 = vperm.xlu0 %2560, %v2497
    %v2562 = vpop.permute.xlu0 %2561
    %v2564 = vadd.f32 %v2527, %v2489
    %v2565 = vadd.f32 %v2532, %v2489
    %v2566 = vadd.f32 %v2537, %v2489
    %v2567 = vadd.f32 %v2542, %v2489
    %v2568 = vadd.f32 %v2547, %v2489
    %v2569 = vadd.f32 %v2552, %v2489
    %v2570 = vadd.f32 %v2557, %v2489
    %v2571 = vadd.f32 %v2562, %v2489
    %v2572 = vrot.slane %v2523, 4
    %v2573 = vmax.f32 %v2523, %v2572
    %v2574 = vrot.slane %v2573, 2
    %v2575 = vmax.f32 %v2573, %v2574
    %v2576 = vrot.slane %v2575, 1
    %v2577 = vmax.f32 %v2575, %v2576
    %v2578 = vsub.f32 %v2523, %v2577
    %v2579 = vmul.f32 %v2578, 1.442695
    %v2580 = vpow.pop %v2579
    %v2581 = vrot.slane %v2580, 4
    %v2582 = vadd.f32 %v2580, %v2581
    %v2583 = vrot.slane %v2582, 2
    %v2584 = vadd.f32 %v2582, %v2583
    %v2585 = vrot.slane %v2584, 1
    %v2586 = vadd.f32 %v2584, %v2585
    %v2587 = vlog2.pop %v2586
    %v2588 = vmul.f32 %v2587, 0.6931472
    %v2589 = vsub.f32 %v2578, %v2588
    %v2590 = vrot.slane %v2564, 4
    %v2591 = vmax.f32 %v2564, %v2590
    %v2592 = vrot.slane %v2591, 2
    %v2593 = vmax.f32 %v2591, %v2592
    %v2594 = vrot.slane %v2593, 1
    %v2595 = vmax.f32 %v2593, %v2594
    %v2596 = vrot.slane %v2565, 4
    %v2597 = vmax.f32 %v2565, %v2596
    %v2598 = vrot.slane %v2597, 2
    %v2599 = vmax.f32 %v2597, %v2598
    %v2600 = vrot.slane %v2599, 1
    %v2601 = vmax.f32 %v2599, %v2600
    %v2602 = vrot.slane %v2566, 4
    %v2603 = vmax.f32 %v2566, %v2602
    %v2604 = vrot.slane %v2603, 2
    %v2605 = vmax.f32 %v2603, %v2604
    %v2606 = vrot.slane %v2605, 1
    %v2607 = vmax.f32 %v2605, %v2606
    %v2608 = vrot.slane %v2567, 4
    %v2609 = vmax.f32 %v2567, %v2608
    %v2610 = vrot.slane %v2609, 2
    %v2611 = vmax.f32 %v2609, %v2610
    %v2612 = vrot.slane %v2611, 1
    %v2613 = vmax.f32 %v2611, %v2612
    %v2614 = vrot.slane %v2568, 4
    %v2615 = vmax.f32 %v2568, %v2614
    %v2616 = vrot.slane %v2615, 2
    %v2617 = vmax.f32 %v2615, %v2616
    %v2618 = vrot.slane %v2617, 1
    %v2619 = vmax.f32 %v2617, %v2618
    %v2620 = vrot.slane %v2569, 4
    %v2621 = vmax.f32 %v2569, %v2620
    %v2622 = vrot.slane %v2621, 2
    %v2623 = vmax.f32 %v2621, %v2622
    %v2624 = vrot.slane %v2623, 1
    %v2625 = vmax.f32 %v2623, %v2624
    %v2626 = vrot.slane %v2570, 4
    %v2627 = vmax.f32 %v2570, %v2626
    %v2628 = vrot.slane %v2627, 2
    %v2629 = vmax.f32 %v2627, %v2628
    %v2630 = vrot.slane %v2629, 1
    %v2631 = vmax.f32 %v2629, %v2630
    %v2632 = vrot.slane %v2571, 4
    %v2633 = vmax.f32 %v2571, %v2632
    %v2634 = vrot.slane %v2633, 2
    %v2635 = vmax.f32 %v2633, %v2634
    %v2636 = vrot.slane %v2635, 1
    %v2637 = vmax.f32 %v2635, %v2636
    %v2638 = vsub.f32 %v2564, %v2595
    %v2639 = vsub.f32 %v2565, %v2601
    %v2640 = vsub.f32 %v2566, %v2607
    %v2641 = vsub.f32 %v2567, %v2613
    %v2642 = vsub.f32 %v2568, %v2619
    %v2643 = vsub.f32 %v2569, %v2625
    %v2644 = vsub.f32 %v2570, %v2631
    %v2645 = vsub.f32 %v2571, %v2637
    %v2646 = vmul.f32 %v2638, 1.442695
    %v2647 = vpow.pop %v2646
    %v2648 = vmul.f32 %v2639, 1.442695
    %v2649 = vpow.pop %v2648
    %v2650 = vmul.f32 %v2640, 1.442695
    %v2651 = vpow.pop %v2650
    %v2652 = vmul.f32 %v2641, 1.442695
    %v2653 = vpow.pop %v2652
    %v2654 = vmul.f32 %v2642, 1.442695
    %v2655 = vpow.pop %v2654
    %v2656 = vmul.f32 %v2643, 1.442695
    %v2657 = vpow.pop %v2656
    %v2658 = vmul.f32 %v2644, 1.442695
    %v2659 = vpow.pop %v2658
    %v2660 = vmul.f32 %v2645, 1.442695
    %v2661 = vpow.pop %v2660
    %v2662 = vrot.slane %v2647, 4
    %v2663 = vadd.f32 %v2647, %v2662
    %v2664 = vrot.slane %v2663, 2
    %v2665 = vadd.f32 %v2663, %v2664
    %v2666 = vrot.slane %v2665, 1
    %v2667 = vadd.f32 %v2665, %v2666
    %v2668 = vrot.slane %v2649, 4
    %v2669 = vadd.f32 %v2649, %v2668
    %v2670 = vrot.slane %v2669, 2
    %v2671 = vadd.f32 %v2669, %v2670
    %v2672 = vrot.slane %v2671, 1
    %v2673 = vadd.f32 %v2671, %v2672
    %v2674 = vrot.slane %v2651, 4
    %v2675 = vadd.f32 %v2651, %v2674
    %v2676 = vrot.slane %v2675, 2
    %v2677 = vadd.f32 %v2675, %v2676
    %v2678 = vrot.slane %v2677, 1
    %v2679 = vadd.f32 %v2677, %v2678
    %v2680 = vrot.slane %v2653, 4
    %v2681 = vadd.f32 %v2653, %v2680
    %v2682 = vrot.slane %v2681, 2
    %v2683 = vadd.f32 %v2681, %v2682
    %v2684 = vrot.slane %v2683, 1
    %v2685 = vadd.f32 %v2683, %v2684
    %v2686 = vrot.slane %v2655, 4
    %v2687 = vadd.f32 %v2655, %v2686
    %v2688 = vrot.slane %v2687, 2
    %v2689 = vadd.f32 %v2687, %v2688
    %v2690 = vrot.slane %v2689, 1
    %v2691 = vadd.f32 %v2689, %v2690
    %v2692 = vrot.slane %v2657, 4
    %v2693 = vadd.f32 %v2657, %v2692
    %v2694 = vrot.slane %v2693, 2
    %v2695 = vadd.f32 %v2693, %v2694
    %v2696 = vrot.slane %v2695, 1
    %v2697 = vadd.f32 %v2695, %v2696
    %v2698 = vrot.slane %v2659, 4
    %v2699 = vadd.f32 %v2659, %v2698
    %v2700 = vrot.slane %v2699, 2
    %v2701 = vadd.f32 %v2699, %v2700
    %v2702 = vrot.slane %v2701, 1
    %v2703 = vadd.f32 %v2701, %v2702
    %v2704 = vrot.slane %v2661, 4
    %v2705 = vadd.f32 %v2661, %v2704
    %v2706 = vrot.slane %v2705, 2
    %v2707 = vadd.f32 %v2705, %v2706
    %v2708 = vrot.slane %v2707, 1
    %v2709 = vadd.f32 %v2707, %v2708
    %v2710 = vlog2.pop %v2667
    %v2711 = vmul.f32 %v2710, 0.6931472
    %v2712 = vlog2.pop %v2673
    %v2713 = vmul.f32 %v2712, 0.6931472
    %v2714 = vlog2.pop %v2679
    %v2715 = vmul.f32 %v2714, 0.6931472
    %v2716 = vlog2.pop %v2685
    %v2717 = vmul.f32 %v2716, 0.6931472
    %v2718 = vlog2.pop %v2691
    %v2719 = vmul.f32 %v2718, 0.6931472
    %v2720 = vlog2.pop %v2697
    %v2721 = vmul.f32 %v2720, 0.6931472
    %v2722 = vlog2.pop %v2703
    %v2723 = vmul.f32 %v2722, 0.6931472
    %v2724 = vlog2.pop %v2709
    %v2725 = vmul.f32 %v2724, 0.6931472
    %v2726 = vsub.f32 %v2638, %v2711
    %v2727 = vsub.f32 %v2639, %v2713
    %v2728 = vsub.f32 %v2640, %v2715
    %v2729 = vsub.f32 %v2641, %v2717
    %v2730 = vsub.f32 %v2642, %v2719
    %v2731 = vsub.f32 %v2643, %v2721
    %v2732 = vsub.f32 %v2644, %v2723
    %v2733 = vsub.f32 %v2645, %v2725
    %v2734 = vmul.f32 %v2589, 1.442695
    %v2735 = vpow.pop %v2734
    %v2736 = vmul.f32 %v2726, 1.442695
    %v2737 = vpow.pop %v2736
    %v2738 = vmul.f32 %v2727, 1.442695
    %v2739 = vpow.pop %v2738
    %v2740 = vmul.f32 %v2728, 1.442695
    %v2741 = vpow.pop %v2740
    %v2742 = vmul.f32 %v2729, 1.442695
    %v2743 = vpow.pop %v2742
    %v2744 = vmul.f32 %v2730, 1.442695
    %v2745 = vpow.pop %v2744
    %v2746 = vmul.f32 %v2731, 1.442695
    %v2747 = vpow.pop %v2746
    %v2748 = vmul.f32 %v2732, 1.442695
    %v2749 = vpow.pop %v2748
    %v2750 = vmul.f32 %v2733, 1.442695
    %v2751 = vpow.pop %v2750
    %v2760 = vsel %vm440, %v1855, %v1854
    %v2761 = vsel %vm443, %v1856, %v2760
    %v2762 = vsel %vm446, %v1857, %v2761
    %v2763 = vsel %vm449, %v1858, %v2762
    %v2764 = vsel %vm452, %v1859, %v2763
    %v2765 = vsel %vm455, %v1860, %v2764
    %v2766 = vsel %vm458, %v1861, %v2765
    %v2768 = vmul.f32 %v2737, %v2766
    %v2769 = vmul.f32 %v2739, %v2766
    %v2770 = vmul.f32 %v2741, %v2766
    %v2771 = vmul.f32 %v2743, %v2766
    %v2772 = vmul.f32 %v2745, %v2766
    %v2773 = vmul.f32 %v2747, %v2766
    %v2774 = vmul.f32 %v2749, %v2766
    %v2775 = vmul.f32 %v2751, %v2766
    %v2776 = vrot.slane %v2768, 4
    %v2777 = vadd.f32 %v2768, %v2776
    %v2778 = vrot.slane %v2777, 2
    %v2779 = vadd.f32 %v2777, %v2778
    %v2780 = vrot.slane %v2779, 1
    %v2781 = vadd.f32 %v2779, %v2780
    %v2782 = vrot.slane %v2769, 4
    %v2783 = vadd.f32 %v2769, %v2782
    %v2784 = vrot.slane %v2783, 2
    %v2785 = vadd.f32 %v2783, %v2784
    %v2786 = vrot.slane %v2785, 1
    %v2787 = vadd.f32 %v2785, %v2786
    %v2788 = vrot.slane %v2770, 4
    %v2789 = vadd.f32 %v2770, %v2788
    %v2790 = vrot.slane %v2789, 2
    %v2791 = vadd.f32 %v2789, %v2790
    %v2792 = vrot.slane %v2791, 1
    %v2793 = vadd.f32 %v2791, %v2792
    %v2794 = vrot.slane %v2771, 4
    %v2795 = vadd.f32 %v2771, %v2794
    %v2796 = vrot.slane %v2795, 2
    %v2797 = vadd.f32 %v2795, %v2796
    %v2798 = vrot.slane %v2797, 1
    %v2799 = vadd.f32 %v2797, %v2798
    %v2800 = vrot.slane %v2772, 4
    %v2801 = vadd.f32 %v2772, %v2800
    %v2802 = vrot.slane %v2801, 2
    %v2803 = vadd.f32 %v2801, %v2802
    %v2804 = vrot.slane %v2803, 1
    %v2805 = vadd.f32 %v2803, %v2804
    %v2806 = vrot.slane %v2773, 4
    %v2807 = vadd.f32 %v2773, %v2806
    %v2808 = vrot.slane %v2807, 2
    %v2809 = vadd.f32 %v2807, %v2808
    %v2810 = vrot.slane %v2809, 1
    %v2811 = vadd.f32 %v2809, %v2810
    %v2812 = vrot.slane %v2774, 4
    %v2813 = vadd.f32 %v2774, %v2812
    %v2814 = vrot.slane %v2813, 2
    %v2815 = vadd.f32 %v2813, %v2814
    %v2816 = vrot.slane %v2815, 1
    %v2817 = vadd.f32 %v2815, %v2816
    %v2818 = vrot.slane %v2775, 4
    %v2819 = vadd.f32 %v2775, %v2818
    %v2820 = vrot.slane %v2819, 2
    %v2821 = vadd.f32 %v2819, %v2820
    %v2822 = vrot.slane %v2821, 1
    %v2823 = vadd.f32 %v2821, %v2822
    %v2832 = vsel %vm440, %v2787, %v2781
    %v2833 = vsel %vm443, %v2793, %v2832
    %v2834 = vsel %vm446, %v2799, %v2833
    %v2835 = vsel %vm449, %v2805, %v2834
    %v2836 = vsel %vm452, %v2811, %v2835
    %v2837 = vsel %vm455, %v2817, %v2836
    %v2838 = vsel %vm458, %v2823, %v2837
    %v2840 = vmul.f32 %v2517, %v2838
    %v2841 = vadd.f32 %v2840, %v2487
    %v2842 = vsub.f32 0.0, %v2841
    %v2843 = vmax.f32 %v2842, 0.0
    %vm2844 = vcmp.ne.f32.partialorder %v2842, %v2842
    %v2845 = vadd.f32 %v2842, 0.0
    %v2846 = vand.u32 2147483647, %v2842
    %v2847 = vsub.f32 0.0, %v2846
    %v2848 = vmul.f32 %v2847, 1.442695
    %v2849 = vpow.pop %v2848
    %v2850 = vadd.f32 %v2849, 1.0
    %v2851 = vlog2.pop %v2850
    %v2852 = vmul.f32 %v2851, 0.6931472
    %v2853 = vmul.f32 -0.5, %v2849
    %v2854 = vadd.f32 %v2853, 1.0
    %v2855 = vmul.f32 %v2854, %v2849
    %v2856 = vand.u32 2147483647, %v2849
    %vm2857 = vcmp.lt.f32.partialorder %v2856, 0.0004427343
    %v2858 = vsel %vm2857, %v2855, %v2852
    %v2859 = vadd.f32 %v2843, %v2858
    %v2860 = vsel %vm2844, %v2845, %v2859
    %v2861 = vsub.f32 0.0, %v2860
    %v2862 = vmul.f32 %v2861, 1.442695
    %v2863 = vpow.pop %v2862
    %v2864 = vmul.f32 %v2735, %v2863
    %v2865 = vrot.slane %v2864, 4
    %v2866 = vadd.f32 %v2864, %v2865
    %v2867 = vrot.slane %v2866, 2
    %v2868 = vadd.f32 %v2866, %v2867
    %v2869 = vrot.slane %v2868, 1
    %v2870 = vadd.f32 %v2868, %v2869
    %v2871 = vmul.f32 %v2870, 0.999999
    %v2872 = vadd.f32 %v2871, 5e-07
    %v2873 = vmul.f32 %v2872, 100.0
    %v2874 = vlog2.pop %v2873
    %v2875 = vmul.f32 %v2874, 0.6931472
    %v2876 = vsub.f32 %v2875, 4.6051702
    %v2877 = vsub.f32 1.0, %v2872
    %v2878 = vmul.f32 %v2877, 100.0
    %v2879 = vlog2.pop %v2878
    %v2880 = vmul.f32 %v2879, 0.6931472
    %v2881 = vsub.f32 %v2880, 4.6051702
    %v2882 = vsub.f32 %v2876, %v2881
    %v2883 = vmul.f32 %v2860, 2.0
    %v2884 = vadd.f32 %v2841, %v2883
    %v2885 = vsub.f32 0.0, %v2884
    %v2886 = vsub.f32 %v2885, 2e-06
    %v2887 = vmul.f32 %v2517, 100.0
    %v2888 = vlog2.pop %v2887
    %v2889 = vmul.f32 %v2888, 0.6931472
    %v2890 = vsub.f32 %v2889, 4.6051702
    %v2891 = vadd.f32 %v2886, %v2890
    %v2892 = vadd.f32 %v2589, %v2891
    %v2893 = vrot.slane %v2892, 4
    %v2894 = vmax.f32 %v2892, %v2893
    %v2895 = vrot.slane %v2894, 2
    %v2896 = vmax.f32 %v2894, %v2895
    %v2897 = vrot.slane %v2896, 1
    %v2898 = vmax.f32 %v2896, %v2897
    %v2899 = vsub.f32 %v2892, %v2898
    %v2900 = vmul.f32 %v2899, 1.442695
    %v2901 = vpow.pop %v2900
    %v2903 = vrot.slane %v2901, 1
    %v2904 = vrot.slane %v2901, 2
    %v2905 = vrot.slane %v2901, 3
    %v2906 = vrot.slane %v2901, 4
    %v2907 = vrot.slane %v2901, 5
    %v2908 = vrot.slane %v2901, 6
    %v2909 = vrot.slane %v2901, 7
    %v2910 = vperm.slane %v2901, 0
    %v2911 = vperm.slane %v2903, 0
    %v2912 = vperm.slane %v2904, 0
    %v2913 = vperm.slane %v2905, 0
    %v2914 = vperm.slane %v2906, 0
    %v2915 = vperm.slane %v2907, 0
    %v2916 = vperm.slane %v2908, 0
    %v2917 = vperm.slane %v2909, 0
    %v2926 = vmul.f32 %v2910, %v2737
    %v2927 = vmul.f32 %v2911, %v2739
    %v2928 = vmul.f32 %v2912, %v2741
    %v2929 = vmul.f32 %v2913, %v2743
    %v2930 = vmul.f32 %v2914, %v2745
    %v2931 = vmul.f32 %v2915, %v2747
    %v2932 = vmul.f32 %v2916, %v2749
    %v2933 = vmul.f32 %v2917, %v2751
    %v2934 = vadd.f32 %v2926, %v2927
    %v2935 = vadd.f32 %v2934, %v2928
    %v2936 = vadd.f32 %v2935, %v2929
    %v2937 = vadd.f32 %v2936, %v2930
    %v2938 = vadd.f32 %v2937, %v2931
    %v2939 = vadd.f32 %v2938, %v2932
    %v2940 = vadd.f32 %v2939, %v2933
    %v2941 = vlog2.pop %v2940
    %v2942 = vmul.f32 %v2941, 0.6931472
    %v2943 = vadd.f32 %v2942, %v2898
    %v2944 = vadd.f32 %v2943, -1.0000005e-06
    %v2945 = vadd.f32 %v2876, %v2881
    %v2946 = vsub.f32 %v2944, %v2945
    %v2955 = vsel %vm440, %v2479, %v2478
    %v2956 = vsel %vm443, %v2480, %v2955
    %v2957 = vsel %vm446, %v2481, %v2956
    %v2958 = vsel %vm449, %v2482, %v2957
    %v2959 = vsel %vm452, %v2483, %v2958
    %v2960 = vsel %vm455, %v2484, %v2959
    %v2961 = vsel %vm458, %v2485, %v2960
    %v2963 = vadd.f32 %v2946, %v2961
    %v2964 = vrot.slane %v2963, 4
    %v2965 = vmax.f32 %v2963, %v2964
    %v2966 = vrot.slane %v2965, 2
    %v2967 = vmax.f32 %v2965, %v2966
    %v2968 = vrot.slane %v2967, 1
    %v2969 = vmax.f32 %v2967, %v2968
    %v2970 = vsub.f32 %v2963, %v2969
    %v2971 = vmul.f32 %v2970, 1.442695
    %v2972 = vpow.pop %v2971
    %v2973 = vrot.slane %v2972, 4
    %v2974 = vadd.f32 %v2972, %v2973
    %v2975 = vrot.slane %v2974, 2
    %v2976 = vadd.f32 %v2974, %v2975
    %v2977 = vrot.slane %v2976, 1
    %v2978 = vadd.f32 %v2976, %v2977
    %v2979 = vlog2.pop %v2978
    %v2980 = vmul.f32 %v2979, 0.6931472
    %v2981 = vadd.f32 %v2980, %v2969
    %2982 = vst [vmem:[#allocation2] sm:$0x1] %v2882
    %2983 = vst [vmem:[#allocation4] sm:$0x1] %v2981
    // Predicated region
    $region42: #{tpu_custom_call.1} parent=1 // pred_check
      _
    $region43: #{tpu_custom_call.1} parent=1 // pred_check_branch
      %2985 = sbr.rel (0) target = $region45
    $region44: #{tpu_custom_call.1} parent=1 // pred_region
      %2987 = vsyncadd [#allocation3], 0
      %s2989 = sshll.u32 [#allocation2], 4
      %s2990 = int_to_ptr.vmem [resolvable:$true] %s2989
      %s2991 = sshll.u32 %s10, 4
      %s2992 = int_to_ptr.hbm [resolvable:$true] %s2991
      %2994 = dma.vmem_to_hbm [thread:$0]  %s2990, 16, %s2992, [#allocation3]
    $region45: #{tpu_custom_call.1} parent=1 // pred_fallthru
      _
    // Predicated region
    $region46: #{tpu_custom_call.1} parent=1 // pred_check
      _
    $region47: #{tpu_custom_call.1} parent=1 // pred_check_branch
      %2996 = sbr.rel (0) target = $region49
    $region48: #{tpu_custom_call.1} parent=1 // pred_region
      %2998 = vsyncadd [#allocation5], 0
      %s3000 = sshll.u32 [#allocation4], 4
      %s3001 = int_to_ptr.vmem [resolvable:$true] %s3000
      %s3002 = sshll.u32 %s11, 4
      %s3003 = int_to_ptr.hbm [resolvable:$true] %s3002
      %3005 = dma.vmem_to_hbm [thread:$0]  %s3001, 16, %s3003, [#allocation5]
    $region49: #{tpu_custom_call.1} parent=1 // pred_fallthru
      _
    // Predicated region
    $region50: #{tpu_custom_call.1} parent=1 // pred_check
      _
    $region51: #{tpu_custom_call.1} parent=1 // pred_check_branch
      %3007 = sbr.rel (0) target = $region53
    $region52: #{tpu_custom_call.1} parent=1 // pred_region
      %3009 = dma.done [#allocation3], 16
    $region53: #{tpu_custom_call.1} parent=1 // pred_fallthru
      _
    // Predicated region
    $region54: #{tpu_custom_call.1} parent=1 // pred_check
      _
    $region55: #{tpu_custom_call.1} parent=1 // pred_check_branch
      %3011 = sbr.rel (0) target = $region57
    $region56: #{tpu_custom_call.1} parent=1 // pred_region
      %3013 = dma.done [#allocation5], 16
    $region57: #{tpu_custom_call.1} parent=1 // pred_fallthru
      _
    %3014 = vsyncpa [#allocation3], 1
    %3015 = vsyncpa [#allocation5], 1

</llo_original>
